<compile_context>
chip_gen: v5e
topology: v5e:2x2
jax: 0.10.0
libtpu: 0.0.40
codegen_flags: <defaults>
</compile_context>

<pallas_src>
import functools

import jax
import jax.numpy as jnp
from jax import lax
from jax.experimental import pallas as pl
from jax.experimental.pallas import tpu as pltpu


# ----------------------------------------------------------------------------
# Pallas kernel: fused BasicBlock forward for one image (flattened layout).
# ----------------------------------------------------------------------------
def basic_block_kernel(xf_ref, mask_ref, w1_ref, s1_ref, b1_ref,
                       w2_ref, s2_ref, b2_ref, out_ref, mid_ref, *, H, W, C):
    """Fused BasicBlock (stride=1, downsample=None), one image per grid step.

    xf_ref  : (Lpad, C) bf16   zero-padded input, flattened row-major over
                               (H+2, W+2) and padded to Lpad rows
    mask_ref: (L, 1)   f32     1.0 where the padded-width column < W, else 0.0
    w*_ref  : (9, C, C) bf16   conv taps, tap-major, (Cin, Cout) per tap
    s*/b*   : (1, C)   f32     folded BatchNorm scale / bias (eval mode)
    out_ref : (L, C)   f32     output on the padded-width raster (L = H*(W+2))
    mid_ref : (Lpad, C) bf16   VMEM scratch: zero-padded relu(bn1(conv1(x)))
    """
    Wp = W + 2
    L = H * Wp               # rows of the (padded-width) output raster
    base = Wp + 1            # flat offset of the padded-interior origin (1, 1)

    # ---- conv1: 9 taps = 9 leading-axis-shifted MXU matmuls, f32 accum ------
    acc = jnp.zeros((L, C), jnp.float32)
    for t in range(9):                                     # static unroll
        dh, dw = divmod(t, 3)
        off = dh * Wp + dw
        acc = acc + jnp.dot(xf_ref[pl.ds(off, L), :], w1_ref[t],
                            preferred_element_type=jnp.float32)
    # TODO(synk): fuse the 3 (or 9) taps along the contraction dim (K=3C/9C
    #             im2col) to fill the MXU rows when C < 128.

    # ---- bn1 (folded) + relu, zero the garbage columns (w >= W) -------------
    y1 = jnp.maximum(acc * s1_ref[...] + b1_ref[...], 0.0) * mask_ref[...]

    # ---- stage the padded intermediate in VMEM: one contiguous interior store
    #      plus two tiny border zero-stores (no full-scratch re-zero) ---------
    mid_ref[pl.ds(0, base), :] = jnp.zeros((base, C), jnp.bfloat16)
    mid_ref[pl.ds(base, L), :] = y1.astype(jnp.bfloat16)
    tail = mid_ref.shape[0] - (base + L)
    mid_ref[pl.ds(base + L, tail), :] = jnp.zeros((tail, C), jnp.bfloat16)

    # ---- conv2: same 9 shifted matmuls on the staged intermediate -----------
    acc2 = jnp.zeros((L, C), jnp.float32)
    for t in range(9):                                     # static unroll
        dh, dw = divmod(t, 3)
        off = dh * Wp + dw
        acc2 = acc2 + jnp.dot(mid_ref[pl.ds(off, L), :], w2_ref[t],
                              preferred_element_type=jnp.float32)

    # ---- bn2 + residual add + relu ------------------------------------------
    identity = xf_ref[pl.ds(base, L), :].astype(jnp.float32)
    out = jnp.maximum(acc2 * s2_ref[...] + b2_ref[...] + identity, 0.0)
    out_ref[...] = out.astype(out_ref.dtype)
    # TODO(synk): lane-dense (128-wide) packing of the C=64 output raster.


# ----------------------------------------------------------------------------
# Wrapper (plain-JAX glue: layout conversion, BN folding, weight re-tiling).
# ----------------------------------------------------------------------------
def _fold_bn(gamma, beta, mean, var, eps=1e-5):
    scale = gamma * lax.rsqrt(var + eps)
    bias = beta - mean * scale
    return (scale.reshape(1, -1).astype(jnp.float32),
            bias.reshape(1, -1).astype(jnp.float32))


def _conv_weight_to_taps(w):
    # PyTorch (Cout, Cin, 3, 3) -> (9, Cin, Cout), tap-major, bf16 for the MXU.
    cout, cin, kh, kw = w.shape
    return jnp.transpose(w, (2, 3, 1, 0)).reshape(kh * kw, cin, cout).astype(
        jnp.bfloat16)


def basic_block_forward(x_nchw, w1, bn1, w2, bn2):
    """BasicBlock.forward with stride=1, downsample=None, BatchNorm eval mode."""
    B, C, H, W = x_nchw.shape
    assert w1.shape == (C, C, 3, 3) and w2.shape == (C, C, 3, 3)
    # TODO(synk): stride>1 and the optional `downsample` projection branch are
    #             not implemented (stride=1 / identity shortcut only).
    # TODO(synk): training-mode BatchNorm (batch statistics) is not implemented;
    #             BN is folded with running statistics (eval-mode semantics).
    # TODO(synk): spatial (row-tile) grid axis with halo recompute so v7x's two
    #             TensorCores stay busy at batch=1.
    # TODO(synk): pipeline_mode=pl.Buffered(1) on the constant-index weight
    #             specs (and Cout tiling) for the large-C BasicBlock variants.

    Wp = W + 2
    Lp = (H + 2) * Wp              # rows of the zero-padded image, flattened
    L = H * Wp                     # rows of the padded-width output raster
    Lpad = ((Lp + 2 + 7) // 8) * 8 # +2 so the last-tap slice stays in bounds

    # NHWC, zero-pad spatially, flatten (H+2, W+2) -> one leading axis, bf16.
    x = jnp.transpose(x_nchw, (0, 2, 3, 1))                       # (B,H,W,C)
    xp = jnp.pad(x, ((0, 0), (1, 1), (1, 1), (0, 0)))             # (B,H+2,Wp,C)
    xflat = xp.reshape(B, Lp, C)
    xflat = jnp.pad(xflat, ((0, 0), (0, Lpad - Lp), (0, 0))).astype(jnp.bfloat16)

    # Column-validity mask over the row-major (H, Wp) raster (1.0 iff col < W).
    col = jnp.arange(L, dtype=jnp.int32) % Wp
    mask = (col < W).astype(jnp.float32).reshape(L, 1)

    w1_t = _conv_weight_to_taps(w1)
    w2_t = _conv_weight_to_taps(w2)
    s1, b1 = _fold_bn(*bn1)
    s2, b2 = _fold_bn(*bn2)

    kernel = functools.partial(basic_block_kernel, H=H, W=W, C=C)

    out_flat = pl.pallas_call(
        kernel,
        out_shape=jax.ShapeDtypeStruct((B, L, C), jnp.float32),
        grid=(B,),
        in_specs=[
            pl.BlockSpec((None, Lpad, C), lambda b: (b, 0, 0)),   # padded x (bf16)
            pl.BlockSpec((L, 1), lambda b: (0, 0)),               # column mask
            pl.BlockSpec((9, C, C), lambda b: (0, 0, 0)),         # conv1 taps
            pl.BlockSpec((1, C), lambda b: (0, 0)),               # bn1 scale
            pl.BlockSpec((1, C), lambda b: (0, 0)),               # bn1 bias
            pl.BlockSpec((9, C, C), lambda b: (0, 0, 0)),         # conv2 taps
            pl.BlockSpec((1, C), lambda b: (0, 0)),               # bn2 scale
            pl.BlockSpec((1, C), lambda b: (0, 0)),               # bn2 bias
        ],
        out_specs=pl.BlockSpec((None, L, C), lambda b: (b, 0, 0)),
        scratch_shapes=[pltpu.VMEM((Lpad, C), jnp.bfloat16)],
        compiler_params=pltpu.CompilerParams(
            dimension_semantics=("parallel",),
            vmem_limit_bytes=48 * 1024 * 1024),
    )(xflat, mask, w1_t, s1, b1, w2_t, s2, b2)

    # Strip the two padding columns of the raster and return NCHW f32.
    out = out_flat.reshape(B, H, Wp, C)[:, :, :W, :]
    return jnp.transpose(out, (0, 3, 1, 2))


# ----------------------------------------------------------------------------
# Pure-JAX reference (same eval-mode BN semantics) for a correctness check.
# ----------------------------------------------------------------------------
def basic_block_reference(x_nchw, w1, bn1, w2, bn2, eps=1e-5):
    def conv3x3(x, w):
        return lax.conv_general_dilated(
            x, w, window_strides=(1, 1), padding=((1, 1), (1, 1)),
            dimension_numbers=("NCHW", "OIHW", "NCHW"))

    def bn(x, params):
        gamma, beta, mean, var = params
        s = gamma * lax.rsqrt(var + eps)
        b = beta - mean * s
        return x * s[None, :, None, None] + b[None, :, None, None]

    out = jax.nn.relu(bn(conv3x3(x_nchw, w1), bn1))
    out = bn(conv3x3(out, w2), bn2)
    return jax.nn.relu(out + x_nchw)


if __name__ == "__main__":
    key = jax.random.PRNGKey(0)
    ks = jax.random.split(key, 11)

    # Small, shape-consistent configuration: batch=2, channels=64, 16x16 spatial.
    B, C, H, W = 2, 64, 16, 16

    x = jax.random.normal(ks[0], (B, C, H, W), jnp.float32)
    w1 = jax.random.normal(ks[1], (C, C, 3, 3), jnp.float32) * 0.05
    w2 = jax.random.normal(ks[2], (C, C, 3, 3), jnp.float32) * 0.05
    bn1 = (jax.random.uniform(ks[3], (C,), jnp.float32, 0.5, 1.5),   # gamma
           jax.random.normal(ks[4], (C,), jnp.float32) * 0.1,        # beta
           jax.random.normal(ks[5], (C,), jnp.float32) * 0.1,        # running mean
           jax.random.uniform(ks[6], (C,), jnp.float32, 0.5, 1.5))   # running var
    bn2 = (jax.random.uniform(ks[7], (C,), jnp.float32, 0.5, 1.5),
           jax.random.normal(ks[8], (C,), jnp.float32) * 0.1,
           jax.random.normal(ks[9], (C,), jnp.float32) * 0.1,
           jax.random.uniform(ks[10], (C,), jnp.float32, 0.5, 1.5))

    out = basic_block_forward(x, w1, bn1, w2, bn2)
    out = jax.block_until_ready(out)

    assert out.shape == (B, C, H, W)
    assert bool(jnp.all(jnp.isfinite(out)))

    ref = basic_block_reference(x, w1, bn1, w2, bn2)
    max_err = float(jnp.max(jnp.abs(out - ref)))
    # bf16 MXU operands (f32 accumulation): tolerance relaxed accordingly.
    assert bool(jnp.allclose(out, ref, rtol=2e-2, atol=5e-2)), max_err

    print("KERNEL_OK")
</pallas_src>

<mosaic_0001>
module attributes {stable_mosaic.version = 11 : i64} {
  func.func @basic_block_kernel(%arg0: i32, %arg1: memref<1x328x64xbf16, #tpu.memory_space<vmem>>, %arg2: memref<288x1xf32, #tpu.memory_space<vmem>>, %arg3: memref<9x64x64xbf16, #tpu.memory_space<vmem>>, %arg4: memref<1x64xf32, #tpu.memory_space<vmem>>, %arg5: memref<1x64xf32, #tpu.memory_space<vmem>>, %arg6: memref<9x64x64xbf16, #tpu.memory_space<vmem>>, %arg7: memref<1x64xf32, #tpu.memory_space<vmem>>, %arg8: memref<1x64xf32, #tpu.memory_space<vmem>>, %arg9: memref<1x288x64xf32, #tpu.memory_space<vmem>>, %arg10: memref<328x64xbf16, #tpu.memory_space<vmem>>) attributes {dimension_semantics = [#tpu.dimension_semantics<parallel>], iteration_bounds = array<i64: 2>, scalar_prefetch = 0 : i64, scratch_operands = 1 : i64, tpu.core_type = #tpu.core_type<tc>, window_params = [{transform_indices = @transform_0, window_bounds = array<i64: 1, 328, 64>}, {pipeline_mode = #tpu.pipeline_mode<synchronous>, transform_indices = @transform_1, window_bounds = array<i64: 288, 1>}, {pipeline_mode = #tpu.pipeline_mode<synchronous>, transform_indices = @transform_2, window_bounds = array<i64: 9, 64, 64>}, {pipeline_mode = #tpu.pipeline_mode<synchronous>, transform_indices = @transform_3, window_bounds = array<i64: 1, 64>}, {pipeline_mode = #tpu.pipeline_mode<synchronous>, transform_indices = @transform_4, window_bounds = array<i64: 1, 64>}, {pipeline_mode = #tpu.pipeline_mode<synchronous>, transform_indices = @transform_5, window_bounds = array<i64: 9, 64, 64>}, {pipeline_mode = #tpu.pipeline_mode<synchronous>, transform_indices = @transform_6, window_bounds = array<i64: 1, 64>}, {pipeline_mode = #tpu.pipeline_mode<synchronous>, transform_indices = @transform_7, window_bounds = array<i64: 1, 64>}, {transform_indices = @transform_8, window_bounds = array<i64: 1, 288, 64>}]} {
    %cst = arith.constant 0.000000e+00 : f32
    %0 = vector.broadcast %cst : f32 to vector<288x64xf32>
    %c0 = arith.constant 0 : index
    %c0_0 = arith.constant 0 : index
    %c0_1 = arith.constant 0 : index
    %1 = vector.load %arg1[%c0, %c0_0, %c0_1] : memref<1x328x64xbf16, #tpu.memory_space<vmem>>, vector<1x288x64xbf16>
    %2 = vector.shape_cast %1 : vector<1x288x64xbf16> to vector<288x64xbf16>
    %c0_2 = arith.constant 0 : index
    %c0_3 = arith.constant 0 : index
    %c0_4 = arith.constant 0 : index
    %3 = vector.load %arg3[%c0_2, %c0_3, %c0_4] : memref<9x64x64xbf16, #tpu.memory_space<vmem>>, vector<1x64x64xbf16>
    %4 = vector.shape_cast %3 : vector<1x64x64xbf16> to vector<64x64xbf16>
    %cst_5 = arith.constant dense<0.000000e+00> : vector<288x64xf32>
    %5 = tpu.matmul %2, %4, %cst_5 {dimension_numbers = #tpu.dot_dimension_numbers<[1], [0], [0], [1], [0, 0, 1, 1], [], []>} : vector<288x64xbf16>, vector<64x64xbf16>, vector<288x64xf32> -> vector<288x64xf32>
    %6 = arith.addf %0, %5 : vector<288x64xf32>
    %c0_6 = arith.constant 0 : index
    %c1 = arith.constant 1 : index
    %c0_7 = arith.constant 0 : index
    %7 = vector.load %arg1[%c0_6, %c1, %c0_7] : memref<1x328x64xbf16, #tpu.memory_space<vmem>>, vector<1x288x64xbf16>
    %8 = vector.shape_cast %7 : vector<1x288x64xbf16> to vector<288x64xbf16>
    %c1_8 = arith.constant 1 : index
    %c0_9 = arith.constant 0 : index
    %c0_10 = arith.constant 0 : index
    %9 = vector.load %arg3[%c1_8, %c0_9, %c0_10] : memref<9x64x64xbf16, #tpu.memory_space<vmem>>, vector<1x64x64xbf16>
    %10 = vector.shape_cast %9 : vector<1x64x64xbf16> to vector<64x64xbf16>
    %cst_11 = arith.constant dense<0.000000e+00> : vector<288x64xf32>
    %11 = tpu.matmul %8, %10, %cst_11 {dimension_numbers = #tpu.dot_dimension_numbers<[1], [0], [0], [1], [0, 0, 1, 1], [], []>} : vector<288x64xbf16>, vector<64x64xbf16>, vector<288x64xf32> -> vector<288x64xf32>
    %12 = arith.addf %6, %11 : vector<288x64xf32>
    %c0_12 = arith.constant 0 : index
    %c2 = arith.constant 2 : index
    %c0_13 = arith.constant 0 : index
    %13 = vector.load %arg1[%c0_12, %c2, %c0_13] : memref<1x328x64xbf16, #tpu.memory_space<vmem>>, vector<1x288x64xbf16>
    %14 = vector.shape_cast %13 : vector<1x288x64xbf16> to vector<288x64xbf16>
    %c2_14 = arith.constant 2 : index
    %c0_15 = arith.constant 0 : index
    %c0_16 = arith.constant 0 : index
    %15 = vector.load %arg3[%c2_14, %c0_15, %c0_16] : memref<9x64x64xbf16, #tpu.memory_space<vmem>>, vector<1x64x64xbf16>
    %16 = vector.shape_cast %15 : vector<1x64x64xbf16> to vector<64x64xbf16>
    %cst_17 = arith.constant dense<0.000000e+00> : vector<288x64xf32>
    %17 = tpu.matmul %14, %16, %cst_17 {dimension_numbers = #tpu.dot_dimension_numbers<[1], [0], [0], [1], [0, 0, 1, 1], [], []>} : vector<288x64xbf16>, vector<64x64xbf16>, vector<288x64xf32> -> vector<288x64xf32>
    %18 = arith.addf %12, %17 : vector<288x64xf32>
    %c0_18 = arith.constant 0 : index
    %c18 = arith.constant 18 : index
    %c0_19 = arith.constant 0 : index
    %19 = vector.load %arg1[%c0_18, %c18, %c0_19] : memref<1x328x64xbf16, #tpu.memory_space<vmem>>, vector<1x288x64xbf16>
    %20 = vector.shape_cast %19 : vector<1x288x64xbf16> to vector<288x64xbf16>
    %c3 = arith.constant 3 : index
    %c0_20 = arith.constant 0 : index
    %c0_21 = arith.constant 0 : index
    %21 = vector.load %arg3[%c3, %c0_20, %c0_21] : memref<9x64x64xbf16, #tpu.memory_space<vmem>>, vector<1x64x64xbf16>
    %22 = vector.shape_cast %21 : vector<1x64x64xbf16> to vector<64x64xbf16>
    %cst_22 = arith.constant dense<0.000000e+00> : vector<288x64xf32>
    %23 = tpu.matmul %20, %22, %cst_22 {dimension_numbers = #tpu.dot_dimension_numbers<[1], [0], [0], [1], [0, 0, 1, 1], [], []>} : vector<288x64xbf16>, vector<64x64xbf16>, vector<288x64xf32> -> vector<288x64xf32>
    %24 = arith.addf %18, %23 : vector<288x64xf32>
    %c0_23 = arith.constant 0 : index
    %c19 = arith.constant 19 : index
    %c0_24 = arith.constant 0 : index
    %25 = vector.load %arg1[%c0_23, %c19, %c0_24] : memref<1x328x64xbf16, #tpu.memory_space<vmem>>, vector<1x288x64xbf16>
    %26 = vector.shape_cast %25 : vector<1x288x64xbf16> to vector<288x64xbf16>
    %c4 = arith.constant 4 : index
    %c0_25 = arith.constant 0 : index
    %c0_26 = arith.constant 0 : index
    %27 = vector.load %arg3[%c4, %c0_25, %c0_26] : memref<9x64x64xbf16, #tpu.memory_space<vmem>>, vector<1x64x64xbf16>
    %28 = vector.shape_cast %27 : vector<1x64x64xbf16> to vector<64x64xbf16>
    %cst_27 = arith.constant dense<0.000000e+00> : vector<288x64xf32>
    %29 = tpu.matmul %26, %28, %cst_27 {dimension_numbers = #tpu.dot_dimension_numbers<[1], [0], [0], [1], [0, 0, 1, 1], [], []>} : vector<288x64xbf16>, vector<64x64xbf16>, vector<288x64xf32> -> vector<288x64xf32>
    %30 = arith.addf %24, %29 : vector<288x64xf32>
    %c0_28 = arith.constant 0 : index
    %c20 = arith.constant 20 : index
    %c0_29 = arith.constant 0 : index
    %31 = vector.load %arg1[%c0_28, %c20, %c0_29] : memref<1x328x64xbf16, #tpu.memory_space<vmem>>, vector<1x288x64xbf16>
    %32 = vector.shape_cast %31 : vector<1x288x64xbf16> to vector<288x64xbf16>
    %c5 = arith.constant 5 : index
    %c0_30 = arith.constant 0 : index
    %c0_31 = arith.constant 0 : index
    %33 = vector.load %arg3[%c5, %c0_30, %c0_31] : memref<9x64x64xbf16, #tpu.memory_space<vmem>>, vector<1x64x64xbf16>
    %34 = vector.shape_cast %33 : vector<1x64x64xbf16> to vector<64x64xbf16>
    %cst_32 = arith.constant dense<0.000000e+00> : vector<288x64xf32>
    %35 = tpu.matmul %32, %34, %cst_32 {dimension_numbers = #tpu.dot_dimension_numbers<[1], [0], [0], [1], [0, 0, 1, 1], [], []>} : vector<288x64xbf16>, vector<64x64xbf16>, vector<288x64xf32> -> vector<288x64xf32>
    %36 = arith.addf %30, %35 : vector<288x64xf32>
    %c0_33 = arith.constant 0 : index
    %c36 = arith.constant 36 : index
    %c0_34 = arith.constant 0 : index
    %37 = vector.load %arg1[%c0_33, %c36, %c0_34] : memref<1x328x64xbf16, #tpu.memory_space<vmem>>, vector<1x288x64xbf16>
    %38 = vector.shape_cast %37 : vector<1x288x64xbf16> to vector<288x64xbf16>
    %c6 = arith.constant 6 : index
    %c0_35 = arith.constant 0 : index
    %c0_36 = arith.constant 0 : index
    %39 = vector.load %arg3[%c6, %c0_35, %c0_36] : memref<9x64x64xbf16, #tpu.memory_space<vmem>>, vector<1x64x64xbf16>
    %40 = vector.shape_cast %39 : vector<1x64x64xbf16> to vector<64x64xbf16>
    %cst_37 = arith.constant dense<0.000000e+00> : vector<288x64xf32>
    %41 = tpu.matmul %38, %40, %cst_37 {dimension_numbers = #tpu.dot_dimension_numbers<[1], [0], [0], [1], [0, 0, 1, 1], [], []>} : vector<288x64xbf16>, vector<64x64xbf16>, vector<288x64xf32> -> vector<288x64xf32>
    %42 = arith.addf %36, %41 : vector<288x64xf32>
    %c0_38 = arith.constant 0 : index
    %c37 = arith.constant 37 : index
    %c0_39 = arith.constant 0 : index
    %43 = vector.load %arg1[%c0_38, %c37, %c0_39] : memref<1x328x64xbf16, #tpu.memory_space<vmem>>, vector<1x288x64xbf16>
    %44 = vector.shape_cast %43 : vector<1x288x64xbf16> to vector<288x64xbf16>
    %c7 = arith.constant 7 : index
    %c0_40 = arith.constant 0 : index
    %c0_41 = arith.constant 0 : index
    %45 = vector.load %arg3[%c7, %c0_40, %c0_41] : memref<9x64x64xbf16, #tpu.memory_space<vmem>>, vector<1x64x64xbf16>
    %46 = vector.shape_cast %45 : vector<1x64x64xbf16> to vector<64x64xbf16>
    %cst_42 = arith.constant dense<0.000000e+00> : vector<288x64xf32>
    %47 = tpu.matmul %44, %46, %cst_42 {dimension_numbers = #tpu.dot_dimension_numbers<[1], [0], [0], [1], [0, 0, 1, 1], [], []>} : vector<288x64xbf16>, vector<64x64xbf16>, vector<288x64xf32> -> vector<288x64xf32>
    %48 = arith.addf %42, %47 : vector<288x64xf32>
    %c0_43 = arith.constant 0 : index
    %c38 = arith.constant 38 : index
    %c0_44 = arith.constant 0 : index
    %49 = vector.load %arg1[%c0_43, %c38, %c0_44] : memref<1x328x64xbf16, #tpu.memory_space<vmem>>, vector<1x288x64xbf16>
    %50 = vector.shape_cast %49 : vector<1x288x64xbf16> to vector<288x64xbf16>
    %c8 = arith.constant 8 : index
    %c0_45 = arith.constant 0 : index
    %c0_46 = arith.constant 0 : index
    %51 = vector.load %arg3[%c8, %c0_45, %c0_46] : memref<9x64x64xbf16, #tpu.memory_space<vmem>>, vector<1x64x64xbf16>
    %52 = vector.shape_cast %51 : vector<1x64x64xbf16> to vector<64x64xbf16>
    %cst_47 = arith.constant dense<0.000000e+00> : vector<288x64xf32>
    %53 = tpu.matmul %50, %52, %cst_47 {dimension_numbers = #tpu.dot_dimension_numbers<[1], [0], [0], [1], [0, 0, 1, 1], [], []>} : vector<288x64xbf16>, vector<64x64xbf16>, vector<288x64xf32> -> vector<288x64xf32>
    %54 = arith.addf %48, %53 : vector<288x64xf32>
    %c0_48 = arith.constant 0 : index
    %c0_49 = arith.constant 0 : index
    %55 = vector.load %arg4[%c0_48, %c0_49] : memref<1x64xf32, #tpu.memory_space<vmem>>, vector<1x64xf32>
    %56 = vector.broadcast %55 : vector<1x64xf32> to vector<288x64xf32>
    %57 = arith.mulf %54, %56 : vector<288x64xf32>
    %c0_50 = arith.constant 0 : index
    %c0_51 = arith.constant 0 : index
    %58 = vector.load %arg5[%c0_50, %c0_51] : memref<1x64xf32, #tpu.memory_space<vmem>>, vector<1x64xf32>
    %59 = vector.broadcast %58 : vector<1x64xf32> to vector<288x64xf32>
    %60 = arith.addf %57, %59 : vector<288x64xf32>
    %cst_52 = arith.constant 0.000000e+00 : f32
    %61 = vector.broadcast %cst_52 : f32 to vector<288x64xf32>
    %62 = arith.maximumf %60, %61 : vector<288x64xf32>
    %c0_53 = arith.constant 0 : index
    %c0_54 = arith.constant 0 : index
    %63 = vector.load %arg2[%c0_53, %c0_54] : memref<288x1xf32, #tpu.memory_space<vmem>>, vector<288x1xf32>
    %64 = vector.broadcast %63 : vector<288x1xf32> to vector<288x64xf32>
    %65 = arith.mulf %62, %64 : vector<288x64xf32>
    %cst_55 = arith.constant 0.000000e+00 : bf16
    %66 = vector.broadcast %cst_55 : bf16 to vector<19x64xbf16>
    %c0_56 = arith.constant 0 : index
    %c0_57 = arith.constant 0 : index
    %67 = vector.load %arg10[%c0_56, %c0_57] : memref<328x64xbf16, #tpu.memory_space<vmem>>, vector<19x64xbf16>
    tpu.vector_store %arg10[%c0_56, %c0_57], %66 {strides = array<i32>} : memref<328x64xbf16, #tpu.memory_space<vmem>>, vector<19x64xbf16>,
    %68 = arith.truncf %65 : vector<288x64xf32> to vector<288x64xbf16>
    %c19_58 = arith.constant 19 : index
    %c0_59 = arith.constant 0 : index
    %69 = vector.load %arg10[%c19_58, %c0_59] : memref<328x64xbf16, #tpu.memory_space<vmem>>, vector<288x64xbf16>
    tpu.vector_store %arg10[%c19_58, %c0_59], %68 {strides = array<i32>} : memref<328x64xbf16, #tpu.memory_space<vmem>>, vector<288x64xbf16>,
    %cst_60 = arith.constant 0.000000e+00 : bf16
    %70 = vector.broadcast %cst_60 : bf16 to vector<21x64xbf16>
    %c307 = arith.constant 307 : index
    %c0_61 = arith.constant 0 : index
    %71 = vector.load %arg10[%c307, %c0_61] : memref<328x64xbf16, #tpu.memory_space<vmem>>, vector<21x64xbf16>
    tpu.vector_store %arg10[%c307, %c0_61], %70 {strides = array<i32>} : memref<328x64xbf16, #tpu.memory_space<vmem>>, vector<21x64xbf16>,
    %cst_62 = arith.constant 0.000000e+00 : f32
    %72 = vector.broadcast %cst_62 : f32 to vector<288x64xf32>
    %c0_63 = arith.constant 0 : index
    %c0_64 = arith.constant 0 : index
    %73 = vector.load %arg10[%c0_63, %c0_64] : memref<328x64xbf16, #tpu.memory_space<vmem>>, vector<288x64xbf16>
    %c0_65 = arith.constant 0 : index
    %c0_66 = arith.constant 0 : index
    %c0_67 = arith.constant 0 : index
    %74 = vector.load %arg6[%c0_65, %c0_66, %c0_67] : memref<9x64x64xbf16, #tpu.memory_space<vmem>>, vector<1x64x64xbf16>
    %75 = vector.shape_cast %74 : vector<1x64x64xbf16> to vector<64x64xbf16>
    %cst_68 = arith.constant dense<0.000000e+00> : vector<288x64xf32>
    %76 = tpu.matmul %73, %75, %cst_68 {dimension_numbers = #tpu.dot_dimension_numbers<[1], [0], [0], [1], [0, 0, 1, 1], [], []>} : vector<288x64xbf16>, vector<64x64xbf16>, vector<288x64xf32> -> vector<288x64xf32>
    %77 = arith.addf %72, %76 : vector<288x64xf32>
    %c1_69 = arith.constant 1 : index
    %c0_70 = arith.constant 0 : index
    %78 = vector.load %arg10[%c1_69, %c0_70] : memref<328x64xbf16, #tpu.memory_space<vmem>>, vector<288x64xbf16>
    %c1_71 = arith.constant 1 : index
    %c0_72 = arith.constant 0 : index
    %c0_73 = arith.constant 0 : index
    %79 = vector.load %arg6[%c1_71, %c0_72, %c0_73] : memref<9x64x64xbf16, #tpu.memory_space<vmem>>, vector<1x64x64xbf16>
    %80 = vector.shape_cast %79 : vector<1x64x64xbf16> to vector<64x64xbf16>
    %cst_74 = arith.constant dense<0.000000e+00> : vector<288x64xf32>
    %81 = tpu.matmul %78, %80, %cst_74 {dimension_numbers = #tpu.dot_dimension_numbers<[1], [0], [0], [1], [0, 0, 1, 1], [], []>} : vector<288x64xbf16>, vector<64x64xbf16>, vector<288x64xf32> -> vector<288x64xf32>
    %82 = arith.addf %77, %81 : vector<288x64xf32>
    %c2_75 = arith.constant 2 : index
    %c0_76 = arith.constant 0 : index
    %83 = vector.load %arg10[%c2_75, %c0_76] : memref<328x64xbf16, #tpu.memory_space<vmem>>, vector<288x64xbf16>
    %c2_77 = arith.constant 2 : index
    %c0_78 = arith.constant 0 : index
    %c0_79 = arith.constant 0 : index
    %84 = vector.load %arg6[%c2_77, %c0_78, %c0_79] : memref<9x64x64xbf16, #tpu.memory_space<vmem>>, vector<1x64x64xbf16>
    %85 = vector.shape_cast %84 : vector<1x64x64xbf16> to vector<64x64xbf16>
    %cst_80 = arith.constant dense<0.000000e+00> : vector<288x64xf32>
    %86 = tpu.matmul %83, %85, %cst_80 {dimension_numbers = #tpu.dot_dimension_numbers<[1], [0], [0], [1], [0, 0, 1, 1], [], []>} : vector<288x64xbf16>, vector<64x64xbf16>, vector<288x64xf32> -> vector<288x64xf32>
    %87 = arith.addf %82, %86 : vector<288x64xf32>
    %c18_81 = arith.constant 18 : index
    %c0_82 = arith.constant 0 : index
    %88 = vector.load %arg10[%c18_81, %c0_82] : memref<328x64xbf16, #tpu.memory_space<vmem>>, vector<288x64xbf16>
    %c3_83 = arith.constant 3 : index
    %c0_84 = arith.constant 0 : index
    %c0_85 = arith.constant 0 : index
    %89 = vector.load %arg6[%c3_83, %c0_84, %c0_85] : memref<9x64x64xbf16, #tpu.memory_space<vmem>>, vector<1x64x64xbf16>
    %90 = vector.shape_cast %89 : vector<1x64x64xbf16> to vector<64x64xbf16>
    %cst_86 = arith.constant dense<0.000000e+00> : vector<288x64xf32>
    %91 = tpu.matmul %88, %90, %cst_86 {dimension_numbers = #tpu.dot_dimension_numbers<[1], [0], [0], [1], [0, 0, 1, 1], [], []>} : vector<288x64xbf16>, vector<64x64xbf16>, vector<288x64xf32> -> vector<288x64xf32>
    %92 = arith.addf %87, %91 : vector<288x64xf32>
    %c19_87 = arith.constant 19 : index
    %c0_88 = arith.constant 0 : index
    %93 = vector.load %arg10[%c19_87, %c0_88] : memref<328x64xbf16, #tpu.memory_space<vmem>>, vector<288x64xbf16>
    %c4_89 = arith.constant 4 : index
    %c0_90 = arith.constant 0 : index
    %c0_91 = arith.constant 0 : index
    %94 = vector.load %arg6[%c4_89, %c0_90, %c0_91] : memref<9x64x64xbf16, #tpu.memory_space<vmem>>, vector<1x64x64xbf16>
    %95 = vector.shape_cast %94 : vector<1x64x64xbf16> to vector<64x64xbf16>
    %cst_92 = arith.constant dense<0.000000e+00> : vector<288x64xf32>
    %96 = tpu.matmul %93, %95, %cst_92 {dimension_numbers = #tpu.dot_dimension_numbers<[1], [0], [0], [1], [0, 0, 1, 1], [], []>} : vector<288x64xbf16>, vector<64x64xbf16>, vector<288x64xf32> -> vector<288x64xf32>
    %97 = arith.addf %92, %96 : vector<288x64xf32>
    %c20_93 = arith.constant 20 : index
    %c0_94 = arith.constant 0 : index
    %98 = vector.load %arg10[%c20_93, %c0_94] : memref<328x64xbf16, #tpu.memory_space<vmem>>, vector<288x64xbf16>
    %c5_95 = arith.constant 5 : index
    %c0_96 = arith.constant 0 : index
    %c0_97 = arith.constant 0 : index
    %99 = vector.load %arg6[%c5_95, %c0_96, %c0_97] : memref<9x64x64xbf16, #tpu.memory_space<vmem>>, vector<1x64x64xbf16>
    %100 = vector.shape_cast %99 : vector<1x64x64xbf16> to vector<64x64xbf16>
    %cst_98 = arith.constant dense<0.000000e+00> : vector<288x64xf32>
    %101 = tpu.matmul %98, %100, %cst_98 {dimension_numbers = #tpu.dot_dimension_numbers<[1], [0], [0], [1], [0, 0, 1, 1], [], []>} : vector<288x64xbf16>, vector<64x64xbf16>, vector<288x64xf32> -> vector<288x64xf32>
    %102 = arith.addf %97, %101 : vector<288x64xf32>
    %c36_99 = arith.constant 36 : index
    %c0_100 = arith.constant 0 : index
    %103 = vector.load %arg10[%c36_99, %c0_100] : memref<328x64xbf16, #tpu.memory_space<vmem>>, vector<288x64xbf16>
    %c6_101 = arith.constant 6 : index
    %c0_102 = arith.constant 0 : index
    %c0_103 = arith.constant 0 : index
    %104 = vector.load %arg6[%c6_101, %c0_102, %c0_103] : memref<9x64x64xbf16, #tpu.memory_space<vmem>>, vector<1x64x64xbf16>
    %105 = vector.shape_cast %104 : vector<1x64x64xbf16> to vector<64x64xbf16>
    %cst_104 = arith.constant dense<0.000000e+00> : vector<288x64xf32>
    %106 = tpu.matmul %103, %105, %cst_104 {dimension_numbers = #tpu.dot_dimension_numbers<[1], [0], [0], [1], [0, 0, 1, 1], [], []>} : vector<288x64xbf16>, vector<64x64xbf16>, vector<288x64xf32> -> vector<288x64xf32>
    %107 = arith.addf %102, %106 : vector<288x64xf32>
    %c37_105 = arith.constant 37 : index
    %c0_106 = arith.constant 0 : index
    %108 = vector.load %arg10[%c37_105, %c0_106] : memref<328x64xbf16, #tpu.memory_space<vmem>>, vector<288x64xbf16>
    %c7_107 = arith.constant 7 : index
    %c0_108 = arith.constant 0 : index
    %c0_109 = arith.constant 0 : index
    %109 = vector.load %arg6[%c7_107, %c0_108, %c0_109] : memref<9x64x64xbf16, #tpu.memory_space<vmem>>, vector<1x64x64xbf16>
    %110 = vector.shape_cast %109 : vector<1x64x64xbf16> to vector<64x64xbf16>
    %cst_110 = arith.constant dense<0.000000e+00> : vector<288x64xf32>
    %111 = tpu.matmul %108, %110, %cst_110 {dimension_numbers = #tpu.dot_dimension_numbers<[1], [0], [0], [1], [0, 0, 1, 1], [], []>} : vector<288x64xbf16>, vector<64x64xbf16>, vector<288x64xf32> -> vector<288x64xf32>
    %112 = arith.addf %107, %111 : vector<288x64xf32>
    %c38_111 = arith.constant 38 : index
    %c0_112 = arith.constant 0 : index
    %113 = vector.load %arg10[%c38_111, %c0_112] : memref<328x64xbf16, #tpu.memory_space<vmem>>, vector<288x64xbf16>
    %c8_113 = arith.constant 8 : index
    %c0_114 = arith.constant 0 : index
    %c0_115 = arith.constant 0 : index
    %114 = vector.load %arg6[%c8_113, %c0_114, %c0_115] : memref<9x64x64xbf16, #tpu.memory_space<vmem>>, vector<1x64x64xbf16>
    %115 = vector.shape_cast %114 : vector<1x64x64xbf16> to vector<64x64xbf16>
    %cst_116 = arith.constant dense<0.000000e+00> : vector<288x64xf32>
    %116 = tpu.matmul %113, %115, %cst_116 {dimension_numbers = #tpu.dot_dimension_numbers<[1], [0], [0], [1], [0, 0, 1, 1], [], []>} : vector<288x64xbf16>, vector<64x64xbf16>, vector<288x64xf32> -> vector<288x64xf32>
    %117 = arith.addf %112, %116 : vector<288x64xf32>
    %c0_117 = arith.constant 0 : index
    %c19_118 = arith.constant 19 : index
    %c0_119 = arith.constant 0 : index
    %118 = vector.load %arg1[%c0_117, %c19_118, %c0_119] : memref<1x328x64xbf16, #tpu.memory_space<vmem>>, vector<1x288x64xbf16>
    %119 = vector.shape_cast %118 : vector<1x288x64xbf16> to vector<288x64xbf16>
    %120 = arith.extf %119 : vector<288x64xbf16> to vector<288x64xf32>
    %c0_120 = arith.constant 0 : index
    %c0_121 = arith.constant 0 : index
    %121 = vector.load %arg7[%c0_120, %c0_121] : memref<1x64xf32, #tpu.memory_space<vmem>>, vector<1x64xf32>
    %122 = vector.broadcast %121 : vector<1x64xf32> to vector<288x64xf32>
    %123 = arith.mulf %117, %122 : vector<288x64xf32>
    %c0_122 = arith.constant 0 : index
    %c0_123 = arith.constant 0 : index
    %124 = vector.load %arg8[%c0_122, %c0_123] : memref<1x64xf32, #tpu.memory_space<vmem>>, vector<1x64xf32>
    %125 = vector.broadcast %124 : vector<1x64xf32> to vector<288x64xf32>
    %126 = arith.addf %123, %125 : vector<288x64xf32>
    %127 = arith.addf %126, %120 : vector<288x64xf32>
    %cst_124 = arith.constant 0.000000e+00 : f32
    %128 = vector.broadcast %cst_124 : f32 to vector<288x64xf32>
    %129 = arith.maximumf %127, %128 : vector<288x64xf32>
    %c0_125 = arith.constant 0 : index
    %c0_126 = arith.constant 0 : index
    %c0_127 = arith.constant 0 : index
    %130 = vector.load %arg9[%c0_125, %c0_126, %c0_127] : memref<1x288x64xf32, #tpu.memory_space<vmem>>, vector<1x288x64xf32>
    %131 = vector.shape_cast %130 : vector<1x288x64xf32> to vector<288x64xf32>
    %132 = vector.shape_cast %129 : vector<288x64xf32> to vector<1x288x64xf32>
    tpu.vector_store %arg9[%c0_125, %c0_126, %c0_127], %132 {strides = array<i32>} : memref<1x288x64xf32, #tpu.memory_space<vmem>>, vector<1x288x64xf32>,
    return
  }
  func.func @transform_0(%arg0: i32) -> (i32, i32, i32) {
    %c0_i32 = arith.constant 0 : i32
    %c0_i32_0 = arith.constant 0 : i32
    %c0_i32_1 = arith.constant 0 : i32
    return %arg0, %c0_i32, %c0_i32_0 : i32, i32, i32
  }
  func.func @transform_1(%arg0: i32) -> (i32, i32) {
    %c0_i32 = arith.constant 0 : i32
    %c0_i32_0 = arith.constant 0 : i32
    %c0_i32_1 = arith.constant 0 : i32
    return %c0_i32, %c0_i32_0 : i32, i32
  }
  func.func @transform_2(%arg0: i32) -> (i32, i32, i32) {
    %c0_i32 = arith.constant 0 : i32
    %c0_i32_0 = arith.constant 0 : i32
    %c0_i32_1 = arith.constant 0 : i32
    %c0_i32_2 = arith.constant 0 : i32
    return %c0_i32, %c0_i32_0, %c0_i32_1 : i32, i32, i32
  }
  func.func @transform_3(%arg0: i32) -> (i32, i32) {
    %c0_i32 = arith.constant 0 : i32
    %c0_i32_0 = arith.constant 0 : i32
    %c0_i32_1 = arith.constant 0 : i32
    return %c0_i32, %c0_i32_0 : i32, i32
  }
  func.func @transform_4(%arg0: i32) -> (i32, i32) {
    %c0_i32 = arith.constant 0 : i32
    %c0_i32_0 = arith.constant 0 : i32
    %c0_i32_1 = arith.constant 0 : i32
    return %c0_i32, %c0_i32_0 : i32, i32
  }
  func.func @transform_5(%arg0: i32) -> (i32, i32, i32) {
    %c0_i32 = arith.constant 0 : i32
    %c0_i32_0 = arith.constant 0 : i32
    %c0_i32_1 = arith.constant 0 : i32
    %c0_i32_2 = arith.constant 0 : i32
    return %c0_i32, %c0_i32_0, %c0_i32_1 : i32, i32, i32
  }
  func.func @transform_6(%arg0: i32) -> (i32, i32) {
    %c0_i32 = arith.constant 0 : i32
    %c0_i32_0 = arith.constant 0 : i32
    %c0_i32_1 = arith.constant 0 : i32
    return %c0_i32, %c0_i32_0 : i32, i32
  }
  func.func @transform_7(%arg0: i32) -> (i32, i32) {
    %c0_i32 = arith.constant 0 : i32
    %c0_i32_0 = arith.constant 0 : i32
    %c0_i32_1 = arith.constant 0 : i32
    return %c0_i32, %c0_i32_0 : i32, i32
  }
  func.func @transform_8(%arg0: i32) -> (i32, i32, i32) {
    %c0_i32 = arith.constant 0 : i32
    %c0_i32_0 = arith.constant 0 : i32
    %c0_i32_1 = arith.constant 0 : i32
    return %arg0, %c0_i32, %c0_i32_0 : i32, i32, i32
  }
}

</mosaic_0001>

<llo_original>
// kernel: tpu_custom_call.1
$region0: #{tpu_custom_call.1}
  #allocation0 [shape = 'u32[]', space=smem, size = 0x4, offset = 0x4, fixed_abs, tag = 'smem constant byte address 0x4 - core index']
  #allocation1 [shape = 'u32[72,128]{1,0:T(1,128)}', space=vmem, size = 0x9000, scoped, tag = 'internal scratch']
  #allocation2 [shape = 'bf16[328,64]{1,0:T(8,128)(2,1)}', space=vmem, size = 0x14800, scoped, tag = 'scratch operand']
  %s0 = inlined_call_operand.vmem [shape: bf16[2,328,64], index: 0, kind: input, shape index: {}]
  %s1 = inlined_call_operand.vmem [shape: f32[288,1], index: 1, kind: input, shape index: {}]
  %s2 = inlined_call_operand.vmem [shape: bf16[9,64,64], index: 2, kind: input, shape index: {}]
  %s3 = inlined_call_operand.vmem [shape: f32[1,64], index: 3, kind: input, shape index: {}]
  %s4 = inlined_call_operand.vmem [shape: f32[1,64], index: 4, kind: input, shape index: {}]
  %s5 = inlined_call_operand.vmem [shape: bf16[9,64,64], index: 5, kind: input, shape index: {}]
  %s6 = inlined_call_operand.vmem [shape: f32[1,64], index: 6, kind: input, shape index: {}]
  %s7 = inlined_call_operand.vmem [shape: f32[1,64], index: 7, kind: input, shape index: {}]
  %s8 = inlined_call_operand.vmem [shape: f32[2,288,64], index: 8, kind: output, shape index: {}]
  %s9 = sld [smem:[#allocation0]]
  $region65: #{tpu_custom_call.1} parent=0
    _
  %s11 = ssub.s32 1, %s9
  %s12 = scalar_select 0, %s11, %s9
  loop: start=0, step=1, limit=4
  $region2: #{tpu_custom_call.1} parent=0 // loop_pre_header
    _
  $region3: #{tpu_custom_call.1} parent=0 // loop_header
    %s14 = sphi 0, %s18
    %p15 = scmp.ge.s32.totalorder %s14, 4
    %s24 = sphi 0, %s26
    %s27 = sphi 0, %s24
    %s28 = sphi 0, %s27
    %s44 = sphi 0, %s28
    %s48 = sphi 0, %s48
    %s50 = sphi 0, %s48
    %s51 = sphi 0, %s50
    %s65 = sphi 0, %s51
    %s69 = sphi 0, %s69
    %s71 = sphi 0, %s69
    %s72 = sphi 0, %s71
    %s86 = sphi 0, %s72
    %s90 = sphi 0, %s90
    %s92 = sphi 0, %s90
    %s93 = sphi 0, %s92
    %s107 = sphi 0, %s93
    %s111 = sphi 0, %s111
    %s113 = sphi 0, %s111
    %s114 = sphi 0, %s113
    %s128 = sphi 0, %s114
    %s132 = sphi 0, %s132
    %s134 = sphi 0, %s132
    %s135 = sphi 0, %s134
    %s149 = sphi 0, %s135
    %s153 = sphi 0, %s153
    %s155 = sphi 0, %s153
    %s156 = sphi 0, %s155
    %s170 = sphi 0, %s156
    %s174 = sphi 0, %s174
    %s176 = sphi 0, %s174
    %s177 = sphi 0, %s176
    %s191 = sphi 0, %s177
    %s197 = sphi 0, %s199
    %s200 = sphi 0, %s197
    %s201 = sphi 0, %s200
    %s217 = sphi 0, %s201
  $region4: #{tpu_custom_call.1} parent=0 // loop_header_branch
    %17 = sbr.rel (%p15) target = $region8
  $region5: #{tpu_custom_call.1} parent=0 // loop_body
    %s19 = ssub.s32 %s14, 1
    %s20 = ssub.s32 %s14, 2
    %s21 = sadd.s32 %s14, 1
    %s22 = ssub.s32 %s14, %s21
    %p23 = scmp.eq.s32.totalorder %s22, 0
    %s25 = sadd.s32 %s24, 1
    %s26 = scalar_select %p23, %s24, %s25
    %p29 = pneg %p23
    %p30 = scmp.eq.s32.totalorder %s14, 1
    %p31 = por %p29, %p30
    %p32 = scmp.ne.s32.totalorder %s24, %s27
    %p33 = scmp.eq.s32.totalorder %s14, 0
    %p34 = por %p32, %p33
    %p35 = scmp.ne.s32.totalorder %s24, %s27
    %p36 = scmp.eq.s32.totalorder %s19, 1
    %p37 = por %p35, %p36
    %p38 = scmp.ne.s32.totalorder %s27, %s28
    %p39 = scmp.eq.s32.totalorder %s19, 0
    %p40 = por %p38, %p39
    %p41 = scmp.ne.s32.totalorder %s27, %s28
    %p42 = scmp.eq.s32.totalorder %s20, 1
    %p43 = por %p41, %p42
    %p45 = scmp.ne.s32.totalorder %s28, %s44
    %p46 = scmp.eq.s32.totalorder %s20, 0
    %p47 = por %p45, %p46
    %s49 = sadd.s32 %s48, 1
    %p52 = scmp.eq.s32.totalorder %s14, 1
    %p53 = scmp.ne.s32.totalorder %s48, %s50
    %p54 = scmp.eq.s32.totalorder %s14, 0
    %p55 = por %p53, %p54
    %p56 = scmp.ne.s32.totalorder %s48, %s50
    %p57 = scmp.eq.s32.totalorder %s19, 1
    %p58 = por %p56, %p57
    %p59 = scmp.ne.s32.totalorder %s50, %s51
    %p60 = scmp.eq.s32.totalorder %s19, 0
    %p61 = por %p59, %p60
    %p62 = scmp.ne.s32.totalorder %s50, %s51
    %p63 = scmp.eq.s32.totalorder %s20, 1
    %p64 = por %p62, %p63
    %p66 = scmp.ne.s32.totalorder %s51, %s65
    %p67 = scmp.eq.s32.totalorder %s20, 0
    %p68 = por %p66, %p67
    %s70 = sadd.s32 %s69, 1
    %p73 = scmp.eq.s32.totalorder %s14, 1
    %p74 = scmp.ne.s32.totalorder %s69, %s71
    %p75 = scmp.eq.s32.totalorder %s14, 0
    %p76 = por %p74, %p75
    %p77 = scmp.ne.s32.totalorder %s69, %s71
    %p78 = scmp.eq.s32.totalorder %s19, 1
    %p79 = por %p77, %p78
    %p80 = scmp.ne.s32.totalorder %s71, %s72
    %p81 = scmp.eq.s32.totalorder %s19, 0
    %p82 = por %p80, %p81
    %p83 = scmp.ne.s32.totalorder %s71, %s72
    %p84 = scmp.eq.s32.totalorder %s20, 1
    %p85 = por %p83, %p84
    %p87 = scmp.ne.s32.totalorder %s72, %s86
    %p88 = scmp.eq.s32.totalorder %s20, 0
    %p89 = por %p87, %p88
    %s91 = sadd.s32 %s90, 1
    %p94 = scmp.eq.s32.totalorder %s14, 1
    %p95 = scmp.ne.s32.totalorder %s90, %s92
    %p96 = scmp.eq.s32.totalorder %s14, 0
    %p97 = por %p95, %p96
    %p98 = scmp.ne.s32.totalorder %s90, %s92
    %p99 = scmp.eq.s32.totalorder %s19, 1
    %p100 = por %p98, %p99
    %p101 = scmp.ne.s32.totalorder %s92, %s93
    %p102 = scmp.eq.s32.totalorder %s19, 0
    %p103 = por %p101, %p102
    %p104 = scmp.ne.s32.totalorder %s92, %s93
    %p105 = scmp.eq.s32.totalorder %s20, 1
    %p106 = por %p104, %p105
    %p108 = scmp.ne.s32.totalorder %s93, %s107
    %p109 = scmp.eq.s32.totalorder %s20, 0
    %p110 = por %p108, %p109
    %s112 = sadd.s32 %s111, 1
    %p115 = scmp.eq.s32.totalorder %s14, 1
    %p116 = scmp.ne.s32.totalorder %s111, %s113
    %p117 = scmp.eq.s32.totalorder %s14, 0
    %p118 = por %p116, %p117
    %p119 = scmp.ne.s32.totalorder %s111, %s113
    %p120 = scmp.eq.s32.totalorder %s19, 1
    %p121 = por %p119, %p120
    %p122 = scmp.ne.s32.totalorder %s113, %s114
    %p123 = scmp.eq.s32.totalorder %s19, 0
    %p124 = por %p122, %p123
    %p125 = scmp.ne.s32.totalorder %s113, %s114
    %p126 = scmp.eq.s32.totalorder %s20, 1
    %p127 = por %p125, %p126
    %p129 = scmp.ne.s32.totalorder %s114, %s128
    %p130 = scmp.eq.s32.totalorder %s20, 0
    %p131 = por %p129, %p130
    %s133 = sadd.s32 %s132, 1
    %p136 = scmp.eq.s32.totalorder %s14, 1
    %p137 = scmp.ne.s32.totalorder %s132, %s134
    %p138 = scmp.eq.s32.totalorder %s14, 0
    %p139 = por %p137, %p138
    %p140 = scmp.ne.s32.totalorder %s132, %s134
    %p141 = scmp.eq.s32.totalorder %s19, 1
    %p142 = por %p140, %p141
    %p143 = scmp.ne.s32.totalorder %s134, %s135
    %p144 = scmp.eq.s32.totalorder %s19, 0
    %p145 = por %p143, %p144
    %p146 = scmp.ne.s32.totalorder %s134, %s135
    %p147 = scmp.eq.s32.totalorder %s20, 1
    %p148 = por %p146, %p147
    %p150 = scmp.ne.s32.totalorder %s135, %s149
    %p151 = scmp.eq.s32.totalorder %s20, 0
    %p152 = por %p150, %p151
    %s154 = sadd.s32 %s153, 1
    %p157 = scmp.eq.s32.totalorder %s14, 1
    %p158 = scmp.ne.s32.totalorder %s153, %s155
    %p159 = scmp.eq.s32.totalorder %s14, 0
    %p160 = por %p158, %p159
    %p161 = scmp.ne.s32.totalorder %s153, %s155
    %p162 = scmp.eq.s32.totalorder %s19, 1
    %p163 = por %p161, %p162
    %p164 = scmp.ne.s32.totalorder %s155, %s156
    %p165 = scmp.eq.s32.totalorder %s19, 0
    %p166 = por %p164, %p165
    %p167 = scmp.ne.s32.totalorder %s155, %s156
    %p168 = scmp.eq.s32.totalorder %s20, 1
    %p169 = por %p167, %p168
    %p171 = scmp.ne.s32.totalorder %s156, %s170
    %p172 = scmp.eq.s32.totalorder %s20, 0
    %p173 = por %p171, %p172
    %s175 = sadd.s32 %s174, 1
    %p178 = scmp.eq.s32.totalorder %s14, 1
    %p179 = scmp.ne.s32.totalorder %s174, %s176
    %p180 = scmp.eq.s32.totalorder %s14, 0
    %p181 = por %p179, %p180
    %p182 = scmp.ne.s32.totalorder %s174, %s176
    %p183 = scmp.eq.s32.totalorder %s19, 1
    %p184 = por %p182, %p183
    %p185 = scmp.ne.s32.totalorder %s176, %s177
    %p186 = scmp.eq.s32.totalorder %s19, 0
    %p187 = por %p185, %p186
    %p188 = scmp.ne.s32.totalorder %s176, %s177
    %p189 = scmp.eq.s32.totalorder %s20, 1
    %p190 = por %p188, %p189
    %p192 = scmp.ne.s32.totalorder %s177, %s191
    %p193 = scmp.eq.s32.totalorder %s20, 0
    %p194 = por %p192, %p193
    %s195 = ssub.s32 %s14, %s21
    %p196 = scmp.eq.s32.totalorder %s195, 0
    %s198 = sadd.s32 %s197, 1
    %s199 = scalar_select %p196, %s197, %s198
    %p202 = pneg %p196
    %p203 = scmp.eq.s32.totalorder %s14, 1
    %p204 = por %p202, %p203
    %p205 = scmp.ne.s32.totalorder %s197, %s200
    %p206 = scmp.eq.s32.totalorder %s14, 0
    %p207 = por %p205, %p206
    %p208 = scmp.ne.s32.totalorder %s197, %s200
    %p209 = scmp.eq.s32.totalorder %s19, 1
    %p210 = por %p208, %p209
    %p211 = scmp.ne.s32.totalorder %s200, %s201
    %p212 = scmp.eq.s32.totalorder %s19, 0
    %p213 = por %p211, %p212
    %p214 = scmp.ne.s32.totalorder %s200, %s201
    %p215 = scmp.eq.s32.totalorder %s20, 1
    %p216 = por %p214, %p215
    %p218 = scmp.ne.s32.totalorder %s201, %s217
    %p219 = scmp.eq.s32.totalorder %s20, 0
    %p220 = por %p218, %p219
    %p221 = scmp.le.s32.totalorder 1, %s14
    %p222 = scmp.lt.s32.totalorder %s14, 3
    %p223 = pnand %p221, %p222
    %p224 = pneg %p223
    // Predicated region
    $region9: #{tpu_custom_call.1} parent=5 // pred_check
      _
    $region10: #{tpu_custom_call.1} parent=5 // pred_check_branch
      %226 = sbr.rel (%p223) target = $region12
    $region11: #{tpu_custom_call.1} parent=5 // pred_region
      %s227 = ssub.s32 %s14, 1
      // Predicated region
      $region13: #{tpu_custom_call.1} parent=11 // pred_check
        %p228 = pneg %p61
      $region14: #{tpu_custom_call.1} parent=11 // pred_check_branch
        %230 = sbr.rel (%p228) target = $region16
      $region15: #{tpu_custom_call.1} parent=11 // pred_region
        _
      $region16: #{tpu_custom_call.1} parent=11 // pred_fallthru
        _
      // Predicated region
      $region17: #{tpu_custom_call.1} parent=11 // pred_check
        %p231 = pneg %p82
      $region18: #{tpu_custom_call.1} parent=11 // pred_check_branch
        %233 = sbr.rel (%p231) target = $region20
      $region19: #{tpu_custom_call.1} parent=11 // pred_region
        _
      $region20: #{tpu_custom_call.1} parent=11 // pred_fallthru
        _
      // Predicated region
      $region21: #{tpu_custom_call.1} parent=11 // pred_check
        %p234 = pneg %p103
      $region22: #{tpu_custom_call.1} parent=11 // pred_check_branch
        %236 = sbr.rel (%p234) target = $region24
      $region23: #{tpu_custom_call.1} parent=11 // pred_region
        _
      $region24: #{tpu_custom_call.1} parent=11 // pred_fallthru
        _
      // Predicated region
      $region25: #{tpu_custom_call.1} parent=11 // pred_check
        %p237 = pneg %p124
      $region26: #{tpu_custom_call.1} parent=11 // pred_check_branch
        %239 = sbr.rel (%p237) target = $region28
      $region27: #{tpu_custom_call.1} parent=11 // pred_region
        _
      $region28: #{tpu_custom_call.1} parent=11 // pred_fallthru
        _
      // Predicated region
      $region29: #{tpu_custom_call.1} parent=11 // pred_check
        %p240 = pneg %p145
      $region30: #{tpu_custom_call.1} parent=11 // pred_check_branch
        %242 = sbr.rel (%p240) target = $region32
      $region31: #{tpu_custom_call.1} parent=11 // pred_region
        _
      $region32: #{tpu_custom_call.1} parent=11 // pred_fallthru
        _
      // Predicated region
      $region33: #{tpu_custom_call.1} parent=11 // pred_check
        %p243 = pneg %p166
      $region34: #{tpu_custom_call.1} parent=11 // pred_check_branch
        %245 = sbr.rel (%p243) target = $region36
      $region35: #{tpu_custom_call.1} parent=11 // pred_region
        _
      $region36: #{tpu_custom_call.1} parent=11 // pred_fallthru
        _
      // Predicated region
      $region37: #{tpu_custom_call.1} parent=11 // pred_check
        %p246 = pneg %p187
      $region38: #{tpu_custom_call.1} parent=11 // pred_check_branch
        %248 = sbr.rel (%p246) target = $region40
      $region39: #{tpu_custom_call.1} parent=11 // pred_region
        _
      $region40: #{tpu_custom_call.1} parent=11 // pred_fallthru
        _
    $region12: #{tpu_custom_call.1} parent=5 // pred_fallthru
      _
    %p249 = scmp.lt.s32.totalorder %s14, 2
    // Predicated region
    $region41: #{tpu_custom_call.1} parent=5 // pred_check
      %p250 = pneg %p249
    $region42: #{tpu_custom_call.1} parent=5 // pred_check_branch
      %252 = sbr.rel (%p250) target = $region44
    $region43: #{tpu_custom_call.1} parent=5 // pred_region
      // Predicated region
      $region45: #{tpu_custom_call.1} parent=43 // pred_check
        %p253 = pneg %p34
      $region46: #{tpu_custom_call.1} parent=43 // pred_check_branch
        %255 = sbr.rel (%p253) target = $region48
      $region47: #{tpu_custom_call.1} parent=43 // pred_region
        %p256 = scmp.lt.s32.totalorder %s14, 1
        %s257 = scalar_select %p256, %s14, 1
        %s258 = smul.addr %s257, 41
        %s259 = smul.addr %s258, 4
        %s260 = scalar_lea.vmem %s0, %s259
      $region48: #{tpu_custom_call.1} parent=43 // pred_fallthru
        _
    $region44: #{tpu_custom_call.1} parent=5 // pred_fallthru
      _
    %p261 = scmp.le.s32.totalorder 1, %s14
    %p262 = scmp.lt.s32.totalorder %s14, 3
    %p263 = pnand %p261, %p262
    %p264 = pneg %p263
    // Predicated region
    $region49: #{tpu_custom_call.1} parent=5 // pred_check
      _
    $region50: #{tpu_custom_call.1} parent=5 // pred_check_branch
      %266 = sbr.rel (%p263) target = $region52
    $region51: #{tpu_custom_call.1} parent=5 // pred_region
      %s267 = ssub.s32 %s14, 1
      %p268 = scmp.lt.s32.totalorder %s19, 1
      %s269 = scalar_select %p268, %s19, 1
      %s270 = smul.addr %s269, 41
      %s271 = smul.addr %s270, 4
      %s272 = scalar_lea.vmem %s0, %s271
      %p273 = pneg %p40
      %p274 = pneg %p37
      %p275 = pneg %p61
      %p276 = pneg %p58
      %p277 = pneg %p82
      %p278 = pneg %p79
      %p279 = pneg %p103
      %p280 = pneg %p100
      %p281 = pneg %p124
      %p282 = pneg %p121
      %p283 = pneg %p145
      %p284 = pneg %p142
      %p285 = pneg %p166
      %p286 = pneg %p163
      %p287 = pneg %p187
      %p288 = pneg %p184
      %p289 = pneg %p213
      %p290 = pneg %p210
      %p291 = scmp.lt.s32.totalorder %s19, 1
      %s292 = scalar_select %p291, %s19, 1
      %s293 = smul.addr %s292, 36
      %s294 = smul.addr %s293, 8
      %s295 = scalar_lea.vmem %s8, %s294
      %p296 = scmp.lt.s32.totalorder %s19, 1
      %s297 = scalar_select %p296, %s19, 1
      %s298 = smul.addr %s297, 41
      %s299 = smul.addr %s298, 4
      %s300 = scalar_lea.vmem %s0, %s299
      %p301 = scmp.lt.s32.totalorder %s19, 1
      %s302 = scalar_select %p301, %s19, 1
      %s303 = smul.addr %s302, 36
      %s304 = smul.addr %s303, 8
      %s305 = scalar_lea.vmem %s8, %s304
      %v307 = vld [vmem:[%s300] sm:$0xf]
      %v308 = vld [vmem:[%s300 + $0x4] sm:$0xf]
      %v309 = vld [vmem:[%s300 + $0x8] sm:$0xf]
      %v310 = vld [vmem:[%s300 + $0xc] sm:$0xf]
      %v311 = vld [vmem:[%s300 + $0x10] sm:$0xf]
      %v312 = vld [vmem:[%s300 + $0x14] sm:$0xf]
      %v313 = vld [vmem:[%s300 + $0x18] sm:$0xf]
      %v314 = vld [vmem:[%s300 + $0x1c] sm:$0xf]
      %v315 = vld [vmem:[%s300 + $0x20] sm:$0xf]
      %v316 = vld [vmem:[%s300 + $0x24] sm:$0xf]
      %v317 = vld [vmem:[%s300 + $0x28] sm:$0xf]
      %v318 = vld [vmem:[%s300 + $0x2c] sm:$0xf]
      %v319 = vld [vmem:[%s300 + $0x30] sm:$0xf]
      %v320 = vld [vmem:[%s300 + $0x34] sm:$0xf]
      %v321 = vld [vmem:[%s300 + $0x38] sm:$0xf]
      %v322 = vld [vmem:[%s300 + $0x3c] sm:$0xf]
      %v323 = vld [vmem:[%s300 + $0x40] sm:$0xf]
      %v324 = vld [vmem:[%s300 + $0x44] sm:$0xf]
      %v325 = vld [vmem:[%s300 + $0x48] sm:$0xf]
      %v326 = vld [vmem:[%s300 + $0x4c] sm:$0xf]
      %v327 = vld [vmem:[%s300 + $0x50] sm:$0xf]
      %v328 = vld [vmem:[%s300 + $0x54] sm:$0xf]
      %v329 = vld [vmem:[%s300 + $0x58] sm:$0xf]
      %v330 = vld [vmem:[%s300 + $0x5c] sm:$0xf]
      %v331 = vld [vmem:[%s300 + $0x60] sm:$0xf]
      %v332 = vld [vmem:[%s300 + $0x64] sm:$0xf]
      %v333 = vld [vmem:[%s300 + $0x68] sm:$0xf]
      %v334 = vld [vmem:[%s300 + $0x6c] sm:$0xf]
      %v335 = vld [vmem:[%s300 + $0x70] sm:$0xf]
      %v336 = vld [vmem:[%s300 + $0x74] sm:$0xf]
      %v337 = vld [vmem:[%s300 + $0x78] sm:$0xf]
      %v338 = vld [vmem:[%s300 + $0x7c] sm:$0xf]
      %v339 = vld [vmem:[%s300 + $0x80] sm:$0xf]
      %v340 = vld [vmem:[%s300 + $0x84] sm:$0xf]
      %v341 = vld [vmem:[%s300 + $0x88] sm:$0xf]
      %v342 = vld [vmem:[%s300 + $0x8c] sm:$0xf]
      %v343 = vld [vmem:[%s2] sm:$0xf]
      %v344 = vld [vmem:[%s2 + $0x4] sm:$0xf]
      %v345 = vld [vmem:[%s2 + $0x8] sm:$0xf]
      %v346 = vld [vmem:[%s2 + $0xc] sm:$0xf]
      %v347 = vld [vmem:[%s2 + $0x10] sm:$0xf]
      %v348 = vld [vmem:[%s2 + $0x14] sm:$0xf]
      %v349 = vld [vmem:[%s2 + $0x18] sm:$0xf]
      %v350 = vld [vmem:[%s2 + $0x1c] sm:$0xf]
      %v351 = vld [vmem:[%s300 + $0x90] sm:$0x1]
      %s352 = scalar_lea.vmem %s2, 32
      %v353 = vld [vmem:[%s352] sm:$0xf]
      %v354 = vld [vmem:[%s352 + $0x4] sm:$0xf]
      %v355 = vld [vmem:[%s352 + $0x8] sm:$0xf]
      %v356 = vld [vmem:[%s352 + $0xc] sm:$0xf]
      %v357 = vld [vmem:[%s352 + $0x10] sm:$0xf]
      %v358 = vld [vmem:[%s352 + $0x14] sm:$0xf]
      %v359 = vld [vmem:[%s352 + $0x18] sm:$0xf]
      %v360 = vld [vmem:[%s352 + $0x1c] sm:$0xf]
      %v398 = vunpack.c.l.b16 %v307
      %v399 = vunpack.c.l.b16 %v308
      %v400 = vunpack.c.l.b16 %v309
      %v401 = vunpack.c.l.b16 %v310
      %v402 = vunpack.c.l.b16 %v311
      %v403 = vunpack.c.l.b16 %v312
      %v404 = vunpack.c.l.b16 %v313
      %v405 = vunpack.c.l.b16 %v314
      %v406 = vunpack.c.l.b16 %v315
      %v407 = vunpack.c.l.b16 %v316
      %v408 = vunpack.c.l.b16 %v317
      %v409 = vunpack.c.l.b16 %v318
      %v410 = vunpack.c.l.b16 %v319
      %v411 = vunpack.c.l.b16 %v320
      %v412 = vunpack.c.l.b16 %v321
      %v413 = vunpack.c.l.b16 %v322
      %v414 = vunpack.c.l.b16 %v323
      %v415 = vunpack.c.l.b16 %v324
      %v416 = vunpack.c.l.b16 %v325
      %v417 = vunpack.c.l.b16 %v326
      %v418 = vunpack.c.l.b16 %v327
      %v419 = vunpack.c.l.b16 %v328
      %v420 = vunpack.c.l.b16 %v329
      %v421 = vunpack.c.l.b16 %v330
      %v422 = vunpack.c.l.b16 %v331
      %v423 = vunpack.c.l.b16 %v332
      %v424 = vunpack.c.l.b16 %v333
      %v425 = vunpack.c.l.b16 %v334
      %v426 = vunpack.c.l.b16 %v335
      %v427 = vunpack.c.l.b16 %v336
      %v428 = vunpack.c.l.b16 %v337
      %v429 = vunpack.c.l.b16 %v338
      %v430 = vunpack.c.l.b16 %v339
      %v431 = vunpack.c.l.b16 %v340
      %v432 = vunpack.c.l.b16 %v341
      %v433 = vunpack.c.l.b16 %v342
      %v434 = vunpack.c.l.b16 %v351
      %v435 = vpack.c.b16 %v399, %v398
      %v436 = vpack.c.b16 %v401, %v400
      %v437 = vpack.c.b16 %v403, %v402
      %v438 = vpack.c.b16 %v405, %v404
      %v439 = vpack.c.b16 %v407, %v406
      %v440 = vpack.c.b16 %v409, %v408
      %v441 = vpack.c.b16 %v411, %v410
      %v442 = vpack.c.b16 %v413, %v412
      %v443 = vpack.c.b16 %v415, %v414
      %v444 = vpack.c.b16 %v417, %v416
      %v445 = vpack.c.b16 %v419, %v418
      %v446 = vpack.c.b16 %v421, %v420
      %v447 = vpack.c.b16 %v423, %v422
      %v448 = vpack.c.b16 %v425, %v424
      %v449 = vpack.c.b16 %v427, %v426
      %v450 = vpack.c.b16 %v429, %v428
      %v451 = vpack.c.b16 %v431, %v430
      %v452 = vpack.c.b16 %v433, %v432
      %v453 = vpack.c.b16 %v434, %v434
      %vm454 = vsmask.f32 7424
      %v456 = vshrl.u32 %v435, 16
      %v458 = vshll.u32 %v435, 16
      %v460 = vrot.slane %v458, 1
      %v461 = vor.u32 %v456, %v460
      %v463 = vshll.u32 %v436, 16
      %v465 = vrot.slane %v463, 1
      %v466 = vsel %vm454, %v461, %v465
      %v467 = vshrl.u32 %v436, 16
      %v469 = vor.u32 %v467, %v465
      %v471 = vshll.u32 %v437, 16
      %v473 = vrot.slane %v471, 1
      %v474 = vsel %vm454, %v469, %v473
      %v475 = vshrl.u32 %v437, 16
      %v477 = vor.u32 %v475, %v473
      %v479 = vshll.u32 %v438, 16
      %v481 = vrot.slane %v479, 1
      %v482 = vsel %vm454, %v477, %v481
      %v483 = vshrl.u32 %v438, 16
      %v485 = vor.u32 %v483, %v481
      %v487 = vshll.u32 %v439, 16
      %v489 = vrot.slane %v487, 1
      %v490 = vsel %vm454, %v485, %v489
      %v491 = vshrl.u32 %v439, 16
      %v493 = vor.u32 %v491, %v489
      %v495 = vshll.u32 %v440, 16
      %v497 = vrot.slane %v495, 1
      %v498 = vsel %vm454, %v493, %v497
      %v499 = vshrl.u32 %v440, 16
      %v501 = vor.u32 %v499, %v497
      %v503 = vshll.u32 %v441, 16
      %v505 = vrot.slane %v503, 1
      %v506 = vsel %vm454, %v501, %v505
      %v507 = vshrl.u32 %v441, 16
      %v509 = vor.u32 %v507, %v505
      %v511 = vshll.u32 %v442, 16
      %v513 = vrot.slane %v511, 1
      %v514 = vsel %vm454, %v509, %v513
      %v515 = vshrl.u32 %v442, 16
      %v517 = vor.u32 %v515, %v513
      %v519 = vshll.u32 %v443, 16
      %v521 = vrot.slane %v519, 1
      %v522 = vsel %vm454, %v517, %v521
      %v523 = vshrl.u32 %v443, 16
      %v525 = vor.u32 %v523, %v521
      %v527 = vshll.u32 %v444, 16
      %v529 = vrot.slane %v527, 1
      %v530 = vsel %vm454, %v525, %v529
      %v531 = vshrl.u32 %v444, 16
      %v533 = vor.u32 %v531, %v529
      %v535 = vshll.u32 %v445, 16
      %v537 = vrot.slane %v535, 1
      %v538 = vsel %vm454, %v533, %v537
      %v539 = vshrl.u32 %v445, 16
      %v541 = vor.u32 %v539, %v537
      %v543 = vshll.u32 %v446, 16
      %v545 = vrot.slane %v543, 1
      %v546 = vsel %vm454, %v541, %v545
      %v547 = vshrl.u32 %v446, 16
      %v549 = vor.u32 %v547, %v545
      %v551 = vshll.u32 %v447, 16
      %v553 = vrot.slane %v551, 1
      %v554 = vsel %vm454, %v549, %v553
      %v555 = vshrl.u32 %v447, 16
      %v557 = vor.u32 %v555, %v553
      %v559 = vshll.u32 %v448, 16
      %v561 = vrot.slane %v559, 1
      %v562 = vsel %vm454, %v557, %v561
      %v563 = vshrl.u32 %v448, 16
      %v565 = vor.u32 %v563, %v561
      %v567 = vshll.u32 %v449, 16
      %v569 = vrot.slane %v567, 1
      %v570 = vsel %vm454, %v565, %v569
      %v571 = vshrl.u32 %v449, 16
      %v573 = vor.u32 %v571, %v569
      %v575 = vshll.u32 %v450, 16
      %v577 = vrot.slane %v575, 1
      %v578 = vsel %vm454, %v573, %v577
      %v579 = vshrl.u32 %v450, 16
      %v581 = vor.u32 %v579, %v577
      %v583 = vshll.u32 %v451, 16
      %v585 = vrot.slane %v583, 1
      %v586 = vsel %vm454, %v581, %v585
      %v587 = vshrl.u32 %v451, 16
      %v589 = vor.u32 %v587, %v585
      %v591 = vshll.u32 %v452, 16
      %v593 = vrot.slane %v591, 1
      %v594 = vsel %vm454, %v589, %v593
      %v595 = vshrl.u32 %v452, 16
      %v597 = vor.u32 %v595, %v593
      %v599 = vshll.u32 %v453, 16
      %v601 = vrot.slane %v599, 1
      %v602 = vsel %vm454, %v597, %v601
      %v611 = vunpack.c.l.b16 %v353
      %v612 = vunpack.c.l.b16 %v354
      %v613 = vunpack.c.l.b16 %v355
      %v614 = vunpack.c.l.b16 %v356
      %v615 = vunpack.c.l.b16 %v357
      %v616 = vunpack.c.l.b16 %v358
      %v617 = vunpack.c.l.b16 %v359
      %v618 = vunpack.c.l.b16 %v360
      %v619 = vpack.c.b16 %v612, %v611
      %v620 = vpack.c.b16 %v614, %v613
      %v621 = vpack.c.b16 %v616, %v615
      %v622 = vpack.c.b16 %v618, %v617
      %vm627 = vcmask 523264
      %v629 = vsel %vm627, %v466, 0
      %v632 = vsel %vm627, %v474, 0
      %v635 = vsel %vm627, %v482, 0
      %v638 = vsel %vm627, %v490, 0
      %v641 = vsel %vm627, %v498, 0
      %v644 = vsel %vm627, %v506, 0
      %v647 = vsel %vm627, %v514, 0
      %v650 = vsel %vm627, %v522, 0
      %v653 = vsel %vm627, %v530, 0
      %v656 = vsel %vm627, %v538, 0
      %v659 = vsel %vm627, %v546, 0
      %v662 = vsel %vm627, %v554, 0
      %v665 = vsel %vm627, %v562, 0
      %v668 = vsel %vm627, %v570, 0
      %v671 = vsel %vm627, %v578, 0
      %v674 = vsel %vm627, %v586, 0
      %v677 = vsel %vm627, %v594, 0
      %v680 = vsel %vm627, %v602, 0
      %682 = vmatpush.bf16.msra.mxu0 0
      %683 = vmatpush.bf16.msra.mxu0 0
      %684 = vmatpush.bf16.msra.mxu0 0
      %685 = vmatpush.bf16.msra.mxu0 0
      %686 = vmatpush.bf16.msra.mxu0 %v622
      %687 = vmatpush.bf16.msra.mxu0 %v621
      %688 = vmatpush.bf16.msra.mxu0 %v620
      %689 = vmatpush.bf16.msra.mxu0 %v619
      %690 = vmatmul.bf16.gmra.mxu0 %v629
      %v691 = vpop.f32.mrf.mxu0
      %v692 = vadd.f32 0.0, %v691
      %v693 = vpop.f32.mrf.mxu0
      %v694 = vadd.f32 0.0, %v693
      %695 = vmatmul.bf16.gmra.mxu0 %v632
      %v696 = vpop.f32.mrf.mxu0
      %v697 = vadd.f32 0.0, %v696
      %v698 = vpop.f32.mrf.mxu0
      %v699 = vadd.f32 0.0, %v698
      %700 = vmatmul.bf16.gmra.mxu0 %v635
      %v701 = vpop.f32.mrf.mxu0
      %v702 = vadd.f32 0.0, %v701
      %v703 = vpop.f32.mrf.mxu0
      %v704 = vadd.f32 0.0, %v703
      %705 = vmatmul.bf16.gmra.mxu0 %v638
      %v706 = vpop.f32.mrf.mxu0
      %v707 = vadd.f32 0.0, %v706
      %v708 = vpop.f32.mrf.mxu0
      %v709 = vadd.f32 0.0, %v708
      %710 = vmatmul.bf16.gmra.mxu0 %v641
      %v711 = vpop.f32.mrf.mxu0
      %v712 = vadd.f32 0.0, %v711
      %v713 = vpop.f32.mrf.mxu0
      %v714 = vadd.f32 0.0, %v713
      %715 = vmatmul.bf16.gmra.mxu0 %v644
      %v716 = vpop.f32.mrf.mxu0
      %v717 = vadd.f32 0.0, %v716
      %v718 = vpop.f32.mrf.mxu0
      %v719 = vadd.f32 0.0, %v718
      %720 = vmatmul.bf16.gmra.mxu0 %v647
      %v721 = vpop.f32.mrf.mxu0
      %v722 = vadd.f32 0.0, %v721
      %v723 = vpop.f32.mrf.mxu0
      %v724 = vadd.f32 0.0, %v723
      %725 = vmatmul.bf16.gmra.mxu0 %v650
      %v726 = vpop.f32.mrf.mxu0
      %v727 = vadd.f32 0.0, %v726
      %v728 = vpop.f32.mrf.mxu0
      %v729 = vadd.f32 0.0, %v728
      %730 = vmatmul.bf16.gmra.mxu0 %v653
      %v731 = vpop.f32.mrf.mxu0
      %v732 = vadd.f32 0.0, %v731
      %v733 = vpop.f32.mrf.mxu0
      %v734 = vadd.f32 0.0, %v733
      %735 = vmatmul.bf16.gmra.mxu0 %v656
      %v736 = vpop.f32.mrf.mxu0
      %v737 = vadd.f32 0.0, %v736
      %v738 = vpop.f32.mrf.mxu0
      %v739 = vadd.f32 0.0, %v738
      %740 = vmatmul.bf16.gmra.mxu0 %v659
      %v741 = vpop.f32.mrf.mxu0
      %v742 = vadd.f32 0.0, %v741
      %v743 = vpop.f32.mrf.mxu0
      %v744 = vadd.f32 0.0, %v743
      %745 = vmatmul.bf16.gmra.mxu0 %v662
      %v746 = vpop.f32.mrf.mxu0
      %v747 = vadd.f32 0.0, %v746
      %v748 = vpop.f32.mrf.mxu0
      %v749 = vadd.f32 0.0, %v748
      %750 = vmatmul.bf16.gmra.mxu0 %v665
      %v751 = vpop.f32.mrf.mxu0
      %v752 = vadd.f32 0.0, %v751
      %v753 = vpop.f32.mrf.mxu0
      %v754 = vadd.f32 0.0, %v753
      %755 = vmatmul.bf16.gmra.mxu0 %v668
      %v756 = vpop.f32.mrf.mxu0
      %v757 = vadd.f32 0.0, %v756
      %v758 = vpop.f32.mrf.mxu0
      %v759 = vadd.f32 0.0, %v758
      %760 = vmatmul.bf16.gmra.mxu0 %v671
      %v761 = vpop.f32.mrf.mxu0
      %v762 = vadd.f32 0.0, %v761
      %v763 = vpop.f32.mrf.mxu0
      %v764 = vadd.f32 0.0, %v763
      %765 = vmatmul.bf16.gmra.mxu0 %v674
      %v766 = vpop.f32.mrf.mxu0
      %v767 = vadd.f32 0.0, %v766
      %v768 = vpop.f32.mrf.mxu0
      %v769 = vadd.f32 0.0, %v768
      %770 = vmatmul.bf16.gmra.mxu0 %v677
      %v771 = vpop.f32.mrf.mxu0
      %v772 = vadd.f32 0.0, %v771
      %v773 = vpop.f32.mrf.mxu0
      %v774 = vadd.f32 0.0, %v773
      %775 = vmatmul.bf16.gmra.mxu0 %v680
      %v776 = vpop.f32.mrf.mxu0
      %v777 = vadd.f32 0.0, %v776
      %v778 = vpop.f32.mrf.mxu0
      %v779 = vadd.f32 0.0, %v778
      %780 = vdwg.mxu0
      %v789 = vunpack.c.l.b16 %v343
      %v790 = vunpack.c.l.b16 %v344
      %v791 = vunpack.c.l.b16 %v345
      %v792 = vunpack.c.l.b16 %v346
      %v793 = vunpack.c.l.b16 %v347
      %v794 = vunpack.c.l.b16 %v348
      %v795 = vunpack.c.l.b16 %v349
      %v796 = vunpack.c.l.b16 %v350
      %v797 = vpack.c.b16 %v790, %v789
      %v798 = vpack.c.b16 %v792, %v791
      %v799 = vpack.c.b16 %v794, %v793
      %v800 = vpack.c.b16 %v796, %v795
      %v805 = vsel %vm627, %v435, 0
      %v807 = vsel %vm627, %v436, 0
      %v809 = vsel %vm627, %v437, 0
      %v811 = vsel %vm627, %v438, 0
      %v813 = vsel %vm627, %v439, 0
      %v815 = vsel %vm627, %v440, 0
      %v817 = vsel %vm627, %v441, 0
      %v819 = vsel %vm627, %v442, 0
      %v821 = vsel %vm627, %v443, 0
      %v823 = vsel %vm627, %v444, 0
      %v825 = vsel %vm627, %v445, 0
      %v827 = vsel %vm627, %v446, 0
      %v829 = vsel %vm627, %v447, 0
      %v831 = vsel %vm627, %v448, 0
      %v833 = vsel %vm627, %v449, 0
      %v835 = vsel %vm627, %v450, 0
      %v837 = vsel %vm627, %v451, 0
      %v839 = vsel %vm627, %v452, 0
      %841 = vmatpush.bf16.msra.mxu0 0
      %842 = vmatpush.bf16.msra.mxu0 0
      %843 = vmatpush.bf16.msra.mxu0 0
      %844 = vmatpush.bf16.msra.mxu0 0
      %845 = vmatpush.bf16.msra.mxu0 %v800
      %846 = vmatpush.bf16.msra.mxu0 %v799
      %847 = vmatpush.bf16.msra.mxu0 %v798
      %848 = vmatpush.bf16.msra.mxu0 %v797
      %849 = vmatmul.bf16.gmra.mxu0 %v805
      %v850 = vpop.f32.mrf.mxu0
      %v851 = vadd.f32 %v692, %v850
      %v852 = vpop.f32.mrf.mxu0
      %v853 = vadd.f32 %v694, %v852
      %854 = vmatmul.bf16.gmra.mxu0 %v807
      %v855 = vpop.f32.mrf.mxu0
      %v856 = vadd.f32 %v697, %v855
      %v857 = vpop.f32.mrf.mxu0
      %v858 = vadd.f32 %v699, %v857
      %859 = vmatmul.bf16.gmra.mxu0 %v809
      %v860 = vpop.f32.mrf.mxu0
      %v861 = vadd.f32 %v702, %v860
      %v862 = vpop.f32.mrf.mxu0
      %v863 = vadd.f32 %v704, %v862
      %864 = vmatmul.bf16.gmra.mxu0 %v811
      %v865 = vpop.f32.mrf.mxu0
      %v866 = vadd.f32 %v707, %v865
      %v867 = vpop.f32.mrf.mxu0
      %v868 = vadd.f32 %v709, %v867
      %869 = vmatmul.bf16.gmra.mxu0 %v813
      %v870 = vpop.f32.mrf.mxu0
      %v871 = vadd.f32 %v712, %v870
      %v872 = vpop.f32.mrf.mxu0
      %v873 = vadd.f32 %v714, %v872
      %874 = vmatmul.bf16.gmra.mxu0 %v815
      %v875 = vpop.f32.mrf.mxu0
      %v876 = vadd.f32 %v717, %v875
      %v877 = vpop.f32.mrf.mxu0
      %v878 = vadd.f32 %v719, %v877
      %879 = vmatmul.bf16.gmra.mxu0 %v817
      %v880 = vpop.f32.mrf.mxu0
      %v881 = vadd.f32 %v722, %v880
      %v882 = vpop.f32.mrf.mxu0
      %v883 = vadd.f32 %v724, %v882
      %884 = vmatmul.bf16.gmra.mxu0 %v819
      %v885 = vpop.f32.mrf.mxu0
      %v886 = vadd.f32 %v727, %v885
      %v887 = vpop.f32.mrf.mxu0
      %v888 = vadd.f32 %v729, %v887
      %889 = vmatmul.bf16.gmra.mxu0 %v821
      %v890 = vpop.f32.mrf.mxu0
      %v891 = vadd.f32 %v732, %v890
      %v892 = vpop.f32.mrf.mxu0
      %v893 = vadd.f32 %v734, %v892
      %894 = vmatmul.bf16.gmra.mxu0 %v823
      %v895 = vpop.f32.mrf.mxu0
      %v896 = vadd.f32 %v737, %v895
      %v897 = vpop.f32.mrf.mxu0
      %v898 = vadd.f32 %v739, %v897
      %899 = vmatmul.bf16.gmra.mxu0 %v825
      %v900 = vpop.f32.mrf.mxu0
      %v901 = vadd.f32 %v742, %v900
      %v902 = vpop.f32.mrf.mxu0
      %v903 = vadd.f32 %v744, %v902
      %904 = vmatmul.bf16.gmra.mxu0 %v827
      %v905 = vpop.f32.mrf.mxu0
      %v906 = vadd.f32 %v747, %v905
      %v907 = vpop.f32.mrf.mxu0
      %v908 = vadd.f32 %v749, %v907
      %909 = vmatmul.bf16.gmra.mxu0 %v829
      %v910 = vpop.f32.mrf.mxu0
      %v911 = vadd.f32 %v752, %v910
      %v912 = vpop.f32.mrf.mxu0
      %v913 = vadd.f32 %v754, %v912
      %914 = vmatmul.bf16.gmra.mxu0 %v831
      %v915 = vpop.f32.mrf.mxu0
      %v916 = vadd.f32 %v757, %v915
      %v917 = vpop.f32.mrf.mxu0
      %v918 = vadd.f32 %v759, %v917
      %919 = vmatmul.bf16.gmra.mxu0 %v833
      %v920 = vpop.f32.mrf.mxu0
      %v921 = vadd.f32 %v762, %v920
      %v922 = vpop.f32.mrf.mxu0
      %v923 = vadd.f32 %v764, %v922
      %924 = vmatmul.bf16.gmra.mxu0 %v835
      %v925 = vpop.f32.mrf.mxu0
      %v926 = vadd.f32 %v767, %v925
      %v927 = vpop.f32.mrf.mxu0
      %v928 = vadd.f32 %v769, %v927
      %929 = vmatmul.bf16.gmra.mxu0 %v837
      %v930 = vpop.f32.mrf.mxu0
      %v931 = vadd.f32 %v772, %v930
      %v932 = vpop.f32.mrf.mxu0
      %v933 = vadd.f32 %v774, %v932
      %934 = vmatmul.bf16.gmra.mxu0 %v839
      %v935 = vpop.f32.mrf.mxu0
      %v936 = vadd.f32 %v777, %v935
      %v937 = vpop.f32.mrf.mxu0
      %v938 = vadd.f32 %v779, %v937
      %939 = vdwg.mxu0
      %v940 = vld [vmem:[%s300] sm:$0xe]
      %s941 = scalar_lea.vmem %s2, 64
      %v942 = vld [vmem:[%s941] sm:$0xf]
      %v943 = vld [vmem:[%s941 + $0x4] sm:$0xf]
      %v944 = vld [vmem:[%s941 + $0x8] sm:$0xf]
      %v945 = vld [vmem:[%s941 + $0xc] sm:$0xf]
      %v946 = vld [vmem:[%s941 + $0x10] sm:$0xf]
      %v947 = vld [vmem:[%s941 + $0x14] sm:$0xf]
      %v948 = vld [vmem:[%s941 + $0x18] sm:$0xf]
      %v949 = vld [vmem:[%s941 + $0x1c] sm:$0xf]
      %v951 = vunpack.c.l.b16 %v940
      %v952 = vpack.c.b16 %v399, %v951
      %vm953 = vcmask 1046528
      %v954 = vrot.slane %v952, 1
      %v955 = vrot.slane %v436, 1
      %v956 = vsel %vm953, %v954, %v955
      %v957 = vrot.slane %v437, 1
      %v958 = vsel %vm953, %v955, %v957
      %v959 = vrot.slane %v438, 1
      %v960 = vsel %vm953, %v957, %v959
      %v961 = vrot.slane %v439, 1
      %v962 = vsel %vm953, %v959, %v961
      %v963 = vrot.slane %v440, 1
      %v964 = vsel %vm953, %v961, %v963
      %v965 = vrot.slane %v441, 1
      %v966 = vsel %vm953, %v963, %v965
      %v967 = vrot.slane %v442, 1
      %v968 = vsel %vm953, %v965, %v967
      %v969 = vrot.slane %v443, 1
      %v970 = vsel %vm953, %v967, %v969
      %v971 = vrot.slane %v444, 1
      %v972 = vsel %vm953, %v969, %v971
      %v973 = vrot.slane %v445, 1
      %v974 = vsel %vm953, %v971, %v973
      %v975 = vrot.slane %v446, 1
      %v976 = vsel %vm953, %v973, %v975
      %v977 = vrot.slane %v447, 1
      %v978 = vsel %vm953, %v975, %v977
      %v979 = vrot.slane %v448, 1
      %v980 = vsel %vm953, %v977, %v979
      %v981 = vrot.slane %v449, 1
      %v982 = vsel %vm953, %v979, %v981
      %v983 = vrot.slane %v450, 1
      %v984 = vsel %vm953, %v981, %v983
      %v985 = vrot.slane %v451, 1
      %v986 = vsel %vm953, %v983, %v985
      %v987 = vrot.slane %v452, 1
      %v988 = vsel %vm953, %v985, %v987
      %v989 = vrot.slane %v453, 1
      %v990 = vsel %vm953, %v987, %v989
      %v999 = vunpack.c.l.b16 %v942
      %v1000 = vunpack.c.l.b16 %v943
      %v1001 = vunpack.c.l.b16 %v944
      %v1002 = vunpack.c.l.b16 %v945
      %v1003 = vunpack.c.l.b16 %v946
      %v1004 = vunpack.c.l.b16 %v947
      %v1005 = vunpack.c.l.b16 %v948
      %v1006 = vunpack.c.l.b16 %v949
      %v1007 = vpack.c.b16 %v1000, %v999
      %v1008 = vpack.c.b16 %v1002, %v1001
      %v1009 = vpack.c.b16 %v1004, %v1003
      %v1010 = vpack.c.b16 %v1006, %v1005
      %v1016 = vsel %vm627, %v956, 0
      %v1019 = vsel %vm627, %v958, 0
      %v1022 = vsel %vm627, %v960, 0
      %v1025 = vsel %vm627, %v962, 0
      %v1028 = vsel %vm627, %v964, 0
      %v1031 = vsel %vm627, %v966, 0
      %v1034 = vsel %vm627, %v968, 0
      %v1037 = vsel %vm627, %v970, 0
      %v1040 = vsel %vm627, %v972, 0
      %v1043 = vsel %vm627, %v974, 0
      %v1046 = vsel %vm627, %v976, 0
      %v1049 = vsel %vm627, %v978, 0
      %v1052 = vsel %vm627, %v980, 0
      %v1055 = vsel %vm627, %v982, 0
      %v1058 = vsel %vm627, %v984, 0
      %v1061 = vsel %vm627, %v986, 0
      %v1064 = vsel %vm627, %v988, 0
      %v1067 = vsel %vm627, %v990, 0
      %1069 = vmatpush.bf16.msra.mxu0 0
      %1070 = vmatpush.bf16.msra.mxu0 0
      %1071 = vmatpush.bf16.msra.mxu0 0
      %1072 = vmatpush.bf16.msra.mxu0 0
      %1073 = vmatpush.bf16.msra.mxu0 %v1010
      %1074 = vmatpush.bf16.msra.mxu0 %v1009
      %1075 = vmatpush.bf16.msra.mxu0 %v1008
      %1076 = vmatpush.bf16.msra.mxu0 %v1007
      %1077 = vmatmul.bf16.gmra.mxu0 %v1016
      %v1078 = vpop.f32.mrf.mxu0
      %v1079 = vadd.f32 0.0, %v1078
      %v1080 = vpop.f32.mrf.mxu0
      %v1081 = vadd.f32 0.0, %v1080
      %1082 = vmatmul.bf16.gmra.mxu0 %v1019
      %v1083 = vpop.f32.mrf.mxu0
      %v1084 = vadd.f32 0.0, %v1083
      %v1085 = vpop.f32.mrf.mxu0
      %v1086 = vadd.f32 0.0, %v1085
      %1087 = vmatmul.bf16.gmra.mxu0 %v1022
      %v1088 = vpop.f32.mrf.mxu0
      %v1089 = vadd.f32 0.0, %v1088
      %v1090 = vpop.f32.mrf.mxu0
      %v1091 = vadd.f32 0.0, %v1090
      %1092 = vmatmul.bf16.gmra.mxu0 %v1025
      %v1093 = vpop.f32.mrf.mxu0
      %v1094 = vadd.f32 0.0, %v1093
      %v1095 = vpop.f32.mrf.mxu0
      %v1096 = vadd.f32 0.0, %v1095
      %1097 = vmatmul.bf16.gmra.mxu0 %v1028
      %v1098 = vpop.f32.mrf.mxu0
      %v1099 = vadd.f32 0.0, %v1098
      %v1100 = vpop.f32.mrf.mxu0
      %v1101 = vadd.f32 0.0, %v1100
      %1102 = vmatmul.bf16.gmra.mxu0 %v1031
      %v1103 = vpop.f32.mrf.mxu0
      %v1104 = vadd.f32 0.0, %v1103
      %v1105 = vpop.f32.mrf.mxu0
      %v1106 = vadd.f32 0.0, %v1105
      %1107 = vmatmul.bf16.gmra.mxu0 %v1034
      %v1108 = vpop.f32.mrf.mxu0
      %v1109 = vadd.f32 0.0, %v1108
      %v1110 = vpop.f32.mrf.mxu0
      %v1111 = vadd.f32 0.0, %v1110
      %1112 = vmatmul.bf16.gmra.mxu0 %v1037
      %v1113 = vpop.f32.mrf.mxu0
      %v1114 = vadd.f32 0.0, %v1113
      %v1115 = vpop.f32.mrf.mxu0
      %v1116 = vadd.f32 0.0, %v1115
      %1117 = vmatmul.bf16.gmra.mxu0 %v1040
      %v1118 = vpop.f32.mrf.mxu0
      %v1119 = vadd.f32 0.0, %v1118
      %v1120 = vpop.f32.mrf.mxu0
      %v1121 = vadd.f32 0.0, %v1120
      %1122 = vmatmul.bf16.gmra.mxu0 %v1043
      %v1123 = vpop.f32.mrf.mxu0
      %v1124 = vadd.f32 0.0, %v1123
      %v1125 = vpop.f32.mrf.mxu0
      %v1126 = vadd.f32 0.0, %v1125
      %1127 = vmatmul.bf16.gmra.mxu0 %v1046
      %v1128 = vpop.f32.mrf.mxu0
      %v1129 = vadd.f32 0.0, %v1128
      %v1130 = vpop.f32.mrf.mxu0
      %v1131 = vadd.f32 0.0, %v1130
      %1132 = vmatmul.bf16.gmra.mxu0 %v1049
      %v1133 = vpop.f32.mrf.mxu0
      %v1134 = vadd.f32 0.0, %v1133
      %v1135 = vpop.f32.mrf.mxu0
      %v1136 = vadd.f32 0.0, %v1135
      %1137 = vmatmul.bf16.gmra.mxu0 %v1052
      %v1138 = vpop.f32.mrf.mxu0
      %v1139 = vadd.f32 0.0, %v1138
      %v1140 = vpop.f32.mrf.mxu0
      %v1141 = vadd.f32 0.0, %v1140
      %1142 = vmatmul.bf16.gmra.mxu0 %v1055
      %v1143 = vpop.f32.mrf.mxu0
      %v1144 = vadd.f32 0.0, %v1143
      %v1145 = vpop.f32.mrf.mxu0
      %v1146 = vadd.f32 0.0, %v1145
      %1147 = vmatmul.bf16.gmra.mxu0 %v1058
      %v1148 = vpop.f32.mrf.mxu0
      %v1149 = vadd.f32 0.0, %v1148
      %v1150 = vpop.f32.mrf.mxu0
      %v1151 = vadd.f32 0.0, %v1150
      %1152 = vmatmul.bf16.gmra.mxu0 %v1061
      %v1153 = vpop.f32.mrf.mxu0
      %v1154 = vadd.f32 0.0, %v1153
      %v1155 = vpop.f32.mrf.mxu0
      %v1156 = vadd.f32 0.0, %v1155
      %1157 = vmatmul.bf16.gmra.mxu0 %v1064
      %v1158 = vpop.f32.mrf.mxu0
      %v1159 = vadd.f32 0.0, %v1158
      %v1160 = vpop.f32.mrf.mxu0
      %v1161 = vadd.f32 0.0, %v1160
      %1162 = vmatmul.bf16.gmra.mxu0 %v1067
      %v1163 = vpop.f32.mrf.mxu0
      %v1164 = vadd.f32 0.0, %v1163
      %v1165 = vpop.f32.mrf.mxu0
      %v1166 = vadd.f32 0.0, %v1165
      %1167 = vdwg.mxu0
      %v1168 = vadd.f32 %v851, %v1079
      %v1169 = vadd.f32 %v853, %v1081
      %v1170 = vadd.f32 %v856, %v1084
      %v1171 = vadd.f32 %v858, %v1086
      %v1172 = vadd.f32 %v861, %v1089
      %v1173 = vadd.f32 %v863, %v1091
      %v1174 = vadd.f32 %v866, %v1094
      %v1175 = vadd.f32 %v868, %v1096
      %v1176 = vadd.f32 %v871, %v1099
      %v1177 = vadd.f32 %v873, %v1101
      %v1178 = vadd.f32 %v876, %v1104
      %v1179 = vadd.f32 %v878, %v1106
      %v1180 = vadd.f32 %v881, %v1109
      %v1181 = vadd.f32 %v883, %v1111
      %v1182 = vadd.f32 %v886, %v1114
      %v1183 = vadd.f32 %v888, %v1116
      %v1184 = vadd.f32 %v891, %v1119
      %v1185 = vadd.f32 %v893, %v1121
      %v1186 = vadd.f32 %v896, %v1124
      %v1187 = vadd.f32 %v898, %v1126
      %v1188 = vadd.f32 %v901, %v1129
      %v1189 = vadd.f32 %v903, %v1131
      %v1190 = vadd.f32 %v906, %v1134
      %v1191 = vadd.f32 %v908, %v1136
      %v1192 = vadd.f32 %v911, %v1139
      %v1193 = vadd.f32 %v913, %v1141
      %v1194 = vadd.f32 %v916, %v1144
      %v1195 = vadd.f32 %v918, %v1146
      %v1196 = vadd.f32 %v921, %v1149
      %v1197 = vadd.f32 %v923, %v1151
      %v1198 = vadd.f32 %v926, %v1154
      %v1199 = vadd.f32 %v928, %v1156
      %v1200 = vadd.f32 %v931, %v1159
      %v1201 = vadd.f32 %v933, %v1161
      %v1202 = vadd.f32 %v936, %v1164
      %v1203 = vadd.f32 %v938, %v1166
      %v1204 = vld [vmem:[%s300 + $0x8] sm:$0xe]
      %v1205 = vld [vmem:[%s300 + $0xc] sm:$0xf]
      %v1206 = vld [vmem:[%s300 + $0x10] sm:$0xf]
      %v1207 = vld [vmem:[%s300 + $0x14] sm:$0xf]
      %v1208 = vld [vmem:[%s300 + $0x18] sm:$0xf]
      %v1209 = vld [vmem:[%s300 + $0x1c] sm:$0xf]
      %v1210 = vld [vmem:[%s300 + $0x20] sm:$0xf]
      %v1211 = vld [vmem:[%s300 + $0x24] sm:$0xf]
      %v1212 = vld [vmem:[%s300 + $0x28] sm:$0xf]
      %v1213 = vld [vmem:[%s300 + $0x2c] sm:$0xf]
      %v1214 = vld [vmem:[%s300 + $0x30] sm:$0xf]
      %v1215 = vld [vmem:[%s300 + $0x34] sm:$0xf]
      %v1216 = vld [vmem:[%s300 + $0x38] sm:$0xf]
      %v1217 = vld [vmem:[%s300 + $0x3c] sm:$0xf]
      %v1218 = vld [vmem:[%s300 + $0x40] sm:$0xf]
      %v1219 = vld [vmem:[%s300 + $0x44] sm:$0xf]
      %v1220 = vld [vmem:[%s300 + $0x48] sm:$0xf]
      %v1221 = vld [vmem:[%s300 + $0x4c] sm:$0xf]
      %v1222 = vld [vmem:[%s300 + $0x50] sm:$0xf]
      %v1223 = vld [vmem:[%s300 + $0x54] sm:$0xf]
      %v1224 = vld [vmem:[%s300 + $0x58] sm:$0xf]
      %v1225 = vld [vmem:[%s300 + $0x5c] sm:$0xf]
      %v1226 = vld [vmem:[%s300 + $0x60] sm:$0xf]
      %v1227 = vld [vmem:[%s300 + $0x64] sm:$0xf]
      %v1228 = vld [vmem:[%s300 + $0x68] sm:$0xf]
      %v1229 = vld [vmem:[%s300 + $0x6c] sm:$0xf]
      %v1230 = vld [vmem:[%s300 + $0x70] sm:$0xf]
      %v1231 = vld [vmem:[%s300 + $0x74] sm:$0xf]
      %v1232 = vld [vmem:[%s300 + $0x78] sm:$0xf]
      %v1233 = vld [vmem:[%s300 + $0x7c] sm:$0xf]
      %v1234 = vld [vmem:[%s300 + $0x80] sm:$0xf]
      %v1235 = vld [vmem:[%s300 + $0x84] sm:$0xf]
      %v1236 = vld [vmem:[%s300 + $0x88] sm:$0xf]
      %v1237 = vld [vmem:[%s300 + $0x8c] sm:$0xf]
      %v1238 = vld [vmem:[%s300 + $0x90] sm:$0xf]
      %v1239 = vld [vmem:[%s300 + $0x94] sm:$0xf]
      %v1240 = vld [vmem:[%s300 + $0x98] sm:$0x1]
      %s1241 = scalar_lea.vmem %s2, 96
      %v1242 = vld [vmem:[%s1241] sm:$0xf]
      %v1243 = vld [vmem:[%s1241 + $0x4] sm:$0xf]
      %v1244 = vld [vmem:[%s1241 + $0x8] sm:$0xf]
      %v1245 = vld [vmem:[%s1241 + $0xc] sm:$0xf]
      %v1246 = vld [vmem:[%s1241 + $0x10] sm:$0xf]
      %v1247 = vld [vmem:[%s1241 + $0x14] sm:$0xf]
      %v1248 = vld [vmem:[%s1241 + $0x18] sm:$0xf]
      %v1249 = vld [vmem:[%s1241 + $0x1c] sm:$0xf]
      %v1287 = vunpack.c.l.b16 %v1204
      %v1288 = vunpack.c.l.b16 %v1205
      %v1289 = vunpack.c.l.b16 %v1206
      %v1290 = vunpack.c.l.b16 %v1207
      %v1291 = vunpack.c.l.b16 %v1208
      %v1292 = vunpack.c.l.b16 %v1209
      %v1293 = vunpack.c.l.b16 %v1210
      %v1294 = vunpack.c.l.b16 %v1211
      %v1295 = vunpack.c.l.b16 %v1212
      %v1296 = vunpack.c.l.b16 %v1213
      %v1297 = vunpack.c.l.b16 %v1214
      %v1298 = vunpack.c.l.b16 %v1215
      %v1299 = vunpack.c.l.b16 %v1216
      %v1300 = vunpack.c.l.b16 %v1217
      %v1301 = vunpack.c.l.b16 %v1218
      %v1302 = vunpack.c.l.b16 %v1219
      %v1303 = vunpack.c.l.b16 %v1220
      %v1304 = vunpack.c.l.b16 %v1221
      %v1305 = vunpack.c.l.b16 %v1222
      %v1306 = vunpack.c.l.b16 %v1223
      %v1307 = vunpack.c.l.b16 %v1224
      %v1308 = vunpack.c.l.b16 %v1225
      %v1309 = vunpack.c.l.b16 %v1226
      %v1310 = vunpack.c.l.b16 %v1227
      %v1311 = vunpack.c.l.b16 %v1228
      %v1312 = vunpack.c.l.b16 %v1229
      %v1313 = vunpack.c.l.b16 %v1230
      %v1314 = vunpack.c.l.b16 %v1231
      %v1315 = vunpack.c.l.b16 %v1232
      %v1316 = vunpack.c.l.b16 %v1233
      %v1317 = vunpack.c.l.b16 %v1234
      %v1318 = vunpack.c.l.b16 %v1235
      %v1319 = vunpack.c.l.b16 %v1236
      %v1320 = vunpack.c.l.b16 %v1237
      %v1321 = vunpack.c.l.b16 %v1238
      %v1322 = vunpack.c.l.b16 %v1239
      %v1323 = vunpack.c.l.b16 %v1240
      %v1324 = vpack.c.b16 %v1288, %v1287
      %v1325 = vpack.c.b16 %v1290, %v1289
      %v1326 = vpack.c.b16 %v1292, %v1291
      %v1327 = vpack.c.b16 %v1294, %v1293
      %v1328 = vpack.c.b16 %v1296, %v1295
      %v1329 = vpack.c.b16 %v1298, %v1297
      %v1330 = vpack.c.b16 %v1300, %v1299
      %v1331 = vpack.c.b16 %v1302, %v1301
      %v1332 = vpack.c.b16 %v1304, %v1303
      %v1333 = vpack.c.b16 %v1306, %v1305
      %v1334 = vpack.c.b16 %v1308, %v1307
      %v1335 = vpack.c.b16 %v1310, %v1309
      %v1336 = vpack.c.b16 %v1312, %v1311
      %v1337 = vpack.c.b16 %v1314, %v1313
      %v1338 = vpack.c.b16 %v1316, %v1315
      %v1339 = vpack.c.b16 %v1318, %v1317
      %v1340 = vpack.c.b16 %v1320, %v1319
      %v1341 = vpack.c.b16 %v1322, %v1321
      %v1342 = vpack.c.b16 %v1323, %v1323
      %v1343 = vrot.slane %v1324, 1
      %v1344 = vrot.slane %v1325, 1
      %v1345 = vsel %vm953, %v1343, %v1344
      %v1346 = vrot.slane %v1326, 1
      %v1347 = vsel %vm953, %v1344, %v1346
      %v1348 = vrot.slane %v1327, 1
      %v1349 = vsel %vm953, %v1346, %v1348
      %v1350 = vrot.slane %v1328, 1
      %v1351 = vsel %vm953, %v1348, %v1350
      %v1352 = vrot.slane %v1329, 1
      %v1353 = vsel %vm953, %v1350, %v1352
      %v1354 = vrot.slane %v1330, 1
      %v1355 = vsel %vm953, %v1352, %v1354
      %v1356 = vrot.slane %v1331, 1
      %v1357 = vsel %vm953, %v1354, %v1356
      %v1358 = vrot.slane %v1332, 1
      %v1359 = vsel %vm953, %v1356, %v1358
      %v1360 = vrot.slane %v1333, 1
      %v1361 = vsel %vm953, %v1358, %v1360
      %v1362 = vrot.slane %v1334, 1
      %v1363 = vsel %vm953, %v1360, %v1362
      %v1364 = vrot.slane %v1335, 1
      %v1365 = vsel %vm953, %v1362, %v1364
      %v1366 = vrot.slane %v1336, 1
      %v1367 = vsel %vm953, %v1364, %v1366
      %v1368 = vrot.slane %v1337, 1
      %v1369 = vsel %vm953, %v1366, %v1368
      %v1370 = vrot.slane %v1338, 1
      %v1371 = vsel %vm953, %v1368, %v1370
      %v1372 = vrot.slane %v1339, 1
      %v1373 = vsel %vm953, %v1370, %v1372
      %v1374 = vrot.slane %v1340, 1
      %v1375 = vsel %vm953, %v1372, %v1374
      %v1376 = vrot.slane %v1341, 1
      %v1377 = vsel %vm953, %v1374, %v1376
      %v1378 = vrot.slane %v1342, 1
      %v1379 = vsel %vm953, %v1376, %v1378
      %v1388 = vunpack.c.l.b16 %v1242
      %v1389 = vunpack.c.l.b16 %v1243
      %v1390 = vunpack.c.l.b16 %v1244
      %v1391 = vunpack.c.l.b16 %v1245
      %v1392 = vunpack.c.l.b16 %v1246
      %v1393 = vunpack.c.l.b16 %v1247
      %v1394 = vunpack.c.l.b16 %v1248
      %v1395 = vunpack.c.l.b16 %v1249
      %v1396 = vpack.c.b16 %v1389, %v1388
      %v1397 = vpack.c.b16 %v1391, %v1390
      %v1398 = vpack.c.b16 %v1393, %v1392
      %v1399 = vpack.c.b16 %v1395, %v1394
      %v1405 = vsel %vm627, %v1345, 0
      %v1408 = vsel %vm627, %v1347, 0
      %v1411 = vsel %vm627, %v1349, 0
      %v1414 = vsel %vm627, %v1351, 0
      %v1417 = vsel %vm627, %v1353, 0
      %v1420 = vsel %vm627, %v1355, 0
      %v1423 = vsel %vm627, %v1357, 0
      %v1426 = vsel %vm627, %v1359, 0
      %v1429 = vsel %vm627, %v1361, 0
      %v1432 = vsel %vm627, %v1363, 0
      %v1435 = vsel %vm627, %v1365, 0
      %v1438 = vsel %vm627, %v1367, 0
      %v1441 = vsel %vm627, %v1369, 0
      %v1444 = vsel %vm627, %v1371, 0
      %v1447 = vsel %vm627, %v1373, 0
      %v1450 = vsel %vm627, %v1375, 0
      %v1453 = vsel %vm627, %v1377, 0
      %v1456 = vsel %vm627, %v1379, 0
      %1458 = vmatpush.bf16.msra.mxu0 0
      %1459 = vmatpush.bf16.msra.mxu0 0
      %1460 = vmatpush.bf16.msra.mxu0 0
      %1461 = vmatpush.bf16.msra.mxu0 0
      %1462 = vmatpush.bf16.msra.mxu0 %v1399
      %1463 = vmatpush.bf16.msra.mxu0 %v1398
      %1464 = vmatpush.bf16.msra.mxu0 %v1397
      %1465 = vmatpush.bf16.msra.mxu0 %v1396
      %1466 = vmatmul.bf16.gmra.mxu0 %v1405
      %v1467 = vpop.f32.mrf.mxu0
      %v1468 = vadd.f32 0.0, %v1467
      %v1469 = vpop.f32.mrf.mxu0
      %v1470 = vadd.f32 0.0, %v1469
      %1471 = vmatmul.bf16.gmra.mxu0 %v1408
      %v1472 = vpop.f32.mrf.mxu0
      %v1473 = vadd.f32 0.0, %v1472
      %v1474 = vpop.f32.mrf.mxu0
      %v1475 = vadd.f32 0.0, %v1474
      %1476 = vmatmul.bf16.gmra.mxu0 %v1411
      %v1477 = vpop.f32.mrf.mxu0
      %v1478 = vadd.f32 0.0, %v1477
      %v1479 = vpop.f32.mrf.mxu0
      %v1480 = vadd.f32 0.0, %v1479
      %1481 = vmatmul.bf16.gmra.mxu0 %v1414
      %v1482 = vpop.f32.mrf.mxu0
      %v1483 = vadd.f32 0.0, %v1482
      %v1484 = vpop.f32.mrf.mxu0
      %v1485 = vadd.f32 0.0, %v1484
      %1486 = vmatmul.bf16.gmra.mxu0 %v1417
      %v1487 = vpop.f32.mrf.mxu0
      %v1488 = vadd.f32 0.0, %v1487
      %v1489 = vpop.f32.mrf.mxu0
      %v1490 = vadd.f32 0.0, %v1489
      %1491 = vmatmul.bf16.gmra.mxu0 %v1420
      %v1492 = vpop.f32.mrf.mxu0
      %v1493 = vadd.f32 0.0, %v1492
      %v1494 = vpop.f32.mrf.mxu0
      %v1495 = vadd.f32 0.0, %v1494
      %1496 = vmatmul.bf16.gmra.mxu0 %v1423
      %v1497 = vpop.f32.mrf.mxu0
      %v1498 = vadd.f32 0.0, %v1497
      %v1499 = vpop.f32.mrf.mxu0
      %v1500 = vadd.f32 0.0, %v1499
      %1501 = vmatmul.bf16.gmra.mxu0 %v1426
      %v1502 = vpop.f32.mrf.mxu0
      %v1503 = vadd.f32 0.0, %v1502
      %v1504 = vpop.f32.mrf.mxu0
      %v1505 = vadd.f32 0.0, %v1504
      %1506 = vmatmul.bf16.gmra.mxu0 %v1429
      %v1507 = vpop.f32.mrf.mxu0
      %v1508 = vadd.f32 0.0, %v1507
      %v1509 = vpop.f32.mrf.mxu0
      %v1510 = vadd.f32 0.0, %v1509
      %1511 = vmatmul.bf16.gmra.mxu0 %v1432
      %v1512 = vpop.f32.mrf.mxu0
      %v1513 = vadd.f32 0.0, %v1512
      %v1514 = vpop.f32.mrf.mxu0
      %v1515 = vadd.f32 0.0, %v1514
      %1516 = vmatmul.bf16.gmra.mxu0 %v1435
      %v1517 = vpop.f32.mrf.mxu0
      %v1518 = vadd.f32 0.0, %v1517
      %v1519 = vpop.f32.mrf.mxu0
      %v1520 = vadd.f32 0.0, %v1519
      %1521 = vmatmul.bf16.gmra.mxu0 %v1438
      %v1522 = vpop.f32.mrf.mxu0
      %v1523 = vadd.f32 0.0, %v1522
      %v1524 = vpop.f32.mrf.mxu0
      %v1525 = vadd.f32 0.0, %v1524
      %1526 = vmatmul.bf16.gmra.mxu0 %v1441
      %v1527 = vpop.f32.mrf.mxu0
      %v1528 = vadd.f32 0.0, %v1527
      %v1529 = vpop.f32.mrf.mxu0
      %v1530 = vadd.f32 0.0, %v1529
      %1531 = vmatmul.bf16.gmra.mxu0 %v1444
      %v1532 = vpop.f32.mrf.mxu0
      %v1533 = vadd.f32 0.0, %v1532
      %v1534 = vpop.f32.mrf.mxu0
      %v1535 = vadd.f32 0.0, %v1534
      %1536 = vmatmul.bf16.gmra.mxu0 %v1447
      %v1537 = vpop.f32.mrf.mxu0
      %v1538 = vadd.f32 0.0, %v1537
      %v1539 = vpop.f32.mrf.mxu0
      %v1540 = vadd.f32 0.0, %v1539
      %1541 = vmatmul.bf16.gmra.mxu0 %v1450
      %v1542 = vpop.f32.mrf.mxu0
      %v1543 = vadd.f32 0.0, %v1542
      %v1544 = vpop.f32.mrf.mxu0
      %v1545 = vadd.f32 0.0, %v1544
      %1546 = vmatmul.bf16.gmra.mxu0 %v1453
      %v1547 = vpop.f32.mrf.mxu0
      %v1548 = vadd.f32 0.0, %v1547
      %v1549 = vpop.f32.mrf.mxu0
      %v1550 = vadd.f32 0.0, %v1549
      %1551 = vmatmul.bf16.gmra.mxu0 %v1456
      %v1552 = vpop.f32.mrf.mxu0
      %v1553 = vadd.f32 0.0, %v1552
      %v1554 = vpop.f32.mrf.mxu0
      %v1555 = vadd.f32 0.0, %v1554
      %1556 = vdwg.mxu0
      %v1557 = vadd.f32 %v1168, %v1468
      %v1558 = vadd.f32 %v1169, %v1470
      %v1559 = vadd.f32 %v1170, %v1473
      %v1560 = vadd.f32 %v1171, %v1475
      %v1561 = vadd.f32 %v1172, %v1478
      %v1562 = vadd.f32 %v1173, %v1480
      %v1563 = vadd.f32 %v1174, %v1483
      %v1564 = vadd.f32 %v1175, %v1485
      %v1565 = vadd.f32 %v1176, %v1488
      %v1566 = vadd.f32 %v1177, %v1490
      %v1567 = vadd.f32 %v1178, %v1493
      %v1568 = vadd.f32 %v1179, %v1495
      %v1569 = vadd.f32 %v1180, %v1498
      %v1570 = vadd.f32 %v1181, %v1500
      %v1571 = vadd.f32 %v1182, %v1503
      %v1572 = vadd.f32 %v1183, %v1505
      %v1573 = vadd.f32 %v1184, %v1508
      %v1574 = vadd.f32 %v1185, %v1510
      %v1575 = vadd.f32 %v1186, %v1513
      %v1576 = vadd.f32 %v1187, %v1515
      %v1577 = vadd.f32 %v1188, %v1518
      %v1578 = vadd.f32 %v1189, %v1520
      %v1579 = vadd.f32 %v1190, %v1523
      %v1580 = vadd.f32 %v1191, %v1525
      %v1581 = vadd.f32 %v1192, %v1528
      %v1582 = vadd.f32 %v1193, %v1530
      %v1583 = vadd.f32 %v1194, %v1533
      %v1584 = vadd.f32 %v1195, %v1535
      %v1585 = vadd.f32 %v1196, %v1538
      %v1586 = vadd.f32 %v1197, %v1540
      %v1587 = vadd.f32 %v1198, %v1543
      %v1588 = vadd.f32 %v1199, %v1545
      %v1589 = vadd.f32 %v1200, %v1548
      %v1590 = vadd.f32 %v1201, %v1550
      %v1591 = vadd.f32 %v1202, %v1553
      %v1592 = vadd.f32 %v1203, %v1555
      %v1593 = vld [vmem:[%s300 + $0x98] sm:$0x3]
      %s1594 = scalar_lea.vmem %s2, 128
      %v1595 = vld [vmem:[%s1594] sm:$0xf]
      %v1596 = vld [vmem:[%s1594 + $0x4] sm:$0xf]
      %v1597 = vld [vmem:[%s1594 + $0x8] sm:$0xf]
      %v1598 = vld [vmem:[%s1594 + $0xc] sm:$0xf]
      %v1599 = vld [vmem:[%s1594 + $0x10] sm:$0xf]
      %v1600 = vld [vmem:[%s1594 + $0x14] sm:$0xf]
      %v1601 = vld [vmem:[%s1594 + $0x18] sm:$0xf]
      %v1602 = vld [vmem:[%s1594 + $0x1c] sm:$0xf]
      %v1604 = vunpack.c.l.b16 %v1593
      %v1605 = vpack.c.b16 %v1604, %v1604
      %vm1606 = vsmask.f32 6400
      %v1608 = vshrl.u32 %v1324, 16
      %v1610 = vrot.slane %v1608, 1
      %v1611 = vshll.u32 %v1324, 16
      %v1613 = vrot.slane %v1611, 2
      %v1614 = vor.u32 %v1610, %v1613
      %v1616 = vshrl.u32 %v1325, 16
      %v1618 = vrot.slane %v1616, 1
      %v1619 = vshll.u32 %v1325, 16
      %v1621 = vrot.slane %v1619, 2
      %v1622 = vor.u32 %v1618, %v1621
      %v1623 = vsel %vm1606, %v1614, %v1622
      %v1625 = vshrl.u32 %v1326, 16
      %v1627 = vrot.slane %v1625, 1
      %v1628 = vshll.u32 %v1326, 16
      %v1630 = vrot.slane %v1628, 2
      %v1631 = vor.u32 %v1627, %v1630
      %v1632 = vsel %vm1606, %v1622, %v1631
      %v1634 = vshrl.u32 %v1327, 16
      %v1636 = vrot.slane %v1634, 1
      %v1637 = vshll.u32 %v1327, 16
      %v1639 = vrot.slane %v1637, 2
      %v1640 = vor.u32 %v1636, %v1639
      %v1641 = vsel %vm1606, %v1631, %v1640
      %v1643 = vshrl.u32 %v1328, 16
      %v1645 = vrot.slane %v1643, 1
      %v1646 = vshll.u32 %v1328, 16
      %v1648 = vrot.slane %v1646, 2
      %v1649 = vor.u32 %v1645, %v1648
      %v1650 = vsel %vm1606, %v1640, %v1649
      %v1652 = vshrl.u32 %v1329, 16
      %v1654 = vrot.slane %v1652, 1
      %v1655 = vshll.u32 %v1329, 16
      %v1657 = vrot.slane %v1655, 2
      %v1658 = vor.u32 %v1654, %v1657
      %v1659 = vsel %vm1606, %v1649, %v1658
      %v1661 = vshrl.u32 %v1330, 16
      %v1663 = vrot.slane %v1661, 1
      %v1664 = vshll.u32 %v1330, 16
      %v1666 = vrot.slane %v1664, 2
      %v1667 = vor.u32 %v1663, %v1666
      %v1668 = vsel %vm1606, %v1658, %v1667
      %v1670 = vshrl.u32 %v1331, 16
      %v1672 = vrot.slane %v1670, 1
      %v1673 = vshll.u32 %v1331, 16
      %v1675 = vrot.slane %v1673, 2
      %v1676 = vor.u32 %v1672, %v1675
      %v1677 = vsel %vm1606, %v1667, %v1676
      %v1679 = vshrl.u32 %v1332, 16
      %v1681 = vrot.slane %v1679, 1
      %v1682 = vshll.u32 %v1332, 16
      %v1684 = vrot.slane %v1682, 2
      %v1685 = vor.u32 %v1681, %v1684
      %v1686 = vsel %vm1606, %v1676, %v1685
      %v1688 = vshrl.u32 %v1333, 16
      %v1690 = vrot.slane %v1688, 1
      %v1691 = vshll.u32 %v1333, 16
      %v1693 = vrot.slane %v1691, 2
      %v1694 = vor.u32 %v1690, %v1693
      %v1695 = vsel %vm1606, %v1685, %v1694
      %v1697 = vshrl.u32 %v1334, 16
      %v1699 = vrot.slane %v1697, 1
      %v1700 = vshll.u32 %v1334, 16
      %v1702 = vrot.slane %v1700, 2
      %v1703 = vor.u32 %v1699, %v1702
      %v1704 = vsel %vm1606, %v1694, %v1703
      %v1706 = vshrl.u32 %v1335, 16
      %v1708 = vrot.slane %v1706, 1
      %v1709 = vshll.u32 %v1335, 16
      %v1711 = vrot.slane %v1709, 2
      %v1712 = vor.u32 %v1708, %v1711
      %v1713 = vsel %vm1606, %v1703, %v1712
      %v1715 = vshrl.u32 %v1336, 16
      %v1717 = vrot.slane %v1715, 1
      %v1718 = vshll.u32 %v1336, 16
      %v1720 = vrot.slane %v1718, 2
      %v1721 = vor.u32 %v1717, %v1720
      %v1722 = vsel %vm1606, %v1712, %v1721
      %v1724 = vshrl.u32 %v1337, 16
      %v1726 = vrot.slane %v1724, 1
      %v1727 = vshll.u32 %v1337, 16
      %v1729 = vrot.slane %v1727, 2
      %v1730 = vor.u32 %v1726, %v1729
      %v1731 = vsel %vm1606, %v1721, %v1730
      %v1733 = vshrl.u32 %v1338, 16
      %v1735 = vrot.slane %v1733, 1
      %v1736 = vshll.u32 %v1338, 16
      %v1738 = vrot.slane %v1736, 2
      %v1739 = vor.u32 %v1735, %v1738
      %v1740 = vsel %vm1606, %v1730, %v1739
      %v1742 = vshrl.u32 %v1339, 16
      %v1744 = vrot.slane %v1742, 1
      %v1745 = vshll.u32 %v1339, 16
      %v1747 = vrot.slane %v1745, 2
      %v1748 = vor.u32 %v1744, %v1747
      %v1749 = vsel %vm1606, %v1739, %v1748
      %v1751 = vshrl.u32 %v1340, 16
      %v1753 = vrot.slane %v1751, 1
      %v1754 = vshll.u32 %v1340, 16
      %v1756 = vrot.slane %v1754, 2
      %v1757 = vor.u32 %v1753, %v1756
      %v1758 = vsel %vm1606, %v1748, %v1757
      %v1760 = vshrl.u32 %v1341, 16
      %v1762 = vrot.slane %v1760, 1
      %v1763 = vshll.u32 %v1341, 16
      %v1765 = vrot.slane %v1763, 2
      %v1766 = vor.u32 %v1762, %v1765
      %v1767 = vsel %vm1606, %v1757, %v1766
      %v1769 = vshrl.u32 %v1605, 16
      %v1771 = vrot.slane %v1769, 1
      %v1772 = vshll.u32 %v1605, 16
      %v1774 = vrot.slane %v1772, 2
      %v1775 = vor.u32 %v1771, %v1774
      %v1776 = vsel %vm1606, %v1766, %v1775
      %v1785 = vunpack.c.l.b16 %v1595
      %v1786 = vunpack.c.l.b16 %v1596
      %v1787 = vunpack.c.l.b16 %v1597
      %v1788 = vunpack.c.l.b16 %v1598
      %v1789 = vunpack.c.l.b16 %v1599
      %v1790 = vunpack.c.l.b16 %v1600
      %v1791 = vunpack.c.l.b16 %v1601
      %v1792 = vunpack.c.l.b16 %v1602
      %v1793 = vpack.c.b16 %v1786, %v1785
      %v1794 = vpack.c.b16 %v1788, %v1787
      %v1795 = vpack.c.b16 %v1790, %v1789
      %v1796 = vpack.c.b16 %v1792, %v1791
      %v1802 = vsel %vm627, %v1623, 0
      %v1805 = vsel %vm627, %v1632, 0
      %v1808 = vsel %vm627, %v1641, 0
      %v1811 = vsel %vm627, %v1650, 0
      %v1814 = vsel %vm627, %v1659, 0
      %v1817 = vsel %vm627, %v1668, 0
      %v1820 = vsel %vm627, %v1677, 0
      %v1823 = vsel %vm627, %v1686, 0
      %v1826 = vsel %vm627, %v1695, 0
      %v1829 = vsel %vm627, %v1704, 0
      %v1832 = vsel %vm627, %v1713, 0
      %v1835 = vsel %vm627, %v1722, 0
      %v1838 = vsel %vm627, %v1731, 0
      %v1841 = vsel %vm627, %v1740, 0
      %v1844 = vsel %vm627, %v1749, 0
      %v1847 = vsel %vm627, %v1758, 0
      %v1850 = vsel %vm627, %v1767, 0
      %v1853 = vsel %vm627, %v1776, 0
      %1855 = vmatpush.bf16.msra.mxu0 0
      %1856 = vmatpush.bf16.msra.mxu0 0
      %1857 = vmatpush.bf16.msra.mxu0 0
      %1858 = vmatpush.bf16.msra.mxu0 0
      %1859 = vmatpush.bf16.msra.mxu0 %v1796
      %1860 = vmatpush.bf16.msra.mxu0 %v1795
      %1861 = vmatpush.bf16.msra.mxu0 %v1794
      %1862 = vmatpush.bf16.msra.mxu0 %v1793
      %1863 = vmatmul.bf16.gmra.mxu0 %v1802
      %v1864 = vpop.f32.mrf.mxu0
      %v1865 = vadd.f32 0.0, %v1864
      %v1866 = vpop.f32.mrf.mxu0
      %v1867 = vadd.f32 0.0, %v1866
      %1868 = vmatmul.bf16.gmra.mxu0 %v1805
      %v1869 = vpop.f32.mrf.mxu0
      %v1870 = vadd.f32 0.0, %v1869
      %v1871 = vpop.f32.mrf.mxu0
      %v1872 = vadd.f32 0.0, %v1871
      %1873 = vmatmul.bf16.gmra.mxu0 %v1808
      %v1874 = vpop.f32.mrf.mxu0
      %v1875 = vadd.f32 0.0, %v1874
      %v1876 = vpop.f32.mrf.mxu0
      %v1877 = vadd.f32 0.0, %v1876
      %1878 = vmatmul.bf16.gmra.mxu0 %v1811
      %v1879 = vpop.f32.mrf.mxu0
      %v1880 = vadd.f32 0.0, %v1879
      %v1881 = vpop.f32.mrf.mxu0
      %v1882 = vadd.f32 0.0, %v1881
      %1883 = vmatmul.bf16.gmra.mxu0 %v1814
      %v1884 = vpop.f32.mrf.mxu0
      %v1885 = vadd.f32 0.0, %v1884
      %v1886 = vpop.f32.mrf.mxu0
      %v1887 = vadd.f32 0.0, %v1886
      %1888 = vmatmul.bf16.gmra.mxu0 %v1817
      %v1889 = vpop.f32.mrf.mxu0
      %v1890 = vadd.f32 0.0, %v1889
      %v1891 = vpop.f32.mrf.mxu0
      %v1892 = vadd.f32 0.0, %v1891
      %1893 = vmatmul.bf16.gmra.mxu0 %v1820
      %v1894 = vpop.f32.mrf.mxu0
      %v1895 = vadd.f32 0.0, %v1894
      %v1896 = vpop.f32.mrf.mxu0
      %v1897 = vadd.f32 0.0, %v1896
      %1898 = vmatmul.bf16.gmra.mxu0 %v1823
      %v1899 = vpop.f32.mrf.mxu0
      %v1900 = vadd.f32 0.0, %v1899
      %v1901 = vpop.f32.mrf.mxu0
      %v1902 = vadd.f32 0.0, %v1901
      %1903 = vmatmul.bf16.gmra.mxu0 %v1826
      %v1904 = vpop.f32.mrf.mxu0
      %v1905 = vadd.f32 0.0, %v1904
      %v1906 = vpop.f32.mrf.mxu0
      %v1907 = vadd.f32 0.0, %v1906
      %1908 = vmatmul.bf16.gmra.mxu0 %v1829
      %v1909 = vpop.f32.mrf.mxu0
      %v1910 = vadd.f32 0.0, %v1909
      %v1911 = vpop.f32.mrf.mxu0
      %v1912 = vadd.f32 0.0, %v1911
      %1913 = vmatmul.bf16.gmra.mxu0 %v1832
      %v1914 = vpop.f32.mrf.mxu0
      %v1915 = vadd.f32 0.0, %v1914
      %v1916 = vpop.f32.mrf.mxu0
      %v1917 = vadd.f32 0.0, %v1916
      %1918 = vmatmul.bf16.gmra.mxu0 %v1835
      %v1919 = vpop.f32.mrf.mxu0
      %v1920 = vadd.f32 0.0, %v1919
      %v1921 = vpop.f32.mrf.mxu0
      %v1922 = vadd.f32 0.0, %v1921
      %1923 = vmatmul.bf16.gmra.mxu0 %v1838
      %v1924 = vpop.f32.mrf.mxu0
      %v1925 = vadd.f32 0.0, %v1924
      %v1926 = vpop.f32.mrf.mxu0
      %v1927 = vadd.f32 0.0, %v1926
      %1928 = vmatmul.bf16.gmra.mxu0 %v1841
      %v1929 = vpop.f32.mrf.mxu0
      %v1930 = vadd.f32 0.0, %v1929
      %v1931 = vpop.f32.mrf.mxu0
      %v1932 = vadd.f32 0.0, %v1931
      %1933 = vmatmul.bf16.gmra.mxu0 %v1844
      %v1934 = vpop.f32.mrf.mxu0
      %v1935 = vadd.f32 0.0, %v1934
      %v1936 = vpop.f32.mrf.mxu0
      %v1937 = vadd.f32 0.0, %v1936
      %1938 = vmatmul.bf16.gmra.mxu0 %v1847
      %v1939 = vpop.f32.mrf.mxu0
      %v1940 = vadd.f32 0.0, %v1939
      %v1941 = vpop.f32.mrf.mxu0
      %v1942 = vadd.f32 0.0, %v1941
      %1943 = vmatmul.bf16.gmra.mxu0 %v1850
      %v1944 = vpop.f32.mrf.mxu0
      %v1945 = vadd.f32 0.0, %v1944
      %v1946 = vpop.f32.mrf.mxu0
      %v1947 = vadd.f32 0.0, %v1946
      %1948 = vmatmul.bf16.gmra.mxu0 %v1853
      %v1949 = vpop.f32.mrf.mxu0
      %v1950 = vadd.f32 0.0, %v1949
      %v1951 = vpop.f32.mrf.mxu0
      %v1952 = vadd.f32 0.0, %v1951
      %1953 = vdwg.mxu0
      %v1954 = vadd.f32 %v1557, %v1865
      %v1955 = vadd.f32 %v1558, %v1867
      %v1956 = vadd.f32 %v1559, %v1870
      %v1957 = vadd.f32 %v1560, %v1872
      %v1958 = vadd.f32 %v1561, %v1875
      %v1959 = vadd.f32 %v1562, %v1877
      %v1960 = vadd.f32 %v1563, %v1880
      %v1961 = vadd.f32 %v1564, %v1882
      %v1962 = vadd.f32 %v1565, %v1885
      %v1963 = vadd.f32 %v1566, %v1887
      %v1964 = vadd.f32 %v1567, %v1890
      %v1965 = vadd.f32 %v1568, %v1892
      %v1966 = vadd.f32 %v1569, %v1895
      %v1967 = vadd.f32 %v1570, %v1897
      %v1968 = vadd.f32 %v1571, %v1900
      %v1969 = vadd.f32 %v1572, %v1902
      %v1970 = vadd.f32 %v1573, %v1905
      %v1971 = vadd.f32 %v1574, %v1907
      %v1972 = vadd.f32 %v1575, %v1910
      %v1973 = vadd.f32 %v1576, %v1912
      %v1974 = vadd.f32 %v1577, %v1915
      %v1975 = vadd.f32 %v1578, %v1917
      %v1976 = vadd.f32 %v1579, %v1920
      %v1977 = vadd.f32 %v1580, %v1922
      %v1978 = vadd.f32 %v1581, %v1925
      %v1979 = vadd.f32 %v1582, %v1927
      %v1980 = vadd.f32 %v1583, %v1930
      %v1981 = vadd.f32 %v1584, %v1932
      %v1982 = vadd.f32 %v1585, %v1935
      %v1983 = vadd.f32 %v1586, %v1937
      %v1984 = vadd.f32 %v1587, %v1940
      %v1985 = vadd.f32 %v1588, %v1942
      %v1986 = vadd.f32 %v1589, %v1945
      %v1987 = vadd.f32 %v1590, %v1947
      %v1988 = vadd.f32 %v1591, %v1950
      %v1989 = vadd.f32 %v1592, %v1952
      %v1990 = vld [vmem:[%s300 + $0x8] sm:$0xc]
      %s1991 = scalar_lea.vmem %s2, 160
      %v1992 = vld [vmem:[%s1991] sm:$0xf]
      %v1993 = vld [vmem:[%s1991 + $0x4] sm:$0xf]
      %v1994 = vld [vmem:[%s1991 + $0x8] sm:$0xf]
      %v1995 = vld [vmem:[%s1991 + $0xc] sm:$0xf]
      %v1996 = vld [vmem:[%s1991 + $0x10] sm:$0xf]
      %v1997 = vld [vmem:[%s1991 + $0x14] sm:$0xf]
      %v1998 = vld [vmem:[%s1991 + $0x18] sm:$0xf]
      %v1999 = vld [vmem:[%s1991 + $0x1c] sm:$0xf]
      %v2001 = vunpack.c.l.b16 %v1990
      %v2002 = vpack.c.b16 %v1288, %v2001
      %vm2003 = vcmask 1045504
      %v2004 = vrot.slane %v2002, 2
      %v2005 = vrot.slane %v1325, 2
      %v2006 = vsel %vm2003, %v2004, %v2005
      %v2007 = vrot.slane %v1326, 2
      %v2008 = vsel %vm2003, %v2005, %v2007
      %v2009 = vrot.slane %v1327, 2
      %v2010 = vsel %vm2003, %v2007, %v2009
      %v2011 = vrot.slane %v1328, 2
      %v2012 = vsel %vm2003, %v2009, %v2011
      %v2013 = vrot.slane %v1329, 2
      %v2014 = vsel %vm2003, %v2011, %v2013
      %v2015 = vrot.slane %v1330, 2
      %v2016 = vsel %vm2003, %v2013, %v2015
      %v2017 = vrot.slane %v1331, 2
      %v2018 = vsel %vm2003, %v2015, %v2017
      %v2019 = vrot.slane %v1332, 2
      %v2020 = vsel %vm2003, %v2017, %v2019
      %v2021 = vrot.slane %v1333, 2
      %v2022 = vsel %vm2003, %v2019, %v2021
      %v2023 = vrot.slane %v1334, 2
      %v2024 = vsel %vm2003, %v2021, %v2023
      %v2025 = vrot.slane %v1335, 2
      %v2026 = vsel %vm2003, %v2023, %v2025
      %v2027 = vrot.slane %v1336, 2
      %v2028 = vsel %vm2003, %v2025, %v2027
      %v2029 = vrot.slane %v1337, 2
      %v2030 = vsel %vm2003, %v2027, %v2029
      %v2031 = vrot.slane %v1338, 2
      %v2032 = vsel %vm2003, %v2029, %v2031
      %v2033 = vrot.slane %v1339, 2
      %v2034 = vsel %vm2003, %v2031, %v2033
      %v2035 = vrot.slane %v1340, 2
      %v2036 = vsel %vm2003, %v2033, %v2035
      %v2037 = vrot.slane %v1341, 2
      %v2038 = vsel %vm2003, %v2035, %v2037
      %v2039 = vrot.slane %v1605, 2
      %v2040 = vsel %vm2003, %v2037, %v2039
      %v2049 = vunpack.c.l.b16 %v1992
      %v2050 = vunpack.c.l.b16 %v1993
      %v2051 = vunpack.c.l.b16 %v1994
      %v2052 = vunpack.c.l.b16 %v1995
      %v2053 = vunpack.c.l.b16 %v1996
      %v2054 = vunpack.c.l.b16 %v1997
      %v2055 = vunpack.c.l.b16 %v1998
      %v2056 = vunpack.c.l.b16 %v1999
      %v2057 = vpack.c.b16 %v2050, %v2049
      %v2058 = vpack.c.b16 %v2052, %v2051
      %v2059 = vpack.c.b16 %v2054, %v2053
      %v2060 = vpack.c.b16 %v2056, %v2055
      %v2066 = vsel %vm627, %v2006, 0
      %v2069 = vsel %vm627, %v2008, 0
      %v2072 = vsel %vm627, %v2010, 0
      %v2075 = vsel %vm627, %v2012, 0
      %v2078 = vsel %vm627, %v2014, 0
      %v2081 = vsel %vm627, %v2016, 0
      %v2084 = vsel %vm627, %v2018, 0
      %v2087 = vsel %vm627, %v2020, 0
      %v2090 = vsel %vm627, %v2022, 0
      %v2093 = vsel %vm627, %v2024, 0
      %v2096 = vsel %vm627, %v2026, 0
      %v2099 = vsel %vm627, %v2028, 0
      %v2102 = vsel %vm627, %v2030, 0
      %v2105 = vsel %vm627, %v2032, 0
      %v2108 = vsel %vm627, %v2034, 0
      %v2111 = vsel %vm627, %v2036, 0
      %v2114 = vsel %vm627, %v2038, 0
      %v2117 = vsel %vm627, %v2040, 0
      %2119 = vmatpush.bf16.msra.mxu0 0
      %2120 = vmatpush.bf16.msra.mxu0 0
      %2121 = vmatpush.bf16.msra.mxu0 0
      %2122 = vmatpush.bf16.msra.mxu0 0
      %2123 = vmatpush.bf16.msra.mxu0 %v2060
      %2124 = vmatpush.bf16.msra.mxu0 %v2059
      %2125 = vmatpush.bf16.msra.mxu0 %v2058
      %2126 = vmatpush.bf16.msra.mxu0 %v2057
      %2127 = vmatmul.bf16.gmra.mxu0 %v2066
      %v2128 = vpop.f32.mrf.mxu0
      %v2129 = vadd.f32 0.0, %v2128
      %v2130 = vpop.f32.mrf.mxu0
      %v2131 = vadd.f32 0.0, %v2130
      %2132 = vmatmul.bf16.gmra.mxu0 %v2069
      %v2133 = vpop.f32.mrf.mxu0
      %v2134 = vadd.f32 0.0, %v2133
      %v2135 = vpop.f32.mrf.mxu0
      %v2136 = vadd.f32 0.0, %v2135
      %2137 = vmatmul.bf16.gmra.mxu0 %v2072
      %v2138 = vpop.f32.mrf.mxu0
      %v2139 = vadd.f32 0.0, %v2138
      %v2140 = vpop.f32.mrf.mxu0
      %v2141 = vadd.f32 0.0, %v2140
      %2142 = vmatmul.bf16.gmra.mxu0 %v2075
      %v2143 = vpop.f32.mrf.mxu0
      %v2144 = vadd.f32 0.0, %v2143
      %v2145 = vpop.f32.mrf.mxu0
      %v2146 = vadd.f32 0.0, %v2145
      %2147 = vmatmul.bf16.gmra.mxu0 %v2078
      %v2148 = vpop.f32.mrf.mxu0
      %v2149 = vadd.f32 0.0, %v2148
      %v2150 = vpop.f32.mrf.mxu0
      %v2151 = vadd.f32 0.0, %v2150
      %2152 = vmatmul.bf16.gmra.mxu0 %v2081
      %v2153 = vpop.f32.mrf.mxu0
      %v2154 = vadd.f32 0.0, %v2153
      %v2155 = vpop.f32.mrf.mxu0
      %v2156 = vadd.f32 0.0, %v2155
      %2157 = vmatmul.bf16.gmra.mxu0 %v2084
      %v2158 = vpop.f32.mrf.mxu0
      %v2159 = vadd.f32 0.0, %v2158
      %v2160 = vpop.f32.mrf.mxu0
      %v2161 = vadd.f32 0.0, %v2160
      %2162 = vmatmul.bf16.gmra.mxu0 %v2087
      %v2163 = vpop.f32.mrf.mxu0
      %v2164 = vadd.f32 0.0, %v2163
      %v2165 = vpop.f32.mrf.mxu0
      %v2166 = vadd.f32 0.0, %v2165
      %2167 = vmatmul.bf16.gmra.mxu0 %v2090
      %v2168 = vpop.f32.mrf.mxu0
      %v2169 = vadd.f32 0.0, %v2168
      %v2170 = vpop.f32.mrf.mxu0
      %v2171 = vadd.f32 0.0, %v2170
      %2172 = vmatmul.bf16.gmra.mxu0 %v2093
      %v2173 = vpop.f32.mrf.mxu0
      %v2174 = vadd.f32 0.0, %v2173
      %v2175 = vpop.f32.mrf.mxu0
      %v2176 = vadd.f32 0.0, %v2175
      %2177 = vmatmul.bf16.gmra.mxu0 %v2096
      %v2178 = vpop.f32.mrf.mxu0
      %v2179 = vadd.f32 0.0, %v2178
      %v2180 = vpop.f32.mrf.mxu0
      %v2181 = vadd.f32 0.0, %v2180
      %2182 = vmatmul.bf16.gmra.mxu0 %v2099
      %v2183 = vpop.f32.mrf.mxu0
      %v2184 = vadd.f32 0.0, %v2183
      %v2185 = vpop.f32.mrf.mxu0
      %v2186 = vadd.f32 0.0, %v2185
      %2187 = vmatmul.bf16.gmra.mxu0 %v2102
      %v2188 = vpop.f32.mrf.mxu0
      %v2189 = vadd.f32 0.0, %v2188
      %v2190 = vpop.f32.mrf.mxu0
      %v2191 = vadd.f32 0.0, %v2190
      %2192 = vmatmul.bf16.gmra.mxu0 %v2105
      %v2193 = vpop.f32.mrf.mxu0
      %v2194 = vadd.f32 0.0, %v2193
      %v2195 = vpop.f32.mrf.mxu0
      %v2196 = vadd.f32 0.0, %v2195
      %2197 = vmatmul.bf16.gmra.mxu0 %v2108
      %v2198 = vpop.f32.mrf.mxu0
      %v2199 = vadd.f32 0.0, %v2198
      %v2200 = vpop.f32.mrf.mxu0
      %v2201 = vadd.f32 0.0, %v2200
      %2202 = vmatmul.bf16.gmra.mxu0 %v2111
      %v2203 = vpop.f32.mrf.mxu0
      %v2204 = vadd.f32 0.0, %v2203
      %v2205 = vpop.f32.mrf.mxu0
      %v2206 = vadd.f32 0.0, %v2205
      %2207 = vmatmul.bf16.gmra.mxu0 %v2114
      %v2208 = vpop.f32.mrf.mxu0
      %v2209 = vadd.f32 0.0, %v2208
      %v2210 = vpop.f32.mrf.mxu0
      %v2211 = vadd.f32 0.0, %v2210
      %2212 = vmatmul.bf16.gmra.mxu0 %v2117
      %v2213 = vpop.f32.mrf.mxu0
      %v2214 = vadd.f32 0.0, %v2213
      %v2215 = vpop.f32.mrf.mxu0
      %v2216 = vadd.f32 0.0, %v2215
      %2217 = vdwg.mxu0
      %v2218 = vadd.f32 %v1954, %v2129
      %v2219 = vadd.f32 %v1955, %v2131
      %v2220 = vadd.f32 %v1956, %v2134
      %v2221 = vadd.f32 %v1957, %v2136
      %v2222 = vadd.f32 %v1958, %v2139
      %v2223 = vadd.f32 %v1959, %v2141
      %v2224 = vadd.f32 %v1960, %v2144
      %v2225 = vadd.f32 %v1961, %v2146
      %v2226 = vadd.f32 %v1962, %v2149
      %v2227 = vadd.f32 %v1963, %v2151
      %v2228 = vadd.f32 %v1964, %v2154
      %v2229 = vadd.f32 %v1965, %v2156
      %v2230 = vadd.f32 %v1966, %v2159
      %v2231 = vadd.f32 %v1967, %v2161
      %v2232 = vadd.f32 %v1968, %v2164
      %v2233 = vadd.f32 %v1969, %v2166
      %v2234 = vadd.f32 %v1970, %v2169
      %v2235 = vadd.f32 %v1971, %v2171
      %v2236 = vadd.f32 %v1972, %v2174
      %v2237 = vadd.f32 %v1973, %v2176
      %v2238 = vadd.f32 %v1974, %v2179
      %v2239 = vadd.f32 %v1975, %v2181
      %v2240 = vadd.f32 %v1976, %v2184
      %v2241 = vadd.f32 %v1977, %v2186
      %v2242 = vadd.f32 %v1978, %v2189
      %v2243 = vadd.f32 %v1979, %v2191
      %v2244 = vadd.f32 %v1980, %v2194
      %v2245 = vadd.f32 %v1981, %v2196
      %v2246 = vadd.f32 %v1982, %v2199
      %v2247 = vadd.f32 %v1983, %v2201
      %v2248 = vadd.f32 %v1984, %v2204
      %v2249 = vadd.f32 %v1985, %v2206
      %v2250 = vadd.f32 %v1986, %v2209
      %v2251 = vadd.f32 %v1987, %v2211
      %v2252 = vadd.f32 %v1988, %v2214
      %v2253 = vadd.f32 %v1989, %v2216
      %v2254 = vld [vmem:[%s300 + $0x10] sm:$0xc]
      %v2255 = vld [vmem:[%s300 + $0x14] sm:$0xf]
      %v2256 = vld [vmem:[%s300 + $0x18] sm:$0xf]
      %v2257 = vld [vmem:[%s300 + $0x1c] sm:$0xf]
      %v2258 = vld [vmem:[%s300 + $0x20] sm:$0xf]
      %v2259 = vld [vmem:[%s300 + $0x24] sm:$0xf]
      %v2260 = vld [vmem:[%s300 + $0x28] sm:$0xf]
      %v2261 = vld [vmem:[%s300 + $0x2c] sm:$0xf]
      %v2262 = vld [vmem:[%s300 + $0x30] sm:$0xf]
      %v2263 = vld [vmem:[%s300 + $0x34] sm:$0xf]
      %v2264 = vld [vmem:[%s300 + $0x38] sm:$0xf]
      %v2265 = vld [vmem:[%s300 + $0x3c] sm:$0xf]
      %v2266 = vld [vmem:[%s300 + $0x40] sm:$0xf]
      %v2267 = vld [vmem:[%s300 + $0x44] sm:$0xf]
      %v2268 = vld [vmem:[%s300 + $0x48] sm:$0xf]
      %v2269 = vld [vmem:[%s300 + $0x4c] sm:$0xf]
      %v2270 = vld [vmem:[%s300 + $0x50] sm:$0xf]
      %v2271 = vld [vmem:[%s300 + $0x54] sm:$0xf]
      %v2272 = vld [vmem:[%s300 + $0x58] sm:$0xf]
      %v2273 = vld [vmem:[%s300 + $0x5c] sm:$0xf]
      %v2274 = vld [vmem:[%s300 + $0x60] sm:$0xf]
      %v2275 = vld [vmem:[%s300 + $0x64] sm:$0xf]
      %v2276 = vld [vmem:[%s300 + $0x68] sm:$0xf]
      %v2277 = vld [vmem:[%s300 + $0x6c] sm:$0xf]
      %v2278 = vld [vmem:[%s300 + $0x70] sm:$0xf]
      %v2279 = vld [vmem:[%s300 + $0x74] sm:$0xf]
      %v2280 = vld [vmem:[%s300 + $0x78] sm:$0xf]
      %v2281 = vld [vmem:[%s300 + $0x7c] sm:$0xf]
      %v2282 = vld [vmem:[%s300 + $0x80] sm:$0xf]
      %v2283 = vld [vmem:[%s300 + $0x84] sm:$0xf]
      %v2284 = vld [vmem:[%s300 + $0x88] sm:$0xf]
      %v2285 = vld [vmem:[%s300 + $0x8c] sm:$0xf]
      %v2286 = vld [vmem:[%s300 + $0x90] sm:$0xf]
      %v2287 = vld [vmem:[%s300 + $0x94] sm:$0xf]
      %v2288 = vld [vmem:[%s300 + $0x98] sm:$0xf]
      %v2289 = vld [vmem:[%s300 + $0x9c] sm:$0xf]
      %v2290 = vld [vmem:[%s300 + $0xa0] sm:$0x3]
      %s2291 = scalar_lea.vmem %s2, 192
      %v2292 = vld [vmem:[%s2291] sm:$0xf]
      %v2293 = vld [vmem:[%s2291 + $0x4] sm:$0xf]
      %v2294 = vld [vmem:[%s2291 + $0x8] sm:$0xf]
      %v2295 = vld [vmem:[%s2291 + $0xc] sm:$0xf]
      %v2296 = vld [vmem:[%s2291 + $0x10] sm:$0xf]
      %v2297 = vld [vmem:[%s2291 + $0x14] sm:$0xf]
      %v2298 = vld [vmem:[%s2291 + $0x18] sm:$0xf]
      %v2299 = vld [vmem:[%s2291 + $0x1c] sm:$0xf]
      %v2337 = vunpack.c.l.b16 %v2254
      %v2338 = vunpack.c.l.b16 %v2255
      %v2339 = vunpack.c.l.b16 %v2256
      %v2340 = vunpack.c.l.b16 %v2257
      %v2341 = vunpack.c.l.b16 %v2258
      %v2342 = vunpack.c.l.b16 %v2259
      %v2343 = vunpack.c.l.b16 %v2260
      %v2344 = vunpack.c.l.b16 %v2261
      %v2345 = vunpack.c.l.b16 %v2262
      %v2346 = vunpack.c.l.b16 %v2263
      %v2347 = vunpack.c.l.b16 %v2264
      %v2348 = vunpack.c.l.b16 %v2265
      %v2349 = vunpack.c.l.b16 %v2266
      %v2350 = vunpack.c.l.b16 %v2267
      %v2351 = vunpack.c.l.b16 %v2268
      %v2352 = vunpack.c.l.b16 %v2269
      %v2353 = vunpack.c.l.b16 %v2270
      %v2354 = vunpack.c.l.b16 %v2271
      %v2355 = vunpack.c.l.b16 %v2272
      %v2356 = vunpack.c.l.b16 %v2273
      %v2357 = vunpack.c.l.b16 %v2274
      %v2358 = vunpack.c.l.b16 %v2275
      %v2359 = vunpack.c.l.b16 %v2276
      %v2360 = vunpack.c.l.b16 %v2277
      %v2361 = vunpack.c.l.b16 %v2278
      %v2362 = vunpack.c.l.b16 %v2279
      %v2363 = vunpack.c.l.b16 %v2280
      %v2364 = vunpack.c.l.b16 %v2281
      %v2365 = vunpack.c.l.b16 %v2282
      %v2366 = vunpack.c.l.b16 %v2283
      %v2367 = vunpack.c.l.b16 %v2284
      %v2368 = vunpack.c.l.b16 %v2285
      %v2369 = vunpack.c.l.b16 %v2286
      %v2370 = vunpack.c.l.b16 %v2287
      %v2371 = vunpack.c.l.b16 %v2288
      %v2372 = vunpack.c.l.b16 %v2289
      %v2373 = vunpack.c.l.b16 %v2290
      %v2374 = vpack.c.b16 %v2338, %v2337
      %v2375 = vpack.c.b16 %v2340, %v2339
      %v2376 = vpack.c.b16 %v2342, %v2341
      %v2377 = vpack.c.b16 %v2344, %v2343
      %v2378 = vpack.c.b16 %v2346, %v2345
      %v2379 = vpack.c.b16 %v2348, %v2347
      %v2380 = vpack.c.b16 %v2350, %v2349
      %v2381 = vpack.c.b16 %v2352, %v2351
      %v2382 = vpack.c.b16 %v2354, %v2353
      %v2383 = vpack.c.b16 %v2356, %v2355
      %v2384 = vpack.c.b16 %v2358, %v2357
      %v2385 = vpack.c.b16 %v2360, %v2359
      %v2386 = vpack.c.b16 %v2362, %v2361
      %v2387 = vpack.c.b16 %v2364, %v2363
      %v2388 = vpack.c.b16 %v2366, %v2365
      %v2389 = vpack.c.b16 %v2368, %v2367
      %v2390 = vpack.c.b16 %v2370, %v2369
      %v2391 = vpack.c.b16 %v2372, %v2371
      %v2392 = vpack.c.b16 %v2373, %v2373
      %v2393 = vrot.slane %v2374, 2
      %v2394 = vrot.slane %v2375, 2
      %v2395 = vsel %vm2003, %v2393, %v2394
      %v2396 = vrot.slane %v2376, 2
      %v2397 = vsel %vm2003, %v2394, %v2396
      %v2398 = vrot.slane %v2377, 2
      %v2399 = vsel %vm2003, %v2396, %v2398
      %v2400 = vrot.slane %v2378, 2
      %v2401 = vsel %vm2003, %v2398, %v2400
      %v2402 = vrot.slane %v2379, 2
      %v2403 = vsel %vm2003, %v2400, %v2402
      %v2404 = vrot.slane %v2380, 2
      %v2405 = vsel %vm2003, %v2402, %v2404
      %v2406 = vrot.slane %v2381, 2
      %v2407 = vsel %vm2003, %v2404, %v2406
      %v2408 = vrot.slane %v2382, 2
      %v2409 = vsel %vm2003, %v2406, %v2408
      %v2410 = vrot.slane %v2383, 2
      %v2411 = vsel %vm2003, %v2408, %v2410
      %v2412 = vrot.slane %v2384, 2
      %v2413 = vsel %vm2003, %v2410, %v2412
      %v2414 = vrot.slane %v2385, 2
      %v2415 = vsel %vm2003, %v2412, %v2414
      %v2416 = vrot.slane %v2386, 2
      %v2417 = vsel %vm2003, %v2414, %v2416
      %v2418 = vrot.slane %v2387, 2
      %v2419 = vsel %vm2003, %v2416, %v2418
      %v2420 = vrot.slane %v2388, 2
      %v2421 = vsel %vm2003, %v2418, %v2420
      %v2422 = vrot.slane %v2389, 2
      %v2423 = vsel %vm2003, %v2420, %v2422
      %v2424 = vrot.slane %v2390, 2
      %v2425 = vsel %vm2003, %v2422, %v2424
      %v2426 = vrot.slane %v2391, 2
      %v2427 = vsel %vm2003, %v2424, %v2426
      %v2428 = vrot.slane %v2392, 2
      %v2429 = vsel %vm2003, %v2426, %v2428
      %v2438 = vunpack.c.l.b16 %v2292
      %v2439 = vunpack.c.l.b16 %v2293
      %v2440 = vunpack.c.l.b16 %v2294
      %v2441 = vunpack.c.l.b16 %v2295
      %v2442 = vunpack.c.l.b16 %v2296
      %v2443 = vunpack.c.l.b16 %v2297
      %v2444 = vunpack.c.l.b16 %v2298
      %v2445 = vunpack.c.l.b16 %v2299
      %v2446 = vpack.c.b16 %v2439, %v2438
      %v2447 = vpack.c.b16 %v2441, %v2440
      %v2448 = vpack.c.b16 %v2443, %v2442
      %v2449 = vpack.c.b16 %v2445, %v2444
      %v2455 = vsel %vm627, %v2395, 0
      %v2458 = vsel %vm627, %v2397, 0
      %v2461 = vsel %vm627, %v2399, 0
      %v2464 = vsel %vm627, %v2401, 0
      %v2467 = vsel %vm627, %v2403, 0
      %v2470 = vsel %vm627, %v2405, 0
      %v2473 = vsel %vm627, %v2407, 0
      %v2476 = vsel %vm627, %v2409, 0
      %v2479 = vsel %vm627, %v2411, 0
      %v2482 = vsel %vm627, %v2413, 0
      %v2485 = vsel %vm627, %v2415, 0
      %v2488 = vsel %vm627, %v2417, 0
      %v2491 = vsel %vm627, %v2419, 0
      %v2494 = vsel %vm627, %v2421, 0
      %v2497 = vsel %vm627, %v2423, 0
      %v2500 = vsel %vm627, %v2425, 0
      %v2503 = vsel %vm627, %v2427, 0
      %v2506 = vsel %vm627, %v2429, 0
      %2508 = vmatpush.bf16.msra.mxu0 0
      %2509 = vmatpush.bf16.msra.mxu0 0
      %2510 = vmatpush.bf16.msra.mxu0 0
      %2511 = vmatpush.bf16.msra.mxu0 0
      %2512 = vmatpush.bf16.msra.mxu0 %v2449
      %2513 = vmatpush.bf16.msra.mxu0 %v2448
      %2514 = vmatpush.bf16.msra.mxu0 %v2447
      %2515 = vmatpush.bf16.msra.mxu0 %v2446
      %2516 = vmatmul.bf16.gmra.mxu0 %v2455
      %v2517 = vpop.f32.mrf.mxu0
      %v2518 = vadd.f32 0.0, %v2517
      %v2519 = vpop.f32.mrf.mxu0
      %v2520 = vadd.f32 0.0, %v2519
      %2521 = vmatmul.bf16.gmra.mxu0 %v2458
      %v2522 = vpop.f32.mrf.mxu0
      %v2523 = vadd.f32 0.0, %v2522
      %v2524 = vpop.f32.mrf.mxu0
      %v2525 = vadd.f32 0.0, %v2524
      %2526 = vmatmul.bf16.gmra.mxu0 %v2461
      %v2527 = vpop.f32.mrf.mxu0
      %v2528 = vadd.f32 0.0, %v2527
      %v2529 = vpop.f32.mrf.mxu0
      %v2530 = vadd.f32 0.0, %v2529
      %2531 = vmatmul.bf16.gmra.mxu0 %v2464
      %v2532 = vpop.f32.mrf.mxu0
      %v2533 = vadd.f32 0.0, %v2532
      %v2534 = vpop.f32.mrf.mxu0
      %v2535 = vadd.f32 0.0, %v2534
      %2536 = vmatmul.bf16.gmra.mxu0 %v2467
      %v2537 = vpop.f32.mrf.mxu0
      %v2538 = vadd.f32 0.0, %v2537
      %v2539 = vpop.f32.mrf.mxu0
      %v2540 = vadd.f32 0.0, %v2539
      %2541 = vmatmul.bf16.gmra.mxu0 %v2470
      %v2542 = vpop.f32.mrf.mxu0
      %v2543 = vadd.f32 0.0, %v2542
      %v2544 = vpop.f32.mrf.mxu0
      %v2545 = vadd.f32 0.0, %v2544
      %2546 = vmatmul.bf16.gmra.mxu0 %v2473
      %v2547 = vpop.f32.mrf.mxu0
      %v2548 = vadd.f32 0.0, %v2547
      %v2549 = vpop.f32.mrf.mxu0
      %v2550 = vadd.f32 0.0, %v2549
      %2551 = vmatmul.bf16.gmra.mxu0 %v2476
      %v2552 = vpop.f32.mrf.mxu0
      %v2553 = vadd.f32 0.0, %v2552
      %v2554 = vpop.f32.mrf.mxu0
      %v2555 = vadd.f32 0.0, %v2554
      %2556 = vmatmul.bf16.gmra.mxu0 %v2479
      %v2557 = vpop.f32.mrf.mxu0
      %v2558 = vadd.f32 0.0, %v2557
      %v2559 = vpop.f32.mrf.mxu0
      %v2560 = vadd.f32 0.0, %v2559
      %2561 = vmatmul.bf16.gmra.mxu0 %v2482
      %v2562 = vpop.f32.mrf.mxu0
      %v2563 = vadd.f32 0.0, %v2562
      %v2564 = vpop.f32.mrf.mxu0
      %v2565 = vadd.f32 0.0, %v2564
      %2566 = vmatmul.bf16.gmra.mxu0 %v2485
      %v2567 = vpop.f32.mrf.mxu0
      %v2568 = vadd.f32 0.0, %v2567
      %v2569 = vpop.f32.mrf.mxu0
      %v2570 = vadd.f32 0.0, %v2569
      %2571 = vmatmul.bf16.gmra.mxu0 %v2488
      %v2572 = vpop.f32.mrf.mxu0
      %v2573 = vadd.f32 0.0, %v2572
      %v2574 = vpop.f32.mrf.mxu0
      %v2575 = vadd.f32 0.0, %v2574
      %2576 = vmatmul.bf16.gmra.mxu0 %v2491
      %v2577 = vpop.f32.mrf.mxu0
      %v2578 = vadd.f32 0.0, %v2577
      %v2579 = vpop.f32.mrf.mxu0
      %v2580 = vadd.f32 0.0, %v2579
      %2581 = vmatmul.bf16.gmra.mxu0 %v2494
      %v2582 = vpop.f32.mrf.mxu0
      %v2583 = vadd.f32 0.0, %v2582
      %v2584 = vpop.f32.mrf.mxu0
      %v2585 = vadd.f32 0.0, %v2584
      %2586 = vmatmul.bf16.gmra.mxu0 %v2497
      %v2587 = vpop.f32.mrf.mxu0
      %v2588 = vadd.f32 0.0, %v2587
      %v2589 = vpop.f32.mrf.mxu0
      %v2590 = vadd.f32 0.0, %v2589
      %2591 = vmatmul.bf16.gmra.mxu0 %v2500
      %v2592 = vpop.f32.mrf.mxu0
      %v2593 = vadd.f32 0.0, %v2592
      %v2594 = vpop.f32.mrf.mxu0
      %v2595 = vadd.f32 0.0, %v2594
      %2596 = vmatmul.bf16.gmra.mxu0 %v2503
      %v2597 = vpop.f32.mrf.mxu0
      %v2598 = vadd.f32 0.0, %v2597
      %v2599 = vpop.f32.mrf.mxu0
      %v2600 = vadd.f32 0.0, %v2599
      %2601 = vmatmul.bf16.gmra.mxu0 %v2506
      %v2602 = vpop.f32.mrf.mxu0
      %v2603 = vadd.f32 0.0, %v2602
      %v2604 = vpop.f32.mrf.mxu0
      %v2605 = vadd.f32 0.0, %v2604
      %2606 = vdwg.mxu0
      %v2607 = vadd.f32 %v2218, %v2518
      %v2608 = vadd.f32 %v2219, %v2520
      %v2609 = vadd.f32 %v2220, %v2523
      %v2610 = vadd.f32 %v2221, %v2525
      %v2611 = vadd.f32 %v2222, %v2528
      %v2612 = vadd.f32 %v2223, %v2530
      %v2613 = vadd.f32 %v2224, %v2533
      %v2614 = vadd.f32 %v2225, %v2535
      %v2615 = vadd.f32 %v2226, %v2538
      %v2616 = vadd.f32 %v2227, %v2540
      %v2617 = vadd.f32 %v2228, %v2543
      %v2618 = vadd.f32 %v2229, %v2545
      %v2619 = vadd.f32 %v2230, %v2548
      %v2620 = vadd.f32 %v2231, %v2550
      %v2621 = vadd.f32 %v2232, %v2553
      %v2622 = vadd.f32 %v2233, %v2555
      %v2623 = vadd.f32 %v2234, %v2558
      %v2624 = vadd.f32 %v2235, %v2560
      %v2625 = vadd.f32 %v2236, %v2563
      %v2626 = vadd.f32 %v2237, %v2565
      %v2627 = vadd.f32 %v2238, %v2568
      %v2628 = vadd.f32 %v2239, %v2570
      %v2629 = vadd.f32 %v2240, %v2573
      %v2630 = vadd.f32 %v2241, %v2575
      %v2631 = vadd.f32 %v2242, %v2578
      %v2632 = vadd.f32 %v2243, %v2580
      %v2633 = vadd.f32 %v2244, %v2583
      %v2634 = vadd.f32 %v2245, %v2585
      %v2635 = vadd.f32 %v2246, %v2588
      %v2636 = vadd.f32 %v2247, %v2590
      %v2637 = vadd.f32 %v2248, %v2593
      %v2638 = vadd.f32 %v2249, %v2595
      %v2639 = vadd.f32 %v2250, %v2598
      %v2640 = vadd.f32 %v2251, %v2600
      %v2641 = vadd.f32 %v2252, %v2603
      %v2642 = vadd.f32 %v2253, %v2605
      %v2643 = vld [vmem:[%s300 + $0xa0] sm:$0x7]
      %s2644 = scalar_lea.vmem %s2, 224
      %v2645 = vld [vmem:[%s2644] sm:$0xf]
      %v2646 = vld [vmem:[%s2644 + $0x4] sm:$0xf]
      %v2647 = vld [vmem:[%s2644 + $0x8] sm:$0xf]
      %v2648 = vld [vmem:[%s2644 + $0xc] sm:$0xf]
      %v2649 = vld [vmem:[%s2644 + $0x10] sm:$0xf]
      %v2650 = vld [vmem:[%s2644 + $0x14] sm:$0xf]
      %v2651 = vld [vmem:[%s2644 + $0x18] sm:$0xf]
      %v2652 = vld [vmem:[%s2644 + $0x1c] sm:$0xf]
      %v2654 = vunpack.c.l.b16 %v2643
      %v2655 = vpack.c.b16 %v2654, %v2654
      %vm2656 = vsmask.f32 5376
      %v2658 = vshrl.u32 %v2374, 16
      %v2660 = vrot.slane %v2658, 2
      %v2661 = vshll.u32 %v2374, 16
      %v2663 = vrot.slane %v2661, 3
      %v2664 = vor.u32 %v2660, %v2663
      %v2666 = vshrl.u32 %v2375, 16
      %v2668 = vrot.slane %v2666, 2
      %v2669 = vshll.u32 %v2375, 16
      %v2671 = vrot.slane %v2669, 3
      %v2672 = vor.u32 %v2668, %v2671
      %v2673 = vsel %vm2656, %v2664, %v2672
      %v2675 = vshrl.u32 %v2376, 16
      %v2677 = vrot.slane %v2675, 2
      %v2678 = vshll.u32 %v2376, 16
      %v2680 = vrot.slane %v2678, 3
      %v2681 = vor.u32 %v2677, %v2680
      %v2682 = vsel %vm2656, %v2672, %v2681
      %v2684 = vshrl.u32 %v2377, 16
      %v2686 = vrot.slane %v2684, 2
      %v2687 = vshll.u32 %v2377, 16
      %v2689 = vrot.slane %v2687, 3
      %v2690 = vor.u32 %v2686, %v2689
      %v2691 = vsel %vm2656, %v2681, %v2690
      %v2693 = vshrl.u32 %v2378, 16
      %v2695 = vrot.slane %v2693, 2
      %v2696 = vshll.u32 %v2378, 16
      %v2698 = vrot.slane %v2696, 3
      %v2699 = vor.u32 %v2695, %v2698
      %v2700 = vsel %vm2656, %v2690, %v2699
      %v2702 = vshrl.u32 %v2379, 16
      %v2704 = vrot.slane %v2702, 2
      %v2705 = vshll.u32 %v2379, 16
      %v2707 = vrot.slane %v2705, 3
      %v2708 = vor.u32 %v2704, %v2707
      %v2709 = vsel %vm2656, %v2699, %v2708
      %v2711 = vshrl.u32 %v2380, 16
      %v2713 = vrot.slane %v2711, 2
      %v2714 = vshll.u32 %v2380, 16
      %v2716 = vrot.slane %v2714, 3
      %v2717 = vor.u32 %v2713, %v2716
      %v2718 = vsel %vm2656, %v2708, %v2717
      %v2720 = vshrl.u32 %v2381, 16
      %v2722 = vrot.slane %v2720, 2
      %v2723 = vshll.u32 %v2381, 16
      %v2725 = vrot.slane %v2723, 3
      %v2726 = vor.u32 %v2722, %v2725
      %v2727 = vsel %vm2656, %v2717, %v2726
      %v2729 = vshrl.u32 %v2382, 16
      %v2731 = vrot.slane %v2729, 2
      %v2732 = vshll.u32 %v2382, 16
      %v2734 = vrot.slane %v2732, 3
      %v2735 = vor.u32 %v2731, %v2734
      %v2736 = vsel %vm2656, %v2726, %v2735
      %v2738 = vshrl.u32 %v2383, 16
      %v2740 = vrot.slane %v2738, 2
      %v2741 = vshll.u32 %v2383, 16
      %v2743 = vrot.slane %v2741, 3
      %v2744 = vor.u32 %v2740, %v2743
      %v2745 = vsel %vm2656, %v2735, %v2744
      %v2747 = vshrl.u32 %v2384, 16
      %v2749 = vrot.slane %v2747, 2
      %v2750 = vshll.u32 %v2384, 16
      %v2752 = vrot.slane %v2750, 3
      %v2753 = vor.u32 %v2749, %v2752
      %v2754 = vsel %vm2656, %v2744, %v2753
      %v2756 = vshrl.u32 %v2385, 16
      %v2758 = vrot.slane %v2756, 2
      %v2759 = vshll.u32 %v2385, 16
      %v2761 = vrot.slane %v2759, 3
      %v2762 = vor.u32 %v2758, %v2761
      %v2763 = vsel %vm2656, %v2753, %v2762
      %v2765 = vshrl.u32 %v2386, 16
      %v2767 = vrot.slane %v2765, 2
      %v2768 = vshll.u32 %v2386, 16
      %v2770 = vrot.slane %v2768, 3
      %v2771 = vor.u32 %v2767, %v2770
      %v2772 = vsel %vm2656, %v2762, %v2771
      %v2774 = vshrl.u32 %v2387, 16
      %v2776 = vrot.slane %v2774, 2
      %v2777 = vshll.u32 %v2387, 16
      %v2779 = vrot.slane %v2777, 3
      %v2780 = vor.u32 %v2776, %v2779
      %v2781 = vsel %vm2656, %v2771, %v2780
      %v2783 = vshrl.u32 %v2388, 16
      %v2785 = vrot.slane %v2783, 2
      %v2786 = vshll.u32 %v2388, 16
      %v2788 = vrot.slane %v2786, 3
      %v2789 = vor.u32 %v2785, %v2788
      %v2790 = vsel %vm2656, %v2780, %v2789
      %v2792 = vshrl.u32 %v2389, 16
      %v2794 = vrot.slane %v2792, 2
      %v2795 = vshll.u32 %v2389, 16
      %v2797 = vrot.slane %v2795, 3
      %v2798 = vor.u32 %v2794, %v2797
      %v2799 = vsel %vm2656, %v2789, %v2798
      %v2801 = vshrl.u32 %v2390, 16
      %v2803 = vrot.slane %v2801, 2
      %v2804 = vshll.u32 %v2390, 16
      %v2806 = vrot.slane %v2804, 3
      %v2807 = vor.u32 %v2803, %v2806
      %v2808 = vsel %vm2656, %v2798, %v2807
      %v2810 = vshrl.u32 %v2391, 16
      %v2812 = vrot.slane %v2810, 2
      %v2813 = vshll.u32 %v2391, 16
      %v2815 = vrot.slane %v2813, 3
      %v2816 = vor.u32 %v2812, %v2815
      %v2817 = vsel %vm2656, %v2807, %v2816
      %v2819 = vshrl.u32 %v2655, 16
      %v2821 = vrot.slane %v2819, 2
      %v2822 = vshll.u32 %v2655, 16
      %v2824 = vrot.slane %v2822, 3
      %v2825 = vor.u32 %v2821, %v2824
      %v2826 = vsel %vm2656, %v2816, %v2825
      %v2835 = vunpack.c.l.b16 %v2645
      %v2836 = vunpack.c.l.b16 %v2646
      %v2837 = vunpack.c.l.b16 %v2647
      %v2838 = vunpack.c.l.b16 %v2648
      %v2839 = vunpack.c.l.b16 %v2649
      %v2840 = vunpack.c.l.b16 %v2650
      %v2841 = vunpack.c.l.b16 %v2651
      %v2842 = vunpack.c.l.b16 %v2652
      %v2843 = vpack.c.b16 %v2836, %v2835
      %v2844 = vpack.c.b16 %v2838, %v2837
      %v2845 = vpack.c.b16 %v2840, %v2839
      %v2846 = vpack.c.b16 %v2842, %v2841
      %v2852 = vsel %vm627, %v2673, 0
      %v2855 = vsel %vm627, %v2682, 0
      %v2858 = vsel %vm627, %v2691, 0
      %v2861 = vsel %vm627, %v2700, 0
      %v2864 = vsel %vm627, %v2709, 0
      %v2867 = vsel %vm627, %v2718, 0
      %v2870 = vsel %vm627, %v2727, 0
      %v2873 = vsel %vm627, %v2736, 0
      %v2876 = vsel %vm627, %v2745, 0
      %v2879 = vsel %vm627, %v2754, 0
      %v2882 = vsel %vm627, %v2763, 0
      %v2885 = vsel %vm627, %v2772, 0
      %v2888 = vsel %vm627, %v2781, 0
      %v2891 = vsel %vm627, %v2790, 0
      %v2894 = vsel %vm627, %v2799, 0
      %v2897 = vsel %vm627, %v2808, 0
      %v2900 = vsel %vm627, %v2817, 0
      %v2903 = vsel %vm627, %v2826, 0
      %2905 = vmatpush.bf16.msra.mxu0 0
      %2906 = vmatpush.bf16.msra.mxu0 0
      %2907 = vmatpush.bf16.msra.mxu0 0
      %2908 = vmatpush.bf16.msra.mxu0 0
      %2909 = vmatpush.bf16.msra.mxu0 %v2846
      %2910 = vmatpush.bf16.msra.mxu0 %v2845
      %2911 = vmatpush.bf16.msra.mxu0 %v2844
      %2912 = vmatpush.bf16.msra.mxu0 %v2843
      %2913 = vmatmul.bf16.gmra.mxu0 %v2852
      %v2914 = vpop.f32.mrf.mxu0
      %v2915 = vadd.f32 0.0, %v2914
      %v2916 = vpop.f32.mrf.mxu0
      %v2917 = vadd.f32 0.0, %v2916
      %2918 = vmatmul.bf16.gmra.mxu0 %v2855
      %v2919 = vpop.f32.mrf.mxu0
      %v2920 = vadd.f32 0.0, %v2919
      %v2921 = vpop.f32.mrf.mxu0
      %v2922 = vadd.f32 0.0, %v2921
      %2923 = vmatmul.bf16.gmra.mxu0 %v2858
      %v2924 = vpop.f32.mrf.mxu0
      %v2925 = vadd.f32 0.0, %v2924
      %v2926 = vpop.f32.mrf.mxu0
      %v2927 = vadd.f32 0.0, %v2926
      %2928 = vmatmul.bf16.gmra.mxu0 %v2861
      %v2929 = vpop.f32.mrf.mxu0
      %v2930 = vadd.f32 0.0, %v2929
      %v2931 = vpop.f32.mrf.mxu0
      %v2932 = vadd.f32 0.0, %v2931
      %2933 = vmatmul.bf16.gmra.mxu0 %v2864
      %v2934 = vpop.f32.mrf.mxu0
      %v2935 = vadd.f32 0.0, %v2934
      %v2936 = vpop.f32.mrf.mxu0
      %v2937 = vadd.f32 0.0, %v2936
      %2938 = vmatmul.bf16.gmra.mxu0 %v2867
      %v2939 = vpop.f32.mrf.mxu0
      %v2940 = vadd.f32 0.0, %v2939
      %v2941 = vpop.f32.mrf.mxu0
      %v2942 = vadd.f32 0.0, %v2941
      %2943 = vmatmul.bf16.gmra.mxu0 %v2870
      %v2944 = vpop.f32.mrf.mxu0
      %v2945 = vadd.f32 0.0, %v2944
      %v2946 = vpop.f32.mrf.mxu0
      %v2947 = vadd.f32 0.0, %v2946
      %2948 = vmatmul.bf16.gmra.mxu0 %v2873
      %v2949 = vpop.f32.mrf.mxu0
      %v2950 = vadd.f32 0.0, %v2949
      %v2951 = vpop.f32.mrf.mxu0
      %v2952 = vadd.f32 0.0, %v2951
      %2953 = vmatmul.bf16.gmra.mxu0 %v2876
      %v2954 = vpop.f32.mrf.mxu0
      %v2955 = vadd.f32 0.0, %v2954
      %v2956 = vpop.f32.mrf.mxu0
      %v2957 = vadd.f32 0.0, %v2956
      %2958 = vmatmul.bf16.gmra.mxu0 %v2879
      %v2959 = vpop.f32.mrf.mxu0
      %v2960 = vadd.f32 0.0, %v2959
      %v2961 = vpop.f32.mrf.mxu0
      %v2962 = vadd.f32 0.0, %v2961
      %2963 = vmatmul.bf16.gmra.mxu0 %v2882
      %v2964 = vpop.f32.mrf.mxu0
      %v2965 = vadd.f32 0.0, %v2964
      %v2966 = vpop.f32.mrf.mxu0
      %v2967 = vadd.f32 0.0, %v2966
      %2968 = vmatmul.bf16.gmra.mxu0 %v2885
      %v2969 = vpop.f32.mrf.mxu0
      %v2970 = vadd.f32 0.0, %v2969
      %v2971 = vpop.f32.mrf.mxu0
      %v2972 = vadd.f32 0.0, %v2971
      %2973 = vmatmul.bf16.gmra.mxu0 %v2888
      %v2974 = vpop.f32.mrf.mxu0
      %v2975 = vadd.f32 0.0, %v2974
      %v2976 = vpop.f32.mrf.mxu0
      %v2977 = vadd.f32 0.0, %v2976
      %2978 = vmatmul.bf16.gmra.mxu0 %v2891
      %v2979 = vpop.f32.mrf.mxu0
      %v2980 = vadd.f32 0.0, %v2979
      %v2981 = vpop.f32.mrf.mxu0
      %v2982 = vadd.f32 0.0, %v2981
      %2983 = vmatmul.bf16.gmra.mxu0 %v2894
      %v2984 = vpop.f32.mrf.mxu0
      %v2985 = vadd.f32 0.0, %v2984
      %v2986 = vpop.f32.mrf.mxu0
      %v2987 = vadd.f32 0.0, %v2986
      %2988 = vmatmul.bf16.gmra.mxu0 %v2897
      %v2989 = vpop.f32.mrf.mxu0
      %v2990 = vadd.f32 0.0, %v2989
      %v2991 = vpop.f32.mrf.mxu0
      %v2992 = vadd.f32 0.0, %v2991
      %2993 = vmatmul.bf16.gmra.mxu0 %v2900
      %v2994 = vpop.f32.mrf.mxu0
      %v2995 = vadd.f32 0.0, %v2994
      %v2996 = vpop.f32.mrf.mxu0
      %v2997 = vadd.f32 0.0, %v2996
      %2998 = vmatmul.bf16.gmra.mxu0 %v2903
      %v2999 = vpop.f32.mrf.mxu0
      %v3000 = vadd.f32 0.0, %v2999
      %v3001 = vpop.f32.mrf.mxu0
      %v3002 = vadd.f32 0.0, %v3001
      %3003 = vdwg.mxu0
      %v3004 = vadd.f32 %v2607, %v2915
      %v3005 = vadd.f32 %v2608, %v2917
      %v3006 = vadd.f32 %v2609, %v2920
      %v3007 = vadd.f32 %v2610, %v2922
      %v3008 = vadd.f32 %v2611, %v2925
      %v3009 = vadd.f32 %v2612, %v2927
      %v3010 = vadd.f32 %v2613, %v2930
      %v3011 = vadd.f32 %v2614, %v2932
      %v3012 = vadd.f32 %v2615, %v2935
      %v3013 = vadd.f32 %v2616, %v2937
      %v3014 = vadd.f32 %v2617, %v2940
      %v3015 = vadd.f32 %v2618, %v2942
      %v3016 = vadd.f32 %v2619, %v2945
      %v3017 = vadd.f32 %v2620, %v2947
      %v3018 = vadd.f32 %v2621, %v2950
      %v3019 = vadd.f32 %v2622, %v2952
      %v3020 = vadd.f32 %v2623, %v2955
      %v3021 = vadd.f32 %v2624, %v2957
      %v3022 = vadd.f32 %v2625, %v2960
      %v3023 = vadd.f32 %v2626, %v2962
      %v3024 = vadd.f32 %v2627, %v2965
      %v3025 = vadd.f32 %v2628, %v2967
      %v3026 = vadd.f32 %v2629, %v2970
      %v3027 = vadd.f32 %v2630, %v2972
      %v3028 = vadd.f32 %v2631, %v2975
      %v3029 = vadd.f32 %v2632, %v2977
      %v3030 = vadd.f32 %v2633, %v2980
      %v3031 = vadd.f32 %v2634, %v2982
      %v3032 = vadd.f32 %v2635, %v2985
      %v3033 = vadd.f32 %v2636, %v2987
      %v3034 = vadd.f32 %v2637, %v2990
      %v3035 = vadd.f32 %v2638, %v2992
      %v3036 = vadd.f32 %v2639, %v2995
      %v3037 = vadd.f32 %v2640, %v2997
      %v3038 = vadd.f32 %v2641, %v3000
      %v3039 = vadd.f32 %v2642, %v3002
      %v3040 = vld [vmem:[%s300 + $0x10] sm:$0x8]
      %s3041 = scalar_lea.vmem %s2, 256
      %v3042 = vld [vmem:[%s3041] sm:$0xf]
      %v3043 = vld [vmem:[%s3041 + $0x4] sm:$0xf]
      %v3044 = vld [vmem:[%s3041 + $0x8] sm:$0xf]
      %v3045 = vld [vmem:[%s3041 + $0xc] sm:$0xf]
      %v3046 = vld [vmem:[%s3041 + $0x10] sm:$0xf]
      %v3047 = vld [vmem:[%s3041 + $0x14] sm:$0xf]
      %v3048 = vld [vmem:[%s3041 + $0x18] sm:$0xf]
      %v3049 = vld [vmem:[%s3041 + $0x1c] sm:$0xf]
      %v3051 = vunpack.c.l.b16 %v3040
      %v3052 = vpack.c.b16 %v2338, %v3051
      %vm3053 = vcmask 1044480
      %v3054 = vrot.slane %v3052, 3
      %v3055 = vrot.slane %v2375, 3
      %v3056 = vsel %vm3053, %v3054, %v3055
      %v3057 = vrot.slane %v2376, 3
      %v3058 = vsel %vm3053, %v3055, %v3057
      %v3059 = vrot.slane %v2377, 3
      %v3060 = vsel %vm3053, %v3057, %v3059
      %v3061 = vrot.slane %v2378, 3
      %v3062 = vsel %vm3053, %v3059, %v3061
      %v3063 = vrot.slane %v2379, 3
      %v3064 = vsel %vm3053, %v3061, %v3063
      %v3065 = vrot.slane %v2380, 3
      %v3066 = vsel %vm3053, %v3063, %v3065
      %v3067 = vrot.slane %v2381, 3
      %v3068 = vsel %vm3053, %v3065, %v3067
      %v3069 = vrot.slane %v2382, 3
      %v3070 = vsel %vm3053, %v3067, %v3069
      %v3071 = vrot.slane %v2383, 3
      %v3072 = vsel %vm3053, %v3069, %v3071
      %v3073 = vrot.slane %v2384, 3
      %v3074 = vsel %vm3053, %v3071, %v3073
      %v3075 = vrot.slane %v2385, 3
      %v3076 = vsel %vm3053, %v3073, %v3075
      %v3077 = vrot.slane %v2386, 3
      %v3078 = vsel %vm3053, %v3075, %v3077
      %v3079 = vrot.slane %v2387, 3
      %v3080 = vsel %vm3053, %v3077, %v3079
      %v3081 = vrot.slane %v2388, 3
      %v3082 = vsel %vm3053, %v3079, %v3081
      %v3083 = vrot.slane %v2389, 3
      %v3084 = vsel %vm3053, %v3081, %v3083
      %v3085 = vrot.slane %v2390, 3
      %v3086 = vsel %vm3053, %v3083, %v3085
      %v3087 = vrot.slane %v2391, 3
      %v3088 = vsel %vm3053, %v3085, %v3087
      %v3089 = vrot.slane %v2655, 3
      %v3090 = vsel %vm3053, %v3087, %v3089
      %v3099 = vunpack.c.l.b16 %v3042
      %v3100 = vunpack.c.l.b16 %v3043
      %v3101 = vunpack.c.l.b16 %v3044
      %v3102 = vunpack.c.l.b16 %v3045
      %v3103 = vunpack.c.l.b16 %v3046
      %v3104 = vunpack.c.l.b16 %v3047
      %v3105 = vunpack.c.l.b16 %v3048
      %v3106 = vunpack.c.l.b16 %v3049
      %v3107 = vpack.c.b16 %v3100, %v3099
      %v3108 = vpack.c.b16 %v3102, %v3101
      %v3109 = vpack.c.b16 %v3104, %v3103
      %v3110 = vpack.c.b16 %v3106, %v3105
      %v3116 = vsel %vm627, %v3056, 0
      %v3119 = vsel %vm627, %v3058, 0
      %v3122 = vsel %vm627, %v3060, 0
      %v3125 = vsel %vm627, %v3062, 0
      %v3128 = vsel %vm627, %v3064, 0
      %v3131 = vsel %vm627, %v3066, 0
      %v3134 = vsel %vm627, %v3068, 0
      %v3137 = vsel %vm627, %v3070, 0
      %v3140 = vsel %vm627, %v3072, 0
      %v3143 = vsel %vm627, %v3074, 0
      %v3146 = vsel %vm627, %v3076, 0
      %v3149 = vsel %vm627, %v3078, 0
      %v3152 = vsel %vm627, %v3080, 0
      %v3155 = vsel %vm627, %v3082, 0
      %v3158 = vsel %vm627, %v3084, 0
      %v3161 = vsel %vm627, %v3086, 0
      %v3164 = vsel %vm627, %v3088, 0
      %v3167 = vsel %vm627, %v3090, 0
      %3169 = vmatpush.bf16.msra.mxu0 0
      %3170 = vmatpush.bf16.msra.mxu0 0
      %3171 = vmatpush.bf16.msra.mxu0 0
      %3172 = vmatpush.bf16.msra.mxu0 0
      %3173 = vmatpush.bf16.msra.mxu0 %v3110
      %3174 = vmatpush.bf16.msra.mxu0 %v3109
      %3175 = vmatpush.bf16.msra.mxu0 %v3108
      %3176 = vmatpush.bf16.msra.mxu0 %v3107
      %3177 = vmatmul.bf16.gmra.mxu0 %v3116
      %v3178 = vpop.f32.mrf.mxu0
      %v3179 = vadd.f32 0.0, %v3178
      %v3180 = vpop.f32.mrf.mxu0
      %v3181 = vadd.f32 0.0, %v3180
      %3182 = vmatmul.bf16.gmra.mxu0 %v3119
      %v3183 = vpop.f32.mrf.mxu0
      %v3184 = vadd.f32 0.0, %v3183
      %v3185 = vpop.f32.mrf.mxu0
      %v3186 = vadd.f32 0.0, %v3185
      %3187 = vmatmul.bf16.gmra.mxu0 %v3122
      %v3188 = vpop.f32.mrf.mxu0
      %v3189 = vadd.f32 0.0, %v3188
      %v3190 = vpop.f32.mrf.mxu0
      %v3191 = vadd.f32 0.0, %v3190
      %3192 = vmatmul.bf16.gmra.mxu0 %v3125
      %v3193 = vpop.f32.mrf.mxu0
      %v3194 = vadd.f32 0.0, %v3193
      %v3195 = vpop.f32.mrf.mxu0
      %v3196 = vadd.f32 0.0, %v3195
      %3197 = vmatmul.bf16.gmra.mxu0 %v3128
      %v3198 = vpop.f32.mrf.mxu0
      %v3199 = vadd.f32 0.0, %v3198
      %v3200 = vpop.f32.mrf.mxu0
      %v3201 = vadd.f32 0.0, %v3200
      %3202 = vmatmul.bf16.gmra.mxu0 %v3131
      %v3203 = vpop.f32.mrf.mxu0
      %v3204 = vadd.f32 0.0, %v3203
      %v3205 = vpop.f32.mrf.mxu0
      %v3206 = vadd.f32 0.0, %v3205
      %3207 = vmatmul.bf16.gmra.mxu0 %v3134
      %v3208 = vpop.f32.mrf.mxu0
      %v3209 = vadd.f32 0.0, %v3208
      %v3210 = vpop.f32.mrf.mxu0
      %v3211 = vadd.f32 0.0, %v3210
      %3212 = vmatmul.bf16.gmra.mxu0 %v3137
      %v3213 = vpop.f32.mrf.mxu0
      %v3214 = vadd.f32 0.0, %v3213
      %v3215 = vpop.f32.mrf.mxu0
      %v3216 = vadd.f32 0.0, %v3215
      %3217 = vmatmul.bf16.gmra.mxu0 %v3140
      %v3218 = vpop.f32.mrf.mxu0
      %v3219 = vadd.f32 0.0, %v3218
      %v3220 = vpop.f32.mrf.mxu0
      %v3221 = vadd.f32 0.0, %v3220
      %3222 = vmatmul.bf16.gmra.mxu0 %v3143
      %v3223 = vpop.f32.mrf.mxu0
      %v3224 = vadd.f32 0.0, %v3223
      %v3225 = vpop.f32.mrf.mxu0
      %v3226 = vadd.f32 0.0, %v3225
      %3227 = vmatmul.bf16.gmra.mxu0 %v3146
      %v3228 = vpop.f32.mrf.mxu0
      %v3229 = vadd.f32 0.0, %v3228
      %v3230 = vpop.f32.mrf.mxu0
      %v3231 = vadd.f32 0.0, %v3230
      %3232 = vmatmul.bf16.gmra.mxu0 %v3149
      %v3233 = vpop.f32.mrf.mxu0
      %v3234 = vadd.f32 0.0, %v3233
      %v3235 = vpop.f32.mrf.mxu0
      %v3236 = vadd.f32 0.0, %v3235
      %3237 = vmatmul.bf16.gmra.mxu0 %v3152
      %v3238 = vpop.f32.mrf.mxu0
      %v3239 = vadd.f32 0.0, %v3238
      %v3240 = vpop.f32.mrf.mxu0
      %v3241 = vadd.f32 0.0, %v3240
      %3242 = vmatmul.bf16.gmra.mxu0 %v3155
      %v3243 = vpop.f32.mrf.mxu0
      %v3244 = vadd.f32 0.0, %v3243
      %v3245 = vpop.f32.mrf.mxu0
      %v3246 = vadd.f32 0.0, %v3245
      %3247 = vmatmul.bf16.gmra.mxu0 %v3158
      %v3248 = vpop.f32.mrf.mxu0
      %v3249 = vadd.f32 0.0, %v3248
      %v3250 = vpop.f32.mrf.mxu0
      %v3251 = vadd.f32 0.0, %v3250
      %3252 = vmatmul.bf16.gmra.mxu0 %v3161
      %v3253 = vpop.f32.mrf.mxu0
      %v3254 = vadd.f32 0.0, %v3253
      %v3255 = vpop.f32.mrf.mxu0
      %v3256 = vadd.f32 0.0, %v3255
      %3257 = vmatmul.bf16.gmra.mxu0 %v3164
      %v3258 = vpop.f32.mrf.mxu0
      %v3259 = vadd.f32 0.0, %v3258
      %v3260 = vpop.f32.mrf.mxu0
      %v3261 = vadd.f32 0.0, %v3260
      %3262 = vmatmul.bf16.gmra.mxu0 %v3167
      %v3263 = vpop.f32.mrf.mxu0
      %v3264 = vadd.f32 0.0, %v3263
      %v3265 = vpop.f32.mrf.mxu0
      %v3266 = vadd.f32 0.0, %v3265
      %3267 = vdwg.mxu0
      %v3268 = vadd.f32 %v3004, %v3179
      %v3269 = vadd.f32 %v3005, %v3181
      %v3270 = vadd.f32 %v3006, %v3184
      %v3271 = vadd.f32 %v3007, %v3186
      %v3272 = vadd.f32 %v3008, %v3189
      %v3273 = vadd.f32 %v3009, %v3191
      %v3274 = vadd.f32 %v3010, %v3194
      %v3275 = vadd.f32 %v3011, %v3196
      %v3276 = vadd.f32 %v3012, %v3199
      %v3277 = vadd.f32 %v3013, %v3201
      %v3278 = vadd.f32 %v3014, %v3204
      %v3279 = vadd.f32 %v3015, %v3206
      %v3280 = vadd.f32 %v3016, %v3209
      %v3281 = vadd.f32 %v3017, %v3211
      %v3282 = vadd.f32 %v3018, %v3214
      %v3283 = vadd.f32 %v3019, %v3216
      %v3284 = vadd.f32 %v3020, %v3219
      %v3285 = vadd.f32 %v3021, %v3221
      %v3286 = vadd.f32 %v3022, %v3224
      %v3287 = vadd.f32 %v3023, %v3226
      %v3288 = vadd.f32 %v3024, %v3229
      %v3289 = vadd.f32 %v3025, %v3231
      %v3290 = vadd.f32 %v3026, %v3234
      %v3291 = vadd.f32 %v3027, %v3236
      %v3292 = vadd.f32 %v3028, %v3239
      %v3293 = vadd.f32 %v3029, %v3241
      %v3294 = vadd.f32 %v3030, %v3244
      %v3295 = vadd.f32 %v3031, %v3246
      %v3296 = vadd.f32 %v3032, %v3249
      %v3297 = vadd.f32 %v3033, %v3251
      %v3298 = vadd.f32 %v3034, %v3254
      %v3299 = vadd.f32 %v3035, %v3256
      %v3300 = vadd.f32 %v3036, %v3259
      %v3301 = vadd.f32 %v3037, %v3261
      %v3302 = vadd.f32 %v3038, %v3264
      %v3303 = vadd.f32 %v3039, %v3266
      %v3304 = vld [vmem:[%s3] sm:$0x1]
      %v3306 = vperm.slane %v3304, 0
      %v3308 = vmul.f32 %v3268, %v3306
      %v3309 = vmul.f32 %v3269, %v3306
      %v3310 = vmul.f32 %v3270, %v3306
      %v3311 = vmul.f32 %v3271, %v3306
      %v3312 = vmul.f32 %v3272, %v3306
      %v3313 = vmul.f32 %v3273, %v3306
      %v3314 = vmul.f32 %v3274, %v3306
      %v3315 = vmul.f32 %v3275, %v3306
      %v3316 = vmul.f32 %v3276, %v3306
      %v3317 = vmul.f32 %v3277, %v3306
      %v3318 = vmul.f32 %v3278, %v3306
      %v3319 = vmul.f32 %v3279, %v3306
      %v3320 = vmul.f32 %v3280, %v3306
      %v3321 = vmul.f32 %v3281, %v3306
      %v3322 = vmul.f32 %v3282, %v3306
      %v3323 = vmul.f32 %v3283, %v3306
      %v3324 = vmul.f32 %v3284, %v3306
      %v3325 = vmul.f32 %v3285, %v3306
      %v3326 = vmul.f32 %v3286, %v3306
      %v3327 = vmul.f32 %v3287, %v3306
      %v3328 = vmul.f32 %v3288, %v3306
      %v3329 = vmul.f32 %v3289, %v3306
      %v3330 = vmul.f32 %v3290, %v3306
      %v3331 = vmul.f32 %v3291, %v3306
      %v3332 = vmul.f32 %v3292, %v3306
      %v3333 = vmul.f32 %v3293, %v3306
      %v3334 = vmul.f32 %v3294, %v3306
      %v3335 = vmul.f32 %v3295, %v3306
      %v3336 = vmul.f32 %v3296, %v3306
      %v3337 = vmul.f32 %v3297, %v3306
      %v3338 = vmul.f32 %v3298, %v3306
      %v3339 = vmul.f32 %v3299, %v3306
      %v3340 = vmul.f32 %v3300, %v3306
      %v3341 = vmul.f32 %v3301, %v3306
      %v3342 = vmul.f32 %v3302, %v3306
      %v3343 = vmul.f32 %v3303, %v3306
      %v3344 = vld [vmem:[%s4] sm:$0x1]
      %v3346 = vperm.slane %v3344, 0
      %v3348 = vadd.f32 %v3308, %v3346
      %v3349 = vadd.f32 %v3309, %v3346
      %v3350 = vadd.f32 %v3310, %v3346
      %v3351 = vadd.f32 %v3311, %v3346
      %v3352 = vadd.f32 %v3312, %v3346
      %v3353 = vadd.f32 %v3313, %v3346
      %v3354 = vadd.f32 %v3314, %v3346
      %v3355 = vadd.f32 %v3315, %v3346
      %v3356 = vadd.f32 %v3316, %v3346
      %v3357 = vadd.f32 %v3317, %v3346
      %v3358 = vadd.f32 %v3318, %v3346
      %v3359 = vadd.f32 %v3319, %v3346
      %v3360 = vadd.f32 %v3320, %v3346
      %v3361 = vadd.f32 %v3321, %v3346
      %v3362 = vadd.f32 %v3322, %v3346
      %v3363 = vadd.f32 %v3323, %v3346
      %v3364 = vadd.f32 %v3324, %v3346
      %v3365 = vadd.f32 %v3325, %v3346
      %v3366 = vadd.f32 %v3326, %v3346
      %v3367 = vadd.f32 %v3327, %v3346
      %v3368 = vadd.f32 %v3328, %v3346
      %v3369 = vadd.f32 %v3329, %v3346
      %v3370 = vadd.f32 %v3330, %v3346
      %v3371 = vadd.f32 %v3331, %v3346
      %v3372 = vadd.f32 %v3332, %v3346
      %v3373 = vadd.f32 %v3333, %v3346
      %v3374 = vadd.f32 %v3334, %v3346
      %v3375 = vadd.f32 %v3335, %v3346
      %v3376 = vadd.f32 %v3336, %v3346
      %v3377 = vadd.f32 %v3337, %v3346
      %v3378 = vadd.f32 %v3338, %v3346
      %v3379 = vadd.f32 %v3339, %v3346
      %v3380 = vadd.f32 %v3340, %v3346
      %v3381 = vadd.f32 %v3341, %v3346
      %v3382 = vadd.f32 %v3342, %v3346
      %v3383 = vadd.f32 %v3343, %v3346
      %v3384 = vmax.f32 %v3348, 0.0
      %v3385 = vmax.f32 %v3349, 0.0
      %v3386 = vmax.f32 %v3350, 0.0
      %v3387 = vmax.f32 %v3351, 0.0
      %v3388 = vmax.f32 %v3352, 0.0
      %v3389 = vmax.f32 %v3353, 0.0
      %v3390 = vmax.f32 %v3354, 0.0
      %v3391 = vmax.f32 %v3355, 0.0
      %v3392 = vmax.f32 %v3356, 0.0
      %v3393 = vmax.f32 %v3357, 0.0
      %v3394 = vmax.f32 %v3358, 0.0
      %v3395 = vmax.f32 %v3359, 0.0
      %v3396 = vmax.f32 %v3360, 0.0
      %v3397 = vmax.f32 %v3361, 0.0
      %v3398 = vmax.f32 %v3362, 0.0
      %v3399 = vmax.f32 %v3363, 0.0
      %v3400 = vmax.f32 %v3364, 0.0
      %v3401 = vmax.f32 %v3365, 0.0
      %v3402 = vmax.f32 %v3366, 0.0
      %v3403 = vmax.f32 %v3367, 0.0
      %v3404 = vmax.f32 %v3368, 0.0
      %v3405 = vmax.f32 %v3369, 0.0
      %v3406 = vmax.f32 %v3370, 0.0
      %v3407 = vmax.f32 %v3371, 0.0
      %v3408 = vmax.f32 %v3372, 0.0
      %v3409 = vmax.f32 %v3373, 0.0
      %v3410 = vmax.f32 %v3374, 0.0
      %v3411 = vmax.f32 %v3375, 0.0
      %v3412 = vmax.f32 %v3376, 0.0
      %v3413 = vmax.f32 %v3377, 0.0
      %v3414 = vmax.f32 %v3378, 0.0
      %v3415 = vmax.f32 %v3379, 0.0
      %v3416 = vmax.f32 %v3380, 0.0
      %v3417 = vmax.f32 %v3381, 0.0
      %v3418 = vmax.f32 %v3382, 0.0
      %v3419 = vmax.f32 %v3383, 0.0
      %v3420 = vld [vmem:[%s1] sm:$0xff]
      %v3421 = vld [vmem:[%s1 + $0x8] sm:$0xff]
      %v3422 = vld [vmem:[%s1 + $0x10] sm:$0xff]
      %v3423 = vld [vmem:[%s1 + $0x18] sm:$0xff]
      %v3424 = vld [vmem:[%s1 + $0x20] sm:$0xff]
      %v3425 = vld [vmem:[%s1 + $0x28] sm:$0xff]
      %v3426 = vld [vmem:[%s1 + $0x30] sm:$0xff]
      %v3427 = vld [vmem:[%s1 + $0x38] sm:$0xff]
      %v3428 = vld [vmem:[%s1 + $0x40] sm:$0xff]
      %v3429 = vld [vmem:[%s1 + $0x48] sm:$0xff]
      %v3430 = vld [vmem:[%s1 + $0x50] sm:$0xff]
      %v3431 = vld [vmem:[%s1 + $0x58] sm:$0xff]
      %v3432 = vld [vmem:[%s1 + $0x60] sm:$0xff]
      %v3433 = vld [vmem:[%s1 + $0x68] sm:$0xff]
      %v3434 = vld [vmem:[%s1 + $0x70] sm:$0xff]
      %v3435 = vld [vmem:[%s1 + $0x78] sm:$0xff]
      %v3436 = vld [vmem:[%s1 + $0x80] sm:$0xff]
      %v3437 = vld [vmem:[%s1 + $0x88] sm:$0xff]
      %v3438 = vld [vmem:[%s1 + $0x90] sm:$0xff]
      %v3439 = vld [vmem:[%s1 + $0x98] sm:$0xff]
      %v3440 = vld [vmem:[%s1 + $0xa0] sm:$0xff]
      %v3441 = vld [vmem:[%s1 + $0xa8] sm:$0xff]
      %v3442 = vld [vmem:[%s1 + $0xb0] sm:$0xff]
      %v3443 = vld [vmem:[%s1 + $0xb8] sm:$0xff]
      %v3444 = vld [vmem:[%s1 + $0xc0] sm:$0xff]
      %v3445 = vld [vmem:[%s1 + $0xc8] sm:$0xff]
      %v3446 = vld [vmem:[%s1 + $0xd0] sm:$0xff]
      %v3447 = vld [vmem:[%s1 + $0xd8] sm:$0xff]
      %v3448 = vld [vmem:[%s1 + $0xe0] sm:$0xff]
      %v3449 = vld [vmem:[%s1 + $0xe8] sm:$0xff]
      %v3450 = vld [vmem:[%s1 + $0xf0] sm:$0xff]
      %v3451 = vld [vmem:[%s1 + $0xf8] sm:$0xff]
      %v3452 = vld [vmem:[%s1 + $0x100] sm:$0xff]
      %v3453 = vld [vmem:[%s1 + $0x108] sm:$0xff]
      %v3454 = vld [vmem:[%s1 + $0x110] sm:$0xff]
      %v3455 = vld [vmem:[%s1 + $0x118] sm:$0xff]
      %3457 = vset.pattern.permute.xlu0 0
      %3458 = vperm.xlu0 %3457, %v3420
      %v3459 = vpop.permute.xlu0 %3458
      %3462 = vset.pattern.permute.xlu0 0
      %3463 = vperm.xlu0 %3462, %v3421
      %v3464 = vpop.permute.xlu0 %3463
      %3467 = vset.pattern.permute.xlu0 0
      %3468 = vperm.xlu0 %3467, %v3422
      %v3469 = vpop.permute.xlu0 %3468
      %3472 = vset.pattern.permute.xlu0 0
      %3473 = vperm.xlu0 %3472, %v3423
      %v3474 = vpop.permute.xlu0 %3473
      %3477 = vset.pattern.permute.xlu0 0
      %3478 = vperm.xlu0 %3477, %v3424
      %v3479 = vpop.permute.xlu0 %3478
      %3482 = vset.pattern.permute.xlu0 0
      %3483 = vperm.xlu0 %3482, %v3425
      %v3484 = vpop.permute.xlu0 %3483
      %3487 = vset.pattern.permute.xlu0 0
      %3488 = vperm.xlu0 %3487, %v3426
      %v3489 = vpop.permute.xlu0 %3488
      %3492 = vset.pattern.permute.xlu0 0
      %3493 = vperm.xlu0 %3492, %v3427
      %v3494 = vpop.permute.xlu0 %3493
      %3497 = vset.pattern.permute.xlu0 0
      %3498 = vperm.xlu0 %3497, %v3428
      %v3499 = vpop.permute.xlu0 %3498
      %3502 = vset.pattern.permute.xlu0 0
      %3503 = vperm.xlu0 %3502, %v3429
      %v3504 = vpop.permute.xlu0 %3503
      %3507 = vset.pattern.permute.xlu0 0
      %3508 = vperm.xlu0 %3507, %v3430
      %v3509 = vpop.permute.xlu0 %3508
      %3512 = vset.pattern.permute.xlu0 0
      %3513 = vperm.xlu0 %3512, %v3431
      %v3514 = vpop.permute.xlu0 %3513
      %3517 = vset.pattern.permute.xlu0 0
      %3518 = vperm.xlu0 %3517, %v3432
      %v3519 = vpop.permute.xlu0 %3518
      %3522 = vset.pattern.permute.xlu0 0
      %3523 = vperm.xlu0 %3522, %v3433
      %v3524 = vpop.permute.xlu0 %3523
      %3527 = vset.pattern.permute.xlu0 0
      %3528 = vperm.xlu0 %3527, %v3434
      %v3529 = vpop.permute.xlu0 %3528
      %3532 = vset.pattern.permute.xlu0 0
      %3533 = vperm.xlu0 %3532, %v3435
      %v3534 = vpop.permute.xlu0 %3533
      %3537 = vset.pattern.permute.xlu0 0
      %3538 = vperm.xlu0 %3537, %v3436
      %v3539 = vpop.permute.xlu0 %3538
      %3542 = vset.pattern.permute.xlu0 0
      %3543 = vperm.xlu0 %3542, %v3437
      %v3544 = vpop.permute.xlu0 %3543
      %3547 = vset.pattern.permute.xlu0 0
      %3548 = vperm.xlu0 %3547, %v3438
      %v3549 = vpop.permute.xlu0 %3548
      %3552 = vset.pattern.permute.xlu0 0
      %3553 = vperm.xlu0 %3552, %v3439
      %v3554 = vpop.permute.xlu0 %3553
      %3557 = vset.pattern.permute.xlu0 0
      %3558 = vperm.xlu0 %3557, %v3440
      %v3559 = vpop.permute.xlu0 %3558
      %3562 = vset.pattern.permute.xlu0 0
      %3563 = vperm.xlu0 %3562, %v3441
      %v3564 = vpop.permute.xlu0 %3563
      %3567 = vset.pattern.permute.xlu0 0
      %3568 = vperm.xlu0 %3567, %v3442
      %v3569 = vpop.permute.xlu0 %3568
      %3572 = vset.pattern.permute.xlu0 0
      %3573 = vperm.xlu0 %3572, %v3443
      %v3574 = vpop.permute.xlu0 %3573
      %3577 = vset.pattern.permute.xlu0 0
      %3578 = vperm.xlu0 %3577, %v3444
      %v3579 = vpop.permute.xlu0 %3578
      %3582 = vset.pattern.permute.xlu0 0
      %3583 = vperm.xlu0 %3582, %v3445
      %v3584 = vpop.permute.xlu0 %3583
      %3587 = vset.pattern.permute.xlu0 0
      %3588 = vperm.xlu0 %3587, %v3446
      %v3589 = vpop.permute.xlu0 %3588
      %3592 = vset.pattern.permute.xlu0 0
      %3593 = vperm.xlu0 %3592, %v3447
      %v3594 = vpop.permute.xlu0 %3593
      %3597 = vset.pattern.permute.xlu0 0
      %3598 = vperm.xlu0 %3597, %v3448
      %v3599 = vpop.permute.xlu0 %3598
      %3602 = vset.pattern.permute.xlu0 0
      %3603 = vperm.xlu0 %3602, %v3449
      %v3604 = vpop.permute.xlu0 %3603
      %3607 = vset.pattern.permute.xlu0 0
      %3608 = vperm.xlu0 %3607, %v3450
      %v3609 = vpop.permute.xlu0 %3608
      %3612 = vset.pattern.permute.xlu0 0
      %3613 = vperm.xlu0 %3612, %v3451
      %v3614 = vpop.permute.xlu0 %3613
      %3617 = vset.pattern.permute.xlu0 0
      %3618 = vperm.xlu0 %3617, %v3452
      %v3619 = vpop.permute.xlu0 %3618
      %3622 = vset.pattern.permute.xlu0 0
      %3623 = vperm.xlu0 %3622, %v3453
      %v3624 = vpop.permute.xlu0 %3623
      %3627 = vset.pattern.permute.xlu0 0
      %3628 = vperm.xlu0 %3627, %v3454
      %v3629 = vpop.permute.xlu0 %3628
      %3632 = vset.pattern.permute.xlu0 0
      %3633 = vperm.xlu0 %3632, %v3455
      %v3634 = vpop.permute.xlu0 %3633
      %v3636 = vmul.f32 %v3384, %v3459
      %v3637 = vmul.f32 %v3385, %v3464
      %v3638 = vmul.f32 %v3386, %v3469
      %v3639 = vmul.f32 %v3387, %v3474
      %v3640 = vmul.f32 %v3388, %v3479
      %v3641 = vmul.f32 %v3389, %v3484
      %v3642 = vmul.f32 %v3390, %v3489
      %v3643 = vmul.f32 %v3391, %v3494
      %v3644 = vmul.f32 %v3392, %v3499
      %v3645 = vmul.f32 %v3393, %v3504
      %v3646 = vmul.f32 %v3394, %v3509
      %v3647 = vmul.f32 %v3395, %v3514
      %v3648 = vmul.f32 %v3396, %v3519
      %v3649 = vmul.f32 %v3397, %v3524
      %v3650 = vmul.f32 %v3398, %v3529
      %v3651 = vmul.f32 %v3399, %v3534
      %v3652 = vmul.f32 %v3400, %v3539
      %v3653 = vmul.f32 %v3401, %v3544
      %v3654 = vmul.f32 %v3402, %v3549
      %v3655 = vmul.f32 %v3403, %v3554
      %v3656 = vmul.f32 %v3404, %v3559
      %v3657 = vmul.f32 %v3405, %v3564
      %v3658 = vmul.f32 %v3406, %v3569
      %v3659 = vmul.f32 %v3407, %v3574
      %v3660 = vmul.f32 %v3408, %v3579
      %v3661 = vmul.f32 %v3409, %v3584
      %v3662 = vmul.f32 %v3410, %v3589
      %v3663 = vmul.f32 %v3411, %v3594
      %v3664 = vmul.f32 %v3412, %v3599
      %v3665 = vmul.f32 %v3413, %v3604
      %v3666 = vmul.f32 %v3414, %v3609
      %v3667 = vmul.f32 %v3415, %v3614
      %v3668 = vmul.f32 %v3416, %v3619
      %v3669 = vmul.f32 %v3417, %v3624
      %v3670 = vmul.f32 %v3418, %v3629
      %v3671 = vmul.f32 %v3419, %v3634
      %vm3672 = vcmask 519168
      %3673 = vst.msk [vmem:[#allocation2] sm:$0xf] %vm3672, 0
      %3674 = vst.msk [vmem:[#allocation2 + $0x4] sm:$0xf] %vm3672, 0
      %vm3675 = vcmask 517120
      %vm3676 = vsmask.f32 1280
      %vm3677 = vmand %vm3675, %vm3676
      %v3678 = vld [vmem:[#allocation2 + $0x8] sm:$0x3]
      %v3679 = vsel %vm3677, 0, %v3678
      %3680 = vst [vmem:[#allocation2 + $0x8] sm:$0x3] %v3679
      %v3681 = vpack.c.bf16 %v3636, %v3636
      %v3682 = vpack.c.bf16 %v3637, %v3637
      %v3683 = vpack.c.bf16 %v3638, %v3638
      %v3684 = vpack.c.bf16 %v3639, %v3639
      %v3685 = vpack.c.bf16 %v3640, %v3640
      %v3686 = vpack.c.bf16 %v3641, %v3641
      %v3687 = vpack.c.bf16 %v3642, %v3642
      %v3688 = vpack.c.bf16 %v3643, %v3643
      %v3689 = vpack.c.bf16 %v3644, %v3644
      %v3690 = vpack.c.bf16 %v3645, %v3645
      %v3691 = vpack.c.bf16 %v3646, %v3646
      %v3692 = vpack.c.bf16 %v3647, %v3647
      %v3693 = vpack.c.bf16 %v3648, %v3648
      %v3694 = vpack.c.bf16 %v3649, %v3649
      %v3695 = vpack.c.bf16 %v3650, %v3650
      %v3696 = vpack.c.bf16 %v3651, %v3651
      %v3697 = vpack.c.bf16 %v3652, %v3652
      %v3698 = vpack.c.bf16 %v3653, %v3653
      %v3699 = vpack.c.bf16 %v3654, %v3654
      %v3700 = vpack.c.bf16 %v3655, %v3655
      %v3701 = vpack.c.bf16 %v3656, %v3656
      %v3702 = vpack.c.bf16 %v3657, %v3657
      %v3703 = vpack.c.bf16 %v3658, %v3658
      %v3704 = vpack.c.bf16 %v3659, %v3659
      %v3705 = vpack.c.bf16 %v3660, %v3660
      %v3706 = vpack.c.bf16 %v3661, %v3661
      %v3707 = vpack.c.bf16 %v3662, %v3662
      %v3708 = vpack.c.bf16 %v3663, %v3663
      %v3709 = vpack.c.bf16 %v3664, %v3664
      %v3710 = vpack.c.bf16 %v3665, %v3665
      %v3711 = vpack.c.bf16 %v3666, %v3666
      %v3712 = vpack.c.bf16 %v3667, %v3667
      %v3713 = vpack.c.bf16 %v3668, %v3668
      %v3714 = vpack.c.bf16 %v3669, %v3669
      %v3715 = vpack.c.bf16 %v3670, %v3670
      %v3716 = vpack.c.bf16 %v3671, %v3671
      %vm3717 = vsmask.f32 5392
      %vm3718 = vmor %vm3676, %vm3717
      %v3720 = vshrl.u32 %v3681, 16
      %v3722 = vrot.slane %v3720, 6
      %v3723 = vshll.u32 %v3681, 16
      %v3725 = vrot.slane %v3723, 7
      %v3726 = vor.u32 %v3722, %v3725
      %v3727 = vrot.slane %v3726, 4
      %v3729 = vshrl.u32 %v3682, 16
      %v3731 = vrot.slane %v3729, 6
      %v3732 = vshll.u32 %v3682, 16
      %v3734 = vrot.slane %v3732, 7
      %v3735 = vor.u32 %v3731, %v3734
      %v3736 = vsel %vm3718, %v3727, %v3735
      %v3737 = vrot.slane %v3735, 4
      %v3739 = vshrl.u32 %v3683, 16
      %v3741 = vrot.slane %v3739, 6
      %v3742 = vshll.u32 %v3683, 16
      %v3744 = vrot.slane %v3742, 7
      %v3745 = vor.u32 %v3741, %v3744
      %v3746 = vsel %vm3718, %v3737, %v3745
      %v3747 = vrot.slane %v3745, 4
      %v3749 = vshrl.u32 %v3684, 16
      %v3751 = vrot.slane %v3749, 6
      %v3752 = vshll.u32 %v3684, 16
      %v3754 = vrot.slane %v3752, 7
      %v3755 = vor.u32 %v3751, %v3754
      %v3756 = vsel %vm3718, %v3747, %v3755
      %v3757 = vrot.slane %v3755, 4
      %v3759 = vshrl.u32 %v3685, 16
      %v3761 = vrot.slane %v3759, 6
      %v3762 = vshll.u32 %v3685, 16
      %v3764 = vrot.slane %v3762, 7
      %v3765 = vor.u32 %v3761, %v3764
      %v3766 = vsel %vm3718, %v3757, %v3765
      %v3767 = vrot.slane %v3765, 4
      %v3769 = vshrl.u32 %v3686, 16
      %v3771 = vrot.slane %v3769, 6
      %v3772 = vshll.u32 %v3686, 16
      %v3774 = vrot.slane %v3772, 7
      %v3775 = vor.u32 %v3771, %v3774
      %v3776 = vsel %vm3718, %v3767, %v3775
      %v3777 = vrot.slane %v3775, 4
      %v3779 = vshrl.u32 %v3687, 16
      %v3781 = vrot.slane %v3779, 6
      %v3782 = vshll.u32 %v3687, 16
      %v3784 = vrot.slane %v3782, 7
      %v3785 = vor.u32 %v3781, %v3784
      %v3786 = vsel %vm3718, %v3777, %v3785
      %v3787 = vrot.slane %v3785, 4
      %v3789 = vshrl.u32 %v3688, 16
      %v3791 = vrot.slane %v3789, 6
      %v3792 = vshll.u32 %v3688, 16
      %v3794 = vrot.slane %v3792, 7
      %v3795 = vor.u32 %v3791, %v3794
      %v3796 = vsel %vm3718, %v3787, %v3795
      %v3797 = vrot.slane %v3795, 4
      %v3799 = vshrl.u32 %v3689, 16
      %v3801 = vrot.slane %v3799, 6
      %v3802 = vshll.u32 %v3689, 16
      %v3804 = vrot.slane %v3802, 7
      %v3805 = vor.u32 %v3801, %v3804
      %v3806 = vsel %vm3718, %v3797, %v3805
      %v3807 = vrot.slane %v3805, 4
      %v3809 = vshrl.u32 %v3690, 16
      %v3811 = vrot.slane %v3809, 6
      %v3812 = vshll.u32 %v3690, 16
      %v3814 = vrot.slane %v3812, 7
      %v3815 = vor.u32 %v3811, %v3814
      %v3816 = vsel %vm3718, %v3807, %v3815
      %v3817 = vrot.slane %v3815, 4
      %v3819 = vshrl.u32 %v3691, 16
      %v3821 = vrot.slane %v3819, 6
      %v3822 = vshll.u32 %v3691, 16
      %v3824 = vrot.slane %v3822, 7
      %v3825 = vor.u32 %v3821, %v3824
      %v3826 = vsel %vm3718, %v3817, %v3825
      %v3827 = vrot.slane %v3825, 4
      %v3829 = vshrl.u32 %v3692, 16
      %v3831 = vrot.slane %v3829, 6
      %v3832 = vshll.u32 %v3692, 16
      %v3834 = vrot.slane %v3832, 7
      %v3835 = vor.u32 %v3831, %v3834
      %v3836 = vsel %vm3718, %v3827, %v3835
      %v3837 = vrot.slane %v3835, 4
      %v3839 = vshrl.u32 %v3693, 16
      %v3841 = vrot.slane %v3839, 6
      %v3842 = vshll.u32 %v3693, 16
      %v3844 = vrot.slane %v3842, 7
      %v3845 = vor.u32 %v3841, %v3844
      %v3846 = vsel %vm3718, %v3837, %v3845
      %v3847 = vrot.slane %v3845, 4
      %v3849 = vshrl.u32 %v3694, 16
      %v3851 = vrot.slane %v3849, 6
      %v3852 = vshll.u32 %v3694, 16
      %v3854 = vrot.slane %v3852, 7
      %v3855 = vor.u32 %v3851, %v3854
      %v3856 = vsel %vm3718, %v3847, %v3855
      %v3857 = vrot.slane %v3855, 4
      %v3859 = vshrl.u32 %v3695, 16
      %v3861 = vrot.slane %v3859, 6
      %v3862 = vshll.u32 %v3695, 16
      %v3864 = vrot.slane %v3862, 7
      %v3865 = vor.u32 %v3861, %v3864
      %v3866 = vsel %vm3718, %v3857, %v3865
      %v3867 = vrot.slane %v3865, 4
      %v3869 = vshrl.u32 %v3696, 16
      %v3871 = vrot.slane %v3869, 6
      %v3872 = vshll.u32 %v3696, 16
      %v3874 = vrot.slane %v3872, 7
      %v3875 = vor.u32 %v3871, %v3874
      %v3876 = vsel %vm3718, %v3867, %v3875
      %v3877 = vrot.slane %v3875, 4
      %v3879 = vshrl.u32 %v3697, 16
      %v3881 = vrot.slane %v3879, 6
      %v3882 = vshll.u32 %v3697, 16
      %v3884 = vrot.slane %v3882, 7
      %v3885 = vor.u32 %v3881, %v3884
      %v3886 = vsel %vm3718, %v3877, %v3885
      %v3887 = vrot.slane %v3885, 4
      %v3889 = vshrl.u32 %v3698, 16
      %v3891 = vrot.slane %v3889, 6
      %v3892 = vshll.u32 %v3698, 16
      %v3894 = vrot.slane %v3892, 7
      %v3895 = vor.u32 %v3891, %v3894
      %v3896 = vsel %vm3718, %v3887, %v3895
      %v3897 = vrot.slane %v3895, 4
      %v3899 = vshrl.u32 %v3699, 16
      %v3901 = vrot.slane %v3899, 6
      %v3902 = vshll.u32 %v3699, 16
      %v3904 = vrot.slane %v3902, 7
      %v3905 = vor.u32 %v3901, %v3904
      %v3906 = vsel %vm3718, %v3897, %v3905
      %v3907 = vrot.slane %v3905, 4
      %v3909 = vshrl.u32 %v3700, 16
      %v3911 = vrot.slane %v3909, 6
      %v3912 = vshll.u32 %v3700, 16
      %v3914 = vrot.slane %v3912, 7
      %v3915 = vor.u32 %v3911, %v3914
      %v3916 = vsel %vm3718, %v3907, %v3915
      %v3917 = vrot.slane %v3915, 4
      %v3919 = vshrl.u32 %v3701, 16
      %v3921 = vrot.slane %v3919, 6
      %v3922 = vshll.u32 %v3701, 16
      %v3924 = vrot.slane %v3922, 7
      %v3925 = vor.u32 %v3921, %v3924
      %v3926 = vsel %vm3718, %v3917, %v3925
      %v3927 = vrot.slane %v3925, 4
      %v3929 = vshrl.u32 %v3702, 16
      %v3931 = vrot.slane %v3929, 6
      %v3932 = vshll.u32 %v3702, 16
      %v3934 = vrot.slane %v3932, 7
      %v3935 = vor.u32 %v3931, %v3934
      %v3936 = vsel %vm3718, %v3927, %v3935
      %v3937 = vrot.slane %v3935, 4
      %v3939 = vshrl.u32 %v3703, 16
      %v3941 = vrot.slane %v3939, 6
      %v3942 = vshll.u32 %v3703, 16
      %v3944 = vrot.slane %v3942, 7
      %v3945 = vor.u32 %v3941, %v3944
      %v3946 = vsel %vm3718, %v3937, %v3945
      %v3947 = vrot.slane %v3945, 4
      %v3949 = vshrl.u32 %v3704, 16
      %v3951 = vrot.slane %v3949, 6
      %v3952 = vshll.u32 %v3704, 16
      %v3954 = vrot.slane %v3952, 7
      %v3955 = vor.u32 %v3951, %v3954
      %v3956 = vsel %vm3718, %v3947, %v3955
      %v3957 = vrot.slane %v3955, 4
      %v3959 = vshrl.u32 %v3705, 16
      %v3961 = vrot.slane %v3959, 6
      %v3962 = vshll.u32 %v3705, 16
      %v3964 = vrot.slane %v3962, 7
      %v3965 = vor.u32 %v3961, %v3964
      %v3966 = vsel %vm3718, %v3957, %v3965
      %v3967 = vrot.slane %v3965, 4
      %v3969 = vshrl.u32 %v3706, 16
      %v3971 = vrot.slane %v3969, 6
      %v3972 = vshll.u32 %v3706, 16
      %v3974 = vrot.slane %v3972, 7
      %v3975 = vor.u32 %v3971, %v3974
      %v3976 = vsel %vm3718, %v3967, %v3975
      %v3977 = vrot.slane %v3975, 4
      %v3979 = vshrl.u32 %v3707, 16
      %v3981 = vrot.slane %v3979, 6
      %v3982 = vshll.u32 %v3707, 16
      %v3984 = vrot.slane %v3982, 7
      %v3985 = vor.u32 %v3981, %v3984
      %v3986 = vsel %vm3718, %v3977, %v3985
      %v3987 = vrot.slane %v3985, 4
      %v3989 = vshrl.u32 %v3708, 16
      %v3991 = vrot.slane %v3989, 6
      %v3992 = vshll.u32 %v3708, 16
      %v3994 = vrot.slane %v3992, 7
      %v3995 = vor.u32 %v3991, %v3994
      %v3996 = vsel %vm3718, %v3987, %v3995
      %v3997 = vrot.slane %v3995, 4
      %v3999 = vshrl.u32 %v3709, 16
      %v4001 = vrot.slane %v3999, 6
      %v4002 = vshll.u32 %v3709, 16
      %v4004 = vrot.slane %v4002, 7
      %v4005 = vor.u32 %v4001, %v4004
      %v4006 = vsel %vm3718, %v3997, %v4005
      %v4007 = vrot.slane %v4005, 4
      %v4009 = vshrl.u32 %v3710, 16
      %v4011 = vrot.slane %v4009, 6
      %v4012 = vshll.u32 %v3710, 16
      %v4014 = vrot.slane %v4012, 7
      %v4015 = vor.u32 %v4011, %v4014
      %v4016 = vsel %vm3718, %v4007, %v4015
      %v4017 = vrot.slane %v4015, 4
      %v4019 = vshrl.u32 %v3711, 16
      %v4021 = vrot.slane %v4019, 6
      %v4022 = vshll.u32 %v3711, 16
      %v4024 = vrot.slane %v4022, 7
      %v4025 = vor.u32 %v4021, %v4024
      %v4026 = vsel %vm3718, %v4017, %v4025
      %v4027 = vrot.slane %v4025, 4
      %v4029 = vshrl.u32 %v3712, 16
      %v4031 = vrot.slane %v4029, 6
      %v4032 = vshll.u32 %v3712, 16
      %v4034 = vrot.slane %v4032, 7
      %v4035 = vor.u32 %v4031, %v4034
      %v4036 = vsel %vm3718, %v4027, %v4035
      %v4037 = vrot.slane %v4035, 4
      %v4039 = vshrl.u32 %v3713, 16
      %v4041 = vrot.slane %v4039, 6
      %v4042 = vshll.u32 %v3713, 16
      %v4044 = vrot.slane %v4042, 7
      %v4045 = vor.u32 %v4041, %v4044
      %v4046 = vsel %vm3718, %v4037, %v4045
      %v4047 = vrot.slane %v4045, 4
      %v4049 = vshrl.u32 %v3714, 16
      %v4051 = vrot.slane %v4049, 6
      %v4052 = vshll.u32 %v3714, 16
      %v4054 = vrot.slane %v4052, 7
      %v4055 = vor.u32 %v4051, %v4054
      %v4056 = vsel %vm3718, %v4047, %v4055
      %v4057 = vrot.slane %v4055, 4
      %v4059 = vshrl.u32 %v3715, 16
      %v4061 = vrot.slane %v4059, 6
      %v4062 = vshll.u32 %v3715, 16
      %v4064 = vrot.slane %v4062, 7
      %v4065 = vor.u32 %v4061, %v4064
      %v4066 = vsel %vm3718, %v4057, %v4065
      %v4067 = vrot.slane %v4065, 4
      %v4069 = vshrl.u32 %v3716, 16
      %v4071 = vrot.slane %v4069, 6
      %v4072 = vshll.u32 %v3716, 16
      %v4074 = vrot.slane %v4072, 7
      %v4075 = vor.u32 %v4071, %v4074
      %v4076 = vsel %vm3718, %v4067, %v4075
      %v4077 = vrot.slane %v4075, 4
      %vm4115 = vcmask 519169
      %vm4116 = vsmask.f32 7942
      %vm4117 = vmand %vm4115, %vm4116
      %v4118 = vld [vmem:[#allocation2 + $0x8] sm:$0xe]
      %v4119 = vsel %vm4117, %v3726, %v4118
      %4120 = vst [vmem:[#allocation2 + $0x8] sm:$0xe] %v4119
      %4121 = vst.msk [vmem:[#allocation2 + $0xc] sm:$0xf] %vm3672, %v3736
      %4122 = vst.msk [vmem:[#allocation2 + $0x10] sm:$0xf] %vm3672, %v3746
      %4123 = vst.msk [vmem:[#allocation2 + $0x14] sm:$0xf] %vm3672, %v3756
      %4124 = vst.msk [vmem:[#allocation2 + $0x18] sm:$0xf] %vm3672, %v3766
      %4125 = vst.msk [vmem:[#allocation2 + $0x1c] sm:$0xf] %vm3672, %v3776
      %4126 = vst.msk [vmem:[#allocation2 + $0x20] sm:$0xf] %vm3672, %v3786
      %4127 = vst.msk [vmem:[#allocation2 + $0x24] sm:$0xf] %vm3672, %v3796
      %4128 = vst.msk [vmem:[#allocation2 + $0x28] sm:$0xf] %vm3672, %v3806
      %4129 = vst.msk [vmem:[#allocation2 + $0x2c] sm:$0xf] %vm3672, %v3816
      %4130 = vst.msk [vmem:[#allocation2 + $0x30] sm:$0xf] %vm3672, %v3826
      %4131 = vst.msk [vmem:[#allocation2 + $0x34] sm:$0xf] %vm3672, %v3836
      %4132 = vst.msk [vmem:[#allocation2 + $0x38] sm:$0xf] %vm3672, %v3846
      %4133 = vst.msk [vmem:[#allocation2 + $0x3c] sm:$0xf] %vm3672, %v3856
      %4134 = vst.msk [vmem:[#allocation2 + $0x40] sm:$0xf] %vm3672, %v3866
      %4135 = vst.msk [vmem:[#allocation2 + $0x44] sm:$0xf] %vm3672, %v3876
      %4136 = vst.msk [vmem:[#allocation2 + $0x48] sm:$0xf] %vm3672, %v3886
      %4137 = vst.msk [vmem:[#allocation2 + $0x4c] sm:$0xf] %vm3672, %v3896
      %4138 = vst.msk [vmem:[#allocation2 + $0x50] sm:$0xf] %vm3672, %v3906
      %4139 = vst.msk [vmem:[#allocation2 + $0x54] sm:$0xf] %vm3672, %v3916
      %4140 = vst.msk [vmem:[#allocation2 + $0x58] sm:$0xf] %vm3672, %v3926
      %4141 = vst.msk [vmem:[#allocation2 + $0x5c] sm:$0xf] %vm3672, %v3936
      %4142 = vst.msk [vmem:[#allocation2 + $0x60] sm:$0xf] %vm3672, %v3946
      %4143 = vst.msk [vmem:[#allocation2 + $0x64] sm:$0xf] %vm3672, %v3956
      %4144 = vst.msk [vmem:[#allocation2 + $0x68] sm:$0xf] %vm3672, %v3966
      %4145 = vst.msk [vmem:[#allocation2 + $0x6c] sm:$0xf] %vm3672, %v3976
      %4146 = vst.msk [vmem:[#allocation2 + $0x70] sm:$0xf] %vm3672, %v3986
      %4147 = vst.msk [vmem:[#allocation2 + $0x74] sm:$0xf] %vm3672, %v3996
      %4148 = vst.msk [vmem:[#allocation2 + $0x78] sm:$0xf] %vm3672, %v4006
      %4149 = vst.msk [vmem:[#allocation2 + $0x7c] sm:$0xf] %vm3672, %v4016
      %4150 = vst.msk [vmem:[#allocation2 + $0x80] sm:$0xf] %vm3672, %v4026
      %4151 = vst.msk [vmem:[#allocation2 + $0x84] sm:$0xf] %vm3672, %v4036
      %4152 = vst.msk [vmem:[#allocation2 + $0x88] sm:$0xf] %vm3672, %v4046
      %4153 = vst.msk [vmem:[#allocation2 + $0x8c] sm:$0xf] %vm3672, %v4056
      %4154 = vst.msk [vmem:[#allocation2 + $0x90] sm:$0xf] %vm3672, %v4066
      %4155 = vst.msk [vmem:[#allocation2 + $0x94] sm:$0xf] %vm3672, %v4076
      %v4156 = vld [vmem:[#allocation2 + $0x98] sm:$0x3]
      %v4157 = vsel %vm3677, %v4077, %v4156
      %4158 = vst [vmem:[#allocation2 + $0x98] sm:$0x3] %v4157
      %v4159 = vld [vmem:[#allocation2 + $0x98] sm:$0xe]
      %v4160 = vsel %vm4117, 0, %v4159
      %4161 = vst [vmem:[#allocation2 + $0x98] sm:$0xe] %v4160
      %4162 = vst.msk [vmem:[#allocation2 + $0x9c] sm:$0xf] %vm3672, 0
      %4163 = vst.msk [vmem:[#allocation2 + $0xa0] sm:$0xf] %vm3672, 0
      %v4164 = vld [vmem:[#allocation2] sm:$0xf]
      %v4165 = vld [vmem:[#allocation2 + $0x4] sm:$0xf]
      %v4166 = vld [vmem:[#allocation2 + $0x8] sm:$0xf]
      %v4167 = vld [vmem:[#allocation2 + $0xc] sm:$0xf]
      %v4168 = vld [vmem:[#allocation2 + $0x10] sm:$0xf]
      %v4169 = vld [vmem:[#allocation2 + $0x14] sm:$0xf]
      %v4170 = vld [vmem:[#allocation2 + $0x18] sm:$0xf]
      %v4171 = vld [vmem:[#allocation2 + $0x1c] sm:$0xf]
      %v4172 = vld [vmem:[#allocation2 + $0x20] sm:$0xf]
      %v4173 = vld [vmem:[#allocation2 + $0x24] sm:$0xf]
      %v4174 = vld [vmem:[#allocation2 + $0x28] sm:$0xf]
      %v4175 = vld [vmem:[#allocation2 + $0x2c] sm:$0xf]
      %v4176 = vld [vmem:[#allocation2 + $0x30] sm:$0xf]
      %v4177 = vld [vmem:[#allocation2 + $0x34] sm:$0xf]
      %v4178 = vld [vmem:[#allocation2 + $0x38] sm:$0xf]
      %v4179 = vld [vmem:[#allocation2 + $0x3c] sm:$0xf]
      %v4180 = vld [vmem:[#allocation2 + $0x40] sm:$0xf]
      %v4181 = vld [vmem:[#allocation2 + $0x44] sm:$0xf]
      %v4182 = vld [vmem:[#allocation2 + $0x48] sm:$0xf]
      %v4183 = vld [vmem:[#allocation2 + $0x4c] sm:$0xf]
      %v4184 = vld [vmem:[#allocation2 + $0x50] sm:$0xf]
      %v4185 = vld [vmem:[#allocation2 + $0x54] sm:$0xf]
      %v4186 = vld [vmem:[#allocation2 + $0x58] sm:$0xf]
      %v4187 = vld [vmem:[#allocation2 + $0x5c] sm:$0xf]
      %v4188 = vld [vmem:[#allocation2 + $0x60] sm:$0xf]
      %v4189 = vld [vmem:[#allocation2 + $0x64] sm:$0xf]
      %v4190 = vld [vmem:[#allocation2 + $0x68] sm:$0xf]
      %v4191 = vld [vmem:[#allocation2 + $0x6c] sm:$0xf]
      %v4192 = vld [vmem:[#allocation2 + $0x70] sm:$0xf]
      %v4193 = vld [vmem:[#allocation2 + $0x74] sm:$0xf]
      %v4194 = vld [vmem:[#allocation2 + $0x78] sm:$0xf]
      %v4195 = vld [vmem:[#allocation2 + $0x7c] sm:$0xf]
      %v4196 = vld [vmem:[#allocation2 + $0x80] sm:$0xf]
      %v4197 = vld [vmem:[#allocation2 + $0x84] sm:$0xf]
      %v4198 = vld [vmem:[#allocation2 + $0x88] sm:$0xf]
      %v4199 = vld [vmem:[#allocation2 + $0x8c] sm:$0xf]
      %v4200 = vld [vmem:[%s5] sm:$0xf]
      %v4201 = vld [vmem:[%s5 + $0x4] sm:$0xf]
      %v4202 = vld [vmem:[%s5 + $0x8] sm:$0xf]
      %v4203 = vld [vmem:[%s5 + $0xc] sm:$0xf]
      %v4204 = vld [vmem:[%s5 + $0x10] sm:$0xf]
      %v4205 = vld [vmem:[%s5 + $0x14] sm:$0xf]
      %v4206 = vld [vmem:[%s5 + $0x18] sm:$0xf]
      %v4207 = vld [vmem:[%s5 + $0x1c] sm:$0xf]
      %v4208 = vld [vmem:[#allocation2 + $0x90] sm:$0x1]
      %s4209 = scalar_lea.vmem %s5, 32
      %v4210 = vld [vmem:[%s4209] sm:$0xf]
      %v4211 = vld [vmem:[%s4209 + $0x4] sm:$0xf]
      %v4212 = vld [vmem:[%s4209 + $0x8] sm:$0xf]
      %v4213 = vld [vmem:[%s4209 + $0xc] sm:$0xf]
      %v4214 = vld [vmem:[%s4209 + $0x10] sm:$0xf]
      %v4215 = vld [vmem:[%s4209 + $0x14] sm:$0xf]
      %v4216 = vld [vmem:[%s4209 + $0x18] sm:$0xf]
      %v4217 = vld [vmem:[%s4209 + $0x1c] sm:$0xf]
      %v4255 = vunpack.c.l.b16 %v4164
      %v4256 = vunpack.c.l.b16 %v4165
      %v4257 = vunpack.c.l.b16 %v4166
      %v4258 = vunpack.c.l.b16 %v4167
      %v4259 = vunpack.c.l.b16 %v4168
      %v4260 = vunpack.c.l.b16 %v4169
      %v4261 = vunpack.c.l.b16 %v4170
      %v4262 = vunpack.c.l.b16 %v4171
      %v4263 = vunpack.c.l.b16 %v4172
      %v4264 = vunpack.c.l.b16 %v4173
      %v4265 = vunpack.c.l.b16 %v4174
      %v4266 = vunpack.c.l.b16 %v4175
      %v4267 = vunpack.c.l.b16 %v4176
      %v4268 = vunpack.c.l.b16 %v4177
      %v4269 = vunpack.c.l.b16 %v4178
      %v4270 = vunpack.c.l.b16 %v4179
      %v4271 = vunpack.c.l.b16 %v4180
      %v4272 = vunpack.c.l.b16 %v4181
      %v4273 = vunpack.c.l.b16 %v4182
      %v4274 = vunpack.c.l.b16 %v4183
      %v4275 = vunpack.c.l.b16 %v4184
      %v4276 = vunpack.c.l.b16 %v4185
      %v4277 = vunpack.c.l.b16 %v4186
      %v4278 = vunpack.c.l.b16 %v4187
      %v4279 = vunpack.c.l.b16 %v4188
      %v4280 = vunpack.c.l.b16 %v4189
      %v4281 = vunpack.c.l.b16 %v4190
      %v4282 = vunpack.c.l.b16 %v4191
      %v4283 = vunpack.c.l.b16 %v4192
      %v4284 = vunpack.c.l.b16 %v4193
      %v4285 = vunpack.c.l.b16 %v4194
      %v4286 = vunpack.c.l.b16 %v4195
      %v4287 = vunpack.c.l.b16 %v4196
      %v4288 = vunpack.c.l.b16 %v4197
      %v4289 = vunpack.c.l.b16 %v4198
      %v4290 = vunpack.c.l.b16 %v4199
      %v4291 = vunpack.c.l.b16 %v4208
      %v4292 = vpack.c.b16 %v4256, %v4255
      %v4293 = vpack.c.b16 %v4258, %v4257
      %v4294 = vpack.c.b16 %v4260, %v4259
      %v4295 = vpack.c.b16 %v4262, %v4261
      %v4296 = vpack.c.b16 %v4264, %v4263
      %v4297 = vpack.c.b16 %v4266, %v4265
      %v4298 = vpack.c.b16 %v4268, %v4267
      %v4299 = vpack.c.b16 %v4270, %v4269
      %v4300 = vpack.c.b16 %v4272, %v4271
      %v4301 = vpack.c.b16 %v4274, %v4273
      %v4302 = vpack.c.b16 %v4276, %v4275
      %v4303 = vpack.c.b16 %v4278, %v4277
      %v4304 = vpack.c.b16 %v4280, %v4279
      %v4305 = vpack.c.b16 %v4282, %v4281
      %v4306 = vpack.c.b16 %v4284, %v4283
      %v4307 = vpack.c.b16 %v4286, %v4285
      %v4308 = vpack.c.b16 %v4288, %v4287
      %v4309 = vpack.c.b16 %v4290, %v4289
      %v4310 = vpack.c.b16 %v4291, %v4291
      %v4312 = vshrl.u32 %v4292, 16
      %v4314 = vshll.u32 %v4292, 16
      %v4316 = vrot.slane %v4314, 1
      %v4317 = vor.u32 %v4312, %v4316
      %v4319 = vshll.u32 %v4293, 16
      %v4321 = vrot.slane %v4319, 1
      %v4322 = vsel %vm454, %v4317, %v4321
      %v4323 = vshrl.u32 %v4293, 16
      %v4325 = vor.u32 %v4323, %v4321
      %v4327 = vshll.u32 %v4294, 16
      %v4329 = vrot.slane %v4327, 1
      %v4330 = vsel %vm454, %v4325, %v4329
      %v4331 = vshrl.u32 %v4294, 16
      %v4333 = vor.u32 %v4331, %v4329
      %v4335 = vshll.u32 %v4295, 16
      %v4337 = vrot.slane %v4335, 1
      %v4338 = vsel %vm454, %v4333, %v4337
      %v4339 = vshrl.u32 %v4295, 16
      %v4341 = vor.u32 %v4339, %v4337
      %v4343 = vshll.u32 %v4296, 16
      %v4345 = vrot.slane %v4343, 1
      %v4346 = vsel %vm454, %v4341, %v4345
      %v4347 = vshrl.u32 %v4296, 16
      %v4349 = vor.u32 %v4347, %v4345
      %v4351 = vshll.u32 %v4297, 16
      %v4353 = vrot.slane %v4351, 1
      %v4354 = vsel %vm454, %v4349, %v4353
      %v4355 = vshrl.u32 %v4297, 16
      %v4357 = vor.u32 %v4355, %v4353
      %v4359 = vshll.u32 %v4298, 16
      %v4361 = vrot.slane %v4359, 1
      %v4362 = vsel %vm454, %v4357, %v4361
      %v4363 = vshrl.u32 %v4298, 16
      %v4365 = vor.u32 %v4363, %v4361
      %v4367 = vshll.u32 %v4299, 16
      %v4369 = vrot.slane %v4367, 1
      %v4370 = vsel %vm454, %v4365, %v4369
      %v4371 = vshrl.u32 %v4299, 16
      %v4373 = vor.u32 %v4371, %v4369
      %v4375 = vshll.u32 %v4300, 16
      %v4377 = vrot.slane %v4375, 1
      %v4378 = vsel %vm454, %v4373, %v4377
      %v4379 = vshrl.u32 %v4300, 16
      %v4381 = vor.u32 %v4379, %v4377
      %v4383 = vshll.u32 %v4301, 16
      %v4385 = vrot.slane %v4383, 1
      %v4386 = vsel %vm454, %v4381, %v4385
      %v4387 = vshrl.u32 %v4301, 16
      %v4389 = vor.u32 %v4387, %v4385
      %v4391 = vshll.u32 %v4302, 16
      %v4393 = vrot.slane %v4391, 1
      %v4394 = vsel %vm454, %v4389, %v4393
      %v4395 = vshrl.u32 %v4302, 16
      %v4397 = vor.u32 %v4395, %v4393
      %v4399 = vshll.u32 %v4303, 16
      %v4401 = vrot.slane %v4399, 1
      %v4402 = vsel %vm454, %v4397, %v4401
      %v4403 = vshrl.u32 %v4303, 16
      %v4405 = vor.u32 %v4403, %v4401
      %v4407 = vshll.u32 %v4304, 16
      %v4409 = vrot.slane %v4407, 1
      %v4410 = vsel %vm454, %v4405, %v4409
      %v4411 = vshrl.u32 %v4304, 16
      %v4413 = vor.u32 %v4411, %v4409
      %v4415 = vshll.u32 %v4305, 16
      %v4417 = vrot.slane %v4415, 1
      %v4418 = vsel %vm454, %v4413, %v4417
      %v4419 = vshrl.u32 %v4305, 16
      %v4421 = vor.u32 %v4419, %v4417
      %v4423 = vshll.u32 %v4306, 16
      %v4425 = vrot.slane %v4423, 1
      %v4426 = vsel %vm454, %v4421, %v4425
      %v4427 = vshrl.u32 %v4306, 16
      %v4429 = vor.u32 %v4427, %v4425
      %v4431 = vshll.u32 %v4307, 16
      %v4433 = vrot.slane %v4431, 1
      %v4434 = vsel %vm454, %v4429, %v4433
      %v4435 = vshrl.u32 %v4307, 16
      %v4437 = vor.u32 %v4435, %v4433
      %v4439 = vshll.u32 %v4308, 16
      %v4441 = vrot.slane %v4439, 1
      %v4442 = vsel %vm454, %v4437, %v4441
      %v4443 = vshrl.u32 %v4308, 16
      %v4445 = vor.u32 %v4443, %v4441
      %v4447 = vshll.u32 %v4309, 16
      %v4449 = vrot.slane %v4447, 1
      %v4450 = vsel %vm454, %v4445, %v4449
      %v4451 = vshrl.u32 %v4309, 16
      %v4453 = vor.u32 %v4451, %v4449
      %v4455 = vshll.u32 %v4310, 16
      %v4457 = vrot.slane %v4455, 1
      %v4458 = vsel %vm454, %v4453, %v4457
      %v4467 = vunpack.c.l.b16 %v4210
      %v4468 = vunpack.c.l.b16 %v4211
      %v4469 = vunpack.c.l.b16 %v4212
      %v4470 = vunpack.c.l.b16 %v4213
      %v4471 = vunpack.c.l.b16 %v4214
      %v4472 = vunpack.c.l.b16 %v4215
      %v4473 = vunpack.c.l.b16 %v4216
      %v4474 = vunpack.c.l.b16 %v4217
      %v4475 = vpack.c.b16 %v4468, %v4467
      %v4476 = vpack.c.b16 %v4470, %v4469
      %v4477 = vpack.c.b16 %v4472, %v4471
      %v4478 = vpack.c.b16 %v4474, %v4473
      %v4484 = vsel %vm627, %v4322, 0
      %v4487 = vsel %vm627, %v4330, 0
      %v4490 = vsel %vm627, %v4338, 0
      %v4493 = vsel %vm627, %v4346, 0
      %v4496 = vsel %vm627, %v4354, 0
      %v4499 = vsel %vm627, %v4362, 0
      %v4502 = vsel %vm627, %v4370, 0
      %v4505 = vsel %vm627, %v4378, 0
      %v4508 = vsel %vm627, %v4386, 0
      %v4511 = vsel %vm627, %v4394, 0
      %v4514 = vsel %vm627, %v4402, 0
      %v4517 = vsel %vm627, %v4410, 0
      %v4520 = vsel %vm627, %v4418, 0
      %v4523 = vsel %vm627, %v4426, 0
      %v4526 = vsel %vm627, %v4434, 0
      %v4529 = vsel %vm627, %v4442, 0
      %v4532 = vsel %vm627, %v4450, 0
      %v4535 = vsel %vm627, %v4458, 0
      %4537 = vmatpush.bf16.msra.mxu0 0
      %4538 = vmatpush.bf16.msra.mxu0 0
      %4539 = vmatpush.bf16.msra.mxu0 0
      %4540 = vmatpush.bf16.msra.mxu0 0
      %4541 = vmatpush.bf16.msra.mxu0 %v4478
      %4542 = vmatpush.bf16.msra.mxu0 %v4477
      %4543 = vmatpush.bf16.msra.mxu0 %v4476
      %4544 = vmatpush.bf16.msra.mxu0 %v4475
      %4545 = vmatmul.bf16.gmra.mxu0 %v4484
      %v4546 = vpop.f32.mrf.mxu0
      %v4547 = vadd.f32 0.0, %v4546
      %v4548 = vpop.f32.mrf.mxu0
      %v4549 = vadd.f32 0.0, %v4548
      %4550 = vmatmul.bf16.gmra.mxu0 %v4487
      %v4551 = vpop.f32.mrf.mxu0
      %v4552 = vadd.f32 0.0, %v4551
      %v4553 = vpop.f32.mrf.mxu0
      %v4554 = vadd.f32 0.0, %v4553
      %4555 = vmatmul.bf16.gmra.mxu0 %v4490
      %v4556 = vpop.f32.mrf.mxu0
      %v4557 = vadd.f32 0.0, %v4556
      %v4558 = vpop.f32.mrf.mxu0
      %v4559 = vadd.f32 0.0, %v4558
      %4560 = vmatmul.bf16.gmra.mxu0 %v4493
      %v4561 = vpop.f32.mrf.mxu0
      %v4562 = vadd.f32 0.0, %v4561
      %v4563 = vpop.f32.mrf.mxu0
      %v4564 = vadd.f32 0.0, %v4563
      %4565 = vmatmul.bf16.gmra.mxu0 %v4496
      %v4566 = vpop.f32.mrf.mxu0
      %v4567 = vadd.f32 0.0, %v4566
      %v4568 = vpop.f32.mrf.mxu0
      %v4569 = vadd.f32 0.0, %v4568
      %4570 = vmatmul.bf16.gmra.mxu0 %v4499
      %v4571 = vpop.f32.mrf.mxu0
      %v4572 = vadd.f32 0.0, %v4571
      %v4573 = vpop.f32.mrf.mxu0
      %v4574 = vadd.f32 0.0, %v4573
      %4575 = vmatmul.bf16.gmra.mxu0 %v4502
      %v4576 = vpop.f32.mrf.mxu0
      %v4577 = vadd.f32 0.0, %v4576
      %v4578 = vpop.f32.mrf.mxu0
      %v4579 = vadd.f32 0.0, %v4578
      %4580 = vmatmul.bf16.gmra.mxu0 %v4505
      %v4581 = vpop.f32.mrf.mxu0
      %v4582 = vadd.f32 0.0, %v4581
      %v4583 = vpop.f32.mrf.mxu0
      %v4584 = vadd.f32 0.0, %v4583
      %4585 = vmatmul.bf16.gmra.mxu0 %v4508
      %v4586 = vpop.f32.mrf.mxu0
      %v4587 = vadd.f32 0.0, %v4586
      %v4588 = vpop.f32.mrf.mxu0
      %v4589 = vadd.f32 0.0, %v4588
      %4590 = vmatmul.bf16.gmra.mxu0 %v4511
      %v4591 = vpop.f32.mrf.mxu0
      %v4592 = vadd.f32 0.0, %v4591
      %v4593 = vpop.f32.mrf.mxu0
      %v4594 = vadd.f32 0.0, %v4593
      %4595 = vmatmul.bf16.gmra.mxu0 %v4514
      %v4596 = vpop.f32.mrf.mxu0
      %v4597 = vadd.f32 0.0, %v4596
      %v4598 = vpop.f32.mrf.mxu0
      %v4599 = vadd.f32 0.0, %v4598
      %4600 = vmatmul.bf16.gmra.mxu0 %v4517
      %v4601 = vpop.f32.mrf.mxu0
      %v4602 = vadd.f32 0.0, %v4601
      %v4603 = vpop.f32.mrf.mxu0
      %v4604 = vadd.f32 0.0, %v4603
      %4605 = vmatmul.bf16.gmra.mxu0 %v4520
      %v4606 = vpop.f32.mrf.mxu0
      %v4607 = vadd.f32 0.0, %v4606
      %v4608 = vpop.f32.mrf.mxu0
      %v4609 = vadd.f32 0.0, %v4608
      %4610 = vmatmul.bf16.gmra.mxu0 %v4523
      %v4611 = vpop.f32.mrf.mxu0
      %v4612 = vadd.f32 0.0, %v4611
      %v4613 = vpop.f32.mrf.mxu0
      %v4614 = vadd.f32 0.0, %v4613
      %4615 = vmatmul.bf16.gmra.mxu0 %v4526
      %v4616 = vpop.f32.mrf.mxu0
      %v4617 = vadd.f32 0.0, %v4616
      %v4618 = vpop.f32.mrf.mxu0
      %v4619 = vadd.f32 0.0, %v4618
      %4620 = vmatmul.bf16.gmra.mxu0 %v4529
      %v4621 = vpop.f32.mrf.mxu0
      %v4622 = vadd.f32 0.0, %v4621
      %v4623 = vpop.f32.mrf.mxu0
      %v4624 = vadd.f32 0.0, %v4623
      %4625 = vmatmul.bf16.gmra.mxu0 %v4532
      %v4626 = vpop.f32.mrf.mxu0
      %v4627 = vadd.f32 0.0, %v4626
      %v4628 = vpop.f32.mrf.mxu0
      %v4629 = vadd.f32 0.0, %v4628
      %4630 = vmatmul.bf16.gmra.mxu0 %v4535
      %v4631 = vpop.f32.mrf.mxu0
      %v4632 = vadd.f32 0.0, %v4631
      %v4633 = vpop.f32.mrf.mxu0
      %v4634 = vadd.f32 0.0, %v4633
      %4635 = vdwg.mxu0
      %v4644 = vunpack.c.l.b16 %v4200
      %v4645 = vunpack.c.l.b16 %v4201
      %v4646 = vunpack.c.l.b16 %v4202
      %v4647 = vunpack.c.l.b16 %v4203
      %v4648 = vunpack.c.l.b16 %v4204
      %v4649 = vunpack.c.l.b16 %v4205
      %v4650 = vunpack.c.l.b16 %v4206
      %v4651 = vunpack.c.l.b16 %v4207
      %v4652 = vpack.c.b16 %v4645, %v4644
      %v4653 = vpack.c.b16 %v4647, %v4646
      %v4654 = vpack.c.b16 %v4649, %v4648
      %v4655 = vpack.c.b16 %v4651, %v4650
      %v4660 = vsel %vm627, %v4292, 0
      %v4662 = vsel %vm627, %v4293, 0
      %v4664 = vsel %vm627, %v4294, 0
      %v4666 = vsel %vm627, %v4295, 0
      %v4668 = vsel %vm627, %v4296, 0
      %v4670 = vsel %vm627, %v4297, 0
      %v4672 = vsel %vm627, %v4298, 0
      %v4674 = vsel %vm627, %v4299, 0
      %v4676 = vsel %vm627, %v4300, 0
      %v4678 = vsel %vm627, %v4301, 0
      %v4680 = vsel %vm627, %v4302, 0
      %v4682 = vsel %vm627, %v4303, 0
      %v4684 = vsel %vm627, %v4304, 0
      %v4686 = vsel %vm627, %v4305, 0
      %v4688 = vsel %vm627, %v4306, 0
      %v4690 = vsel %vm627, %v4307, 0
      %v4692 = vsel %vm627, %v4308, 0
      %v4694 = vsel %vm627, %v4309, 0
      %4696 = vmatpush.bf16.msra.mxu0 0
      %4697 = vmatpush.bf16.msra.mxu0 0
      %4698 = vmatpush.bf16.msra.mxu0 0
      %4699 = vmatpush.bf16.msra.mxu0 0
      %4700 = vmatpush.bf16.msra.mxu0 %v4655
      %4701 = vmatpush.bf16.msra.mxu0 %v4654
      %4702 = vmatpush.bf16.msra.mxu0 %v4653
      %4703 = vmatpush.bf16.msra.mxu0 %v4652
      %4704 = vmatmul.bf16.gmra.mxu0 %v4660
      %v4705 = vpop.f32.mrf.mxu0
      %v4706 = vadd.f32 %v4547, %v4705
      %v4707 = vpop.f32.mrf.mxu0
      %v4708 = vadd.f32 %v4549, %v4707
      %4709 = vmatmul.bf16.gmra.mxu0 %v4662
      %v4710 = vpop.f32.mrf.mxu0
      %v4711 = vadd.f32 %v4552, %v4710
      %v4712 = vpop.f32.mrf.mxu0
      %v4713 = vadd.f32 %v4554, %v4712
      %4714 = vmatmul.bf16.gmra.mxu0 %v4664
      %v4715 = vpop.f32.mrf.mxu0
      %v4716 = vadd.f32 %v4557, %v4715
      %v4717 = vpop.f32.mrf.mxu0
      %v4718 = vadd.f32 %v4559, %v4717
      %4719 = vmatmul.bf16.gmra.mxu0 %v4666
      %v4720 = vpop.f32.mrf.mxu0
      %v4721 = vadd.f32 %v4562, %v4720
      %v4722 = vpop.f32.mrf.mxu0
      %v4723 = vadd.f32 %v4564, %v4722
      %4724 = vmatmul.bf16.gmra.mxu0 %v4668
      %v4725 = vpop.f32.mrf.mxu0
      %v4726 = vadd.f32 %v4567, %v4725
      %v4727 = vpop.f32.mrf.mxu0
      %v4728 = vadd.f32 %v4569, %v4727
      %4729 = vmatmul.bf16.gmra.mxu0 %v4670
      %v4730 = vpop.f32.mrf.mxu0
      %v4731 = vadd.f32 %v4572, %v4730
      %v4732 = vpop.f32.mrf.mxu0
      %v4733 = vadd.f32 %v4574, %v4732
      %4734 = vmatmul.bf16.gmra.mxu0 %v4672
      %v4735 = vpop.f32.mrf.mxu0
      %v4736 = vadd.f32 %v4577, %v4735
      %v4737 = vpop.f32.mrf.mxu0
      %v4738 = vadd.f32 %v4579, %v4737
      %4739 = vmatmul.bf16.gmra.mxu0 %v4674
      %v4740 = vpop.f32.mrf.mxu0
      %v4741 = vadd.f32 %v4582, %v4740
      %v4742 = vpop.f32.mrf.mxu0
      %v4743 = vadd.f32 %v4584, %v4742
      %4744 = vmatmul.bf16.gmra.mxu0 %v4676
      %v4745 = vpop.f32.mrf.mxu0
      %v4746 = vadd.f32 %v4587, %v4745
      %v4747 = vpop.f32.mrf.mxu0
      %v4748 = vadd.f32 %v4589, %v4747
      %4749 = vmatmul.bf16.gmra.mxu0 %v4678
      %v4750 = vpop.f32.mrf.mxu0
      %v4751 = vadd.f32 %v4592, %v4750
      %v4752 = vpop.f32.mrf.mxu0
      %v4753 = vadd.f32 %v4594, %v4752
      %4754 = vmatmul.bf16.gmra.mxu0 %v4680
      %v4755 = vpop.f32.mrf.mxu0
      %v4756 = vadd.f32 %v4597, %v4755
      %v4757 = vpop.f32.mrf.mxu0
      %v4758 = vadd.f32 %v4599, %v4757
      %4759 = vmatmul.bf16.gmra.mxu0 %v4682
      %v4760 = vpop.f32.mrf.mxu0
      %v4761 = vadd.f32 %v4602, %v4760
      %v4762 = vpop.f32.mrf.mxu0
      %v4763 = vadd.f32 %v4604, %v4762
      %4764 = vmatmul.bf16.gmra.mxu0 %v4684
      %v4765 = vpop.f32.mrf.mxu0
      %v4766 = vadd.f32 %v4607, %v4765
      %v4767 = vpop.f32.mrf.mxu0
      %v4768 = vadd.f32 %v4609, %v4767
      %4769 = vmatmul.bf16.gmra.mxu0 %v4686
      %v4770 = vpop.f32.mrf.mxu0
      %v4771 = vadd.f32 %v4612, %v4770
      %v4772 = vpop.f32.mrf.mxu0
      %v4773 = vadd.f32 %v4614, %v4772
      %4774 = vmatmul.bf16.gmra.mxu0 %v4688
      %v4775 = vpop.f32.mrf.mxu0
      %v4776 = vadd.f32 %v4617, %v4775
      %v4777 = vpop.f32.mrf.mxu0
      %v4778 = vadd.f32 %v4619, %v4777
      %4779 = vmatmul.bf16.gmra.mxu0 %v4690
      %v4780 = vpop.f32.mrf.mxu0
      %v4781 = vadd.f32 %v4622, %v4780
      %v4782 = vpop.f32.mrf.mxu0
      %v4783 = vadd.f32 %v4624, %v4782
      %4784 = vmatmul.bf16.gmra.mxu0 %v4692
      %v4785 = vpop.f32.mrf.mxu0
      %v4786 = vadd.f32 %v4627, %v4785
      %v4787 = vpop.f32.mrf.mxu0
      %v4788 = vadd.f32 %v4629, %v4787
      %4789 = vmatmul.bf16.gmra.mxu0 %v4694
      %v4790 = vpop.f32.mrf.mxu0
      %v4791 = vadd.f32 %v4632, %v4790
      %v4792 = vpop.f32.mrf.mxu0
      %v4793 = vadd.f32 %v4634, %v4792
      %4794 = vdwg.mxu0
      %v4795 = vld [vmem:[#allocation2] sm:$0xe]
      %s4796 = scalar_lea.vmem %s5, 64
      %v4797 = vld [vmem:[%s4796] sm:$0xf]
      %v4798 = vld [vmem:[%s4796 + $0x4] sm:$0xf]
      %v4799 = vld [vmem:[%s4796 + $0x8] sm:$0xf]
      %v4800 = vld [vmem:[%s4796 + $0xc] sm:$0xf]
      %v4801 = vld [vmem:[%s4796 + $0x10] sm:$0xf]
      %v4802 = vld [vmem:[%s4796 + $0x14] sm:$0xf]
      %v4803 = vld [vmem:[%s4796 + $0x18] sm:$0xf]
      %v4804 = vld [vmem:[%s4796 + $0x1c] sm:$0xf]
      %v4806 = vunpack.c.l.b16 %v4795
      %v4807 = vpack.c.b16 %v4256, %v4806
      %v4808 = vrot.slane %v4807, 1
      %v4809 = vrot.slane %v4293, 1
      %v4810 = vsel %vm953, %v4808, %v4809
      %v4811 = vrot.slane %v4294, 1
      %v4812 = vsel %vm953, %v4809, %v4811
      %v4813 = vrot.slane %v4295, 1
      %v4814 = vsel %vm953, %v4811, %v4813
      %v4815 = vrot.slane %v4296, 1
      %v4816 = vsel %vm953, %v4813, %v4815
      %v4817 = vrot.slane %v4297, 1
      %v4818 = vsel %vm953, %v4815, %v4817
      %v4819 = vrot.slane %v4298, 1
      %v4820 = vsel %vm953, %v4817, %v4819
      %v4821 = vrot.slane %v4299, 1
      %v4822 = vsel %vm953, %v4819, %v4821
      %v4823 = vrot.slane %v4300, 1
      %v4824 = vsel %vm953, %v4821, %v4823
      %v4825 = vrot.slane %v4301, 1
      %v4826 = vsel %vm953, %v4823, %v4825
      %v4827 = vrot.slane %v4302, 1
      %v4828 = vsel %vm953, %v4825, %v4827
      %v4829 = vrot.slane %v4303, 1
      %v4830 = vsel %vm953, %v4827, %v4829
      %v4831 = vrot.slane %v4304, 1
      %v4832 = vsel %vm953, %v4829, %v4831
      %v4833 = vrot.slane %v4305, 1
      %v4834 = vsel %vm953, %v4831, %v4833
      %v4835 = vrot.slane %v4306, 1
      %v4836 = vsel %vm953, %v4833, %v4835
      %v4837 = vrot.slane %v4307, 1
      %v4838 = vsel %vm953, %v4835, %v4837
      %v4839 = vrot.slane %v4308, 1
      %v4840 = vsel %vm953, %v4837, %v4839
      %v4841 = vrot.slane %v4309, 1
      %v4842 = vsel %vm953, %v4839, %v4841
      %v4843 = vrot.slane %v4310, 1
      %v4844 = vsel %vm953, %v4841, %v4843
      %v4853 = vunpack.c.l.b16 %v4797
      %v4854 = vunpack.c.l.b16 %v4798
      %v4855 = vunpack.c.l.b16 %v4799
      %v4856 = vunpack.c.l.b16 %v4800
      %v4857 = vunpack.c.l.b16 %v4801
      %v4858 = vunpack.c.l.b16 %v4802
      %v4859 = vunpack.c.l.b16 %v4803
      %v4860 = vunpack.c.l.b16 %v4804
      %v4861 = vpack.c.b16 %v4854, %v4853
      %v4862 = vpack.c.b16 %v4856, %v4855
      %v4863 = vpack.c.b16 %v4858, %v4857
      %v4864 = vpack.c.b16 %v4860, %v4859
      %v4870 = vsel %vm627, %v4810, 0
      %v4873 = vsel %vm627, %v4812, 0
      %v4876 = vsel %vm627, %v4814, 0
      %v4879 = vsel %vm627, %v4816, 0
      %v4882 = vsel %vm627, %v4818, 0
      %v4885 = vsel %vm627, %v4820, 0
      %v4888 = vsel %vm627, %v4822, 0
      %v4891 = vsel %vm627, %v4824, 0
      %v4894 = vsel %vm627, %v4826, 0
      %v4897 = vsel %vm627, %v4828, 0
      %v4900 = vsel %vm627, %v4830, 0
      %v4903 = vsel %vm627, %v4832, 0
      %v4906 = vsel %vm627, %v4834, 0
      %v4909 = vsel %vm627, %v4836, 0
      %v4912 = vsel %vm627, %v4838, 0
      %v4915 = vsel %vm627, %v4840, 0
      %v4918 = vsel %vm627, %v4842, 0
      %v4921 = vsel %vm627, %v4844, 0
      %4923 = vmatpush.bf16.msra.mxu0 0
      %4924 = vmatpush.bf16.msra.mxu0 0
      %4925 = vmatpush.bf16.msra.mxu0 0
      %4926 = vmatpush.bf16.msra.mxu0 0
      %4927 = vmatpush.bf16.msra.mxu0 %v4864
      %4928 = vmatpush.bf16.msra.mxu0 %v4863
      %4929 = vmatpush.bf16.msra.mxu0 %v4862
      %4930 = vmatpush.bf16.msra.mxu0 %v4861
      %4931 = vmatmul.bf16.gmra.mxu0 %v4870
      %v4932 = vpop.f32.mrf.mxu0
      %v4933 = vadd.f32 0.0, %v4932
      %v4934 = vpop.f32.mrf.mxu0
      %v4935 = vadd.f32 0.0, %v4934
      %4936 = vmatmul.bf16.gmra.mxu0 %v4873
      %v4937 = vpop.f32.mrf.mxu0
      %v4938 = vadd.f32 0.0, %v4937
      %v4939 = vpop.f32.mrf.mxu0
      %v4940 = vadd.f32 0.0, %v4939
      %4941 = vmatmul.bf16.gmra.mxu0 %v4876
      %v4942 = vpop.f32.mrf.mxu0
      %v4943 = vadd.f32 0.0, %v4942
      %v4944 = vpop.f32.mrf.mxu0
      %v4945 = vadd.f32 0.0, %v4944
      %4946 = vmatmul.bf16.gmra.mxu0 %v4879
      %v4947 = vpop.f32.mrf.mxu0
      %v4948 = vadd.f32 0.0, %v4947
      %v4949 = vpop.f32.mrf.mxu0
      %v4950 = vadd.f32 0.0, %v4949
      %4951 = vmatmul.bf16.gmra.mxu0 %v4882
      %v4952 = vpop.f32.mrf.mxu0
      %v4953 = vadd.f32 0.0, %v4952
      %v4954 = vpop.f32.mrf.mxu0
      %v4955 = vadd.f32 0.0, %v4954
      %4956 = vmatmul.bf16.gmra.mxu0 %v4885
      %v4957 = vpop.f32.mrf.mxu0
      %v4958 = vadd.f32 0.0, %v4957
      %v4959 = vpop.f32.mrf.mxu0
      %v4960 = vadd.f32 0.0, %v4959
      %4961 = vmatmul.bf16.gmra.mxu0 %v4888
      %v4962 = vpop.f32.mrf.mxu0
      %v4963 = vadd.f32 0.0, %v4962
      %v4964 = vpop.f32.mrf.mxu0
      %v4965 = vadd.f32 0.0, %v4964
      %4966 = vmatmul.bf16.gmra.mxu0 %v4891
      %v4967 = vpop.f32.mrf.mxu0
      %v4968 = vadd.f32 0.0, %v4967
      %v4969 = vpop.f32.mrf.mxu0
      %v4970 = vadd.f32 0.0, %v4969
      %4971 = vmatmul.bf16.gmra.mxu0 %v4894
      %v4972 = vpop.f32.mrf.mxu0
      %v4973 = vadd.f32 0.0, %v4972
      %v4974 = vpop.f32.mrf.mxu0
      %v4975 = vadd.f32 0.0, %v4974
      %4976 = vmatmul.bf16.gmra.mxu0 %v4897
      %v4977 = vpop.f32.mrf.mxu0
      %v4978 = vadd.f32 0.0, %v4977
      %v4979 = vpop.f32.mrf.mxu0
      %v4980 = vadd.f32 0.0, %v4979
      %4981 = vmatmul.bf16.gmra.mxu0 %v4900
      %v4982 = vpop.f32.mrf.mxu0
      %v4983 = vadd.f32 0.0, %v4982
      %v4984 = vpop.f32.mrf.mxu0
      %v4985 = vadd.f32 0.0, %v4984
      %4986 = vmatmul.bf16.gmra.mxu0 %v4903
      %v4987 = vpop.f32.mrf.mxu0
      %v4988 = vadd.f32 0.0, %v4987
      %v4989 = vpop.f32.mrf.mxu0
      %v4990 = vadd.f32 0.0, %v4989
      %4991 = vmatmul.bf16.gmra.mxu0 %v4906
      %v4992 = vpop.f32.mrf.mxu0
      %v4993 = vadd.f32 0.0, %v4992
      %v4994 = vpop.f32.mrf.mxu0
      %v4995 = vadd.f32 0.0, %v4994
      %4996 = vmatmul.bf16.gmra.mxu0 %v4909
      %v4997 = vpop.f32.mrf.mxu0
      %v4998 = vadd.f32 0.0, %v4997
      %v4999 = vpop.f32.mrf.mxu0
      %v5000 = vadd.f32 0.0, %v4999
      %5001 = vmatmul.bf16.gmra.mxu0 %v4912
      %v5002 = vpop.f32.mrf.mxu0
      %v5003 = vadd.f32 0.0, %v5002
      %v5004 = vpop.f32.mrf.mxu0
      %v5005 = vadd.f32 0.0, %v5004
      %5006 = vmatmul.bf16.gmra.mxu0 %v4915
      %v5007 = vpop.f32.mrf.mxu0
      %v5008 = vadd.f32 0.0, %v5007
      %v5009 = vpop.f32.mrf.mxu0
      %v5010 = vadd.f32 0.0, %v5009
      %5011 = vmatmul.bf16.gmra.mxu0 %v4918
      %v5012 = vpop.f32.mrf.mxu0
      %v5013 = vadd.f32 0.0, %v5012
      %v5014 = vpop.f32.mrf.mxu0
      %v5015 = vadd.f32 0.0, %v5014
      %5016 = vmatmul.bf16.gmra.mxu0 %v4921
      %v5017 = vpop.f32.mrf.mxu0
      %v5018 = vadd.f32 0.0, %v5017
      %v5019 = vpop.f32.mrf.mxu0
      %v5020 = vadd.f32 0.0, %v5019
      %5021 = vdwg.mxu0
      %v5022 = vadd.f32 %v4706, %v4933
      %v5023 = vadd.f32 %v4708, %v4935
      %v5024 = vadd.f32 %v4711, %v4938
      %v5025 = vadd.f32 %v4713, %v4940
      %v5026 = vadd.f32 %v4716, %v4943
      %v5027 = vadd.f32 %v4718, %v4945
      %v5028 = vadd.f32 %v4721, %v4948
      %v5029 = vadd.f32 %v4723, %v4950
      %v5030 = vadd.f32 %v4726, %v4953
      %v5031 = vadd.f32 %v4728, %v4955
      %v5032 = vadd.f32 %v4731, %v4958
      %v5033 = vadd.f32 %v4733, %v4960
      %v5034 = vadd.f32 %v4736, %v4963
      %v5035 = vadd.f32 %v4738, %v4965
      %v5036 = vadd.f32 %v4741, %v4968
      %v5037 = vadd.f32 %v4743, %v4970
      %v5038 = vadd.f32 %v4746, %v4973
      %v5039 = vadd.f32 %v4748, %v4975
      %v5040 = vadd.f32 %v4751, %v4978
      %v5041 = vadd.f32 %v4753, %v4980
      %v5042 = vadd.f32 %v4756, %v4983
      %v5043 = vadd.f32 %v4758, %v4985
      %v5044 = vadd.f32 %v4761, %v4988
      %v5045 = vadd.f32 %v4763, %v4990
      %v5046 = vadd.f32 %v4766, %v4993
      %v5047 = vadd.f32 %v4768, %v4995
      %v5048 = vadd.f32 %v4771, %v4998
      %v5049 = vadd.f32 %v4773, %v5000
      %v5050 = vadd.f32 %v4776, %v5003
      %v5051 = vadd.f32 %v4778, %v5005
      %v5052 = vadd.f32 %v4781, %v5008
      %v5053 = vadd.f32 %v4783, %v5010
      %v5054 = vadd.f32 %v4786, %v5013
      %v5055 = vadd.f32 %v4788, %v5015
      %v5056 = vadd.f32 %v4791, %v5018
      %v5057 = vadd.f32 %v4793, %v5020
      %v5058 = vld [vmem:[#allocation2 + $0x8] sm:$0xe]
      %v5059 = vld [vmem:[#allocation2 + $0xc] sm:$0xf]
      %v5060 = vld [vmem:[#allocation2 + $0x10] sm:$0xf]
      %v5061 = vld [vmem:[#allocation2 + $0x14] sm:$0xf]
      %v5062 = vld [vmem:[#allocation2 + $0x18] sm:$0xf]
      %v5063 = vld [vmem:[#allocation2 + $0x1c] sm:$0xf]
      %v5064 = vld [vmem:[#allocation2 + $0x20] sm:$0xf]
      %v5065 = vld [vmem:[#allocation2 + $0x24] sm:$0xf]
      %v5066 = vld [vmem:[#allocation2 + $0x28] sm:$0xf]
      %v5067 = vld [vmem:[#allocation2 + $0x2c] sm:$0xf]
      %v5068 = vld [vmem:[#allocation2 + $0x30] sm:$0xf]
      %v5069 = vld [vmem:[#allocation2 + $0x34] sm:$0xf]
      %v5070 = vld [vmem:[#allocation2 + $0x38] sm:$0xf]
      %v5071 = vld [vmem:[#allocation2 + $0x3c] sm:$0xf]
      %v5072 = vld [vmem:[#allocation2 + $0x40] sm:$0xf]
      %v5073 = vld [vmem:[#allocation2 + $0x44] sm:$0xf]
      %v5074 = vld [vmem:[#allocation2 + $0x48] sm:$0xf]
      %v5075 = vld [vmem:[#allocation2 + $0x4c] sm:$0xf]
      %v5076 = vld [vmem:[#allocation2 + $0x50] sm:$0xf]
      %v5077 = vld [vmem:[#allocation2 + $0x54] sm:$0xf]
      %v5078 = vld [vmem:[#allocation2 + $0x58] sm:$0xf]
      %v5079 = vld [vmem:[#allocation2 + $0x5c] sm:$0xf]
      %v5080 = vld [vmem:[#allocation2 + $0x60] sm:$0xf]
      %v5081 = vld [vmem:[#allocation2 + $0x64] sm:$0xf]
      %v5082 = vld [vmem:[#allocation2 + $0x68] sm:$0xf]
      %v5083 = vld [vmem:[#allocation2 + $0x6c] sm:$0xf]
      %v5084 = vld [vmem:[#allocation2 + $0x70] sm:$0xf]
      %v5085 = vld [vmem:[#allocation2 + $0x74] sm:$0xf]
      %v5086 = vld [vmem:[#allocation2 + $0x78] sm:$0xf]
      %v5087 = vld [vmem:[#allocation2 + $0x7c] sm:$0xf]
      %v5088 = vld [vmem:[#allocation2 + $0x80] sm:$0xf]
      %v5089 = vld [vmem:[#allocation2 + $0x84] sm:$0xf]
      %v5090 = vld [vmem:[#allocation2 + $0x88] sm:$0xf]
      %v5091 = vld [vmem:[#allocation2 + $0x8c] sm:$0xf]
      %v5092 = vld [vmem:[#allocation2 + $0x90] sm:$0xf]
      %v5093 = vld [vmem:[#allocation2 + $0x94] sm:$0xf]
      %v5094 = vld [vmem:[#allocation2 + $0x98] sm:$0x1]
      %s5095 = scalar_lea.vmem %s5, 96
      %v5096 = vld [vmem:[%s5095] sm:$0xf]
      %v5097 = vld [vmem:[%s5095 + $0x4] sm:$0xf]
      %v5098 = vld [vmem:[%s5095 + $0x8] sm:$0xf]
      %v5099 = vld [vmem:[%s5095 + $0xc] sm:$0xf]
      %v5100 = vld [vmem:[%s5095 + $0x10] sm:$0xf]
      %v5101 = vld [vmem:[%s5095 + $0x14] sm:$0xf]
      %v5102 = vld [vmem:[%s5095 + $0x18] sm:$0xf]
      %v5103 = vld [vmem:[%s5095 + $0x1c] sm:$0xf]
      %v5141 = vunpack.c.l.b16 %v5058
      %v5142 = vunpack.c.l.b16 %v5059
      %v5143 = vunpack.c.l.b16 %v5060
      %v5144 = vunpack.c.l.b16 %v5061
      %v5145 = vunpack.c.l.b16 %v5062
      %v5146 = vunpack.c.l.b16 %v5063
      %v5147 = vunpack.c.l.b16 %v5064
      %v5148 = vunpack.c.l.b16 %v5065
      %v5149 = vunpack.c.l.b16 %v5066
      %v5150 = vunpack.c.l.b16 %v5067
      %v5151 = vunpack.c.l.b16 %v5068
      %v5152 = vunpack.c.l.b16 %v5069
      %v5153 = vunpack.c.l.b16 %v5070
      %v5154 = vunpack.c.l.b16 %v5071
      %v5155 = vunpack.c.l.b16 %v5072
      %v5156 = vunpack.c.l.b16 %v5073
      %v5157 = vunpack.c.l.b16 %v5074
      %v5158 = vunpack.c.l.b16 %v5075
      %v5159 = vunpack.c.l.b16 %v5076
      %v5160 = vunpack.c.l.b16 %v5077
      %v5161 = vunpack.c.l.b16 %v5078
      %v5162 = vunpack.c.l.b16 %v5079
      %v5163 = vunpack.c.l.b16 %v5080
      %v5164 = vunpack.c.l.b16 %v5081
      %v5165 = vunpack.c.l.b16 %v5082
      %v5166 = vunpack.c.l.b16 %v5083
      %v5167 = vunpack.c.l.b16 %v5084
      %v5168 = vunpack.c.l.b16 %v5085
      %v5169 = vunpack.c.l.b16 %v5086
      %v5170 = vunpack.c.l.b16 %v5087
      %v5171 = vunpack.c.l.b16 %v5088
      %v5172 = vunpack.c.l.b16 %v5089
      %v5173 = vunpack.c.l.b16 %v5090
      %v5174 = vunpack.c.l.b16 %v5091
      %v5175 = vunpack.c.l.b16 %v5092
      %v5176 = vunpack.c.l.b16 %v5093
      %v5177 = vunpack.c.l.b16 %v5094
      %v5178 = vpack.c.b16 %v5142, %v5141
      %v5179 = vpack.c.b16 %v5144, %v5143
      %v5180 = vpack.c.b16 %v5146, %v5145
      %v5181 = vpack.c.b16 %v5148, %v5147
      %v5182 = vpack.c.b16 %v5150, %v5149
      %v5183 = vpack.c.b16 %v5152, %v5151
      %v5184 = vpack.c.b16 %v5154, %v5153
      %v5185 = vpack.c.b16 %v5156, %v5155
      %v5186 = vpack.c.b16 %v5158, %v5157
      %v5187 = vpack.c.b16 %v5160, %v5159
      %v5188 = vpack.c.b16 %v5162, %v5161
      %v5189 = vpack.c.b16 %v5164, %v5163
      %v5190 = vpack.c.b16 %v5166, %v5165
      %v5191 = vpack.c.b16 %v5168, %v5167
      %v5192 = vpack.c.b16 %v5170, %v5169
      %v5193 = vpack.c.b16 %v5172, %v5171
      %v5194 = vpack.c.b16 %v5174, %v5173
      %v5195 = vpack.c.b16 %v5176, %v5175
      %v5196 = vpack.c.b16 %v5177, %v5177
      %v5197 = vrot.slane %v5178, 1
      %v5198 = vrot.slane %v5179, 1
      %v5199 = vsel %vm953, %v5197, %v5198
      %v5200 = vrot.slane %v5180, 1
      %v5201 = vsel %vm953, %v5198, %v5200
      %v5202 = vrot.slane %v5181, 1
      %v5203 = vsel %vm953, %v5200, %v5202
      %v5204 = vrot.slane %v5182, 1
      %v5205 = vsel %vm953, %v5202, %v5204
      %v5206 = vrot.slane %v5183, 1
      %v5207 = vsel %vm953, %v5204, %v5206
      %v5208 = vrot.slane %v5184, 1
      %v5209 = vsel %vm953, %v5206, %v5208
      %v5210 = vrot.slane %v5185, 1
      %v5211 = vsel %vm953, %v5208, %v5210
      %v5212 = vrot.slane %v5186, 1
      %v5213 = vsel %vm953, %v5210, %v5212
      %v5214 = vrot.slane %v5187, 1
      %v5215 = vsel %vm953, %v5212, %v5214
      %v5216 = vrot.slane %v5188, 1
      %v5217 = vsel %vm953, %v5214, %v5216
      %v5218 = vrot.slane %v5189, 1
      %v5219 = vsel %vm953, %v5216, %v5218
      %v5220 = vrot.slane %v5190, 1
      %v5221 = vsel %vm953, %v5218, %v5220
      %v5222 = vrot.slane %v5191, 1
      %v5223 = vsel %vm953, %v5220, %v5222
      %v5224 = vrot.slane %v5192, 1
      %v5225 = vsel %vm953, %v5222, %v5224
      %v5226 = vrot.slane %v5193, 1
      %v5227 = vsel %vm953, %v5224, %v5226
      %v5228 = vrot.slane %v5194, 1
      %v5229 = vsel %vm953, %v5226, %v5228
      %v5230 = vrot.slane %v5195, 1
      %v5231 = vsel %vm953, %v5228, %v5230
      %v5232 = vrot.slane %v5196, 1
      %v5233 = vsel %vm953, %v5230, %v5232
      %v5242 = vunpack.c.l.b16 %v5096
      %v5243 = vunpack.c.l.b16 %v5097
      %v5244 = vunpack.c.l.b16 %v5098
      %v5245 = vunpack.c.l.b16 %v5099
      %v5246 = vunpack.c.l.b16 %v5100
      %v5247 = vunpack.c.l.b16 %v5101
      %v5248 = vunpack.c.l.b16 %v5102
      %v5249 = vunpack.c.l.b16 %v5103
      %v5250 = vpack.c.b16 %v5243, %v5242
      %v5251 = vpack.c.b16 %v5245, %v5244
      %v5252 = vpack.c.b16 %v5247, %v5246
      %v5253 = vpack.c.b16 %v5249, %v5248
      %v5259 = vsel %vm627, %v5199, 0
      %v5262 = vsel %vm627, %v5201, 0
      %v5265 = vsel %vm627, %v5203, 0
      %v5268 = vsel %vm627, %v5205, 0
      %v5271 = vsel %vm627, %v5207, 0
      %v5274 = vsel %vm627, %v5209, 0
      %v5277 = vsel %vm627, %v5211, 0
      %v5280 = vsel %vm627, %v5213, 0
      %v5283 = vsel %vm627, %v5215, 0
      %v5286 = vsel %vm627, %v5217, 0
      %v5289 = vsel %vm627, %v5219, 0
      %v5292 = vsel %vm627, %v5221, 0
      %v5295 = vsel %vm627, %v5223, 0
      %v5298 = vsel %vm627, %v5225, 0
      %v5301 = vsel %vm627, %v5227, 0
      %v5304 = vsel %vm627, %v5229, 0
      %v5307 = vsel %vm627, %v5231, 0
      %v5310 = vsel %vm627, %v5233, 0
      %5312 = vmatpush.bf16.msra.mxu0 0
      %5313 = vmatpush.bf16.msra.mxu0 0
      %5314 = vmatpush.bf16.msra.mxu0 0
      %5315 = vmatpush.bf16.msra.mxu0 0
      %5316 = vmatpush.bf16.msra.mxu0 %v5253
      %5317 = vmatpush.bf16.msra.mxu0 %v5252
      %5318 = vmatpush.bf16.msra.mxu0 %v5251
      %5319 = vmatpush.bf16.msra.mxu0 %v5250
      %5320 = vmatmul.bf16.gmra.mxu0 %v5259
      %v5321 = vpop.f32.mrf.mxu0
      %v5322 = vadd.f32 0.0, %v5321
      %v5323 = vpop.f32.mrf.mxu0
      %v5324 = vadd.f32 0.0, %v5323
      %5325 = vmatmul.bf16.gmra.mxu0 %v5262
      %v5326 = vpop.f32.mrf.mxu0
      %v5327 = vadd.f32 0.0, %v5326
      %v5328 = vpop.f32.mrf.mxu0
      %v5329 = vadd.f32 0.0, %v5328
      %5330 = vmatmul.bf16.gmra.mxu0 %v5265
      %v5331 = vpop.f32.mrf.mxu0
      %v5332 = vadd.f32 0.0, %v5331
      %v5333 = vpop.f32.mrf.mxu0
      %v5334 = vadd.f32 0.0, %v5333
      %5335 = vmatmul.bf16.gmra.mxu0 %v5268
      %v5336 = vpop.f32.mrf.mxu0
      %v5337 = vadd.f32 0.0, %v5336
      %v5338 = vpop.f32.mrf.mxu0
      %v5339 = vadd.f32 0.0, %v5338
      %5340 = vmatmul.bf16.gmra.mxu0 %v5271
      %v5341 = vpop.f32.mrf.mxu0
      %v5342 = vadd.f32 0.0, %v5341
      %v5343 = vpop.f32.mrf.mxu0
      %v5344 = vadd.f32 0.0, %v5343
      %5345 = vmatmul.bf16.gmra.mxu0 %v5274
      %v5346 = vpop.f32.mrf.mxu0
      %v5347 = vadd.f32 0.0, %v5346
      %v5348 = vpop.f32.mrf.mxu0
      %v5349 = vadd.f32 0.0, %v5348
      %5350 = vmatmul.bf16.gmra.mxu0 %v5277
      %v5351 = vpop.f32.mrf.mxu0
      %v5352 = vadd.f32 0.0, %v5351
      %v5353 = vpop.f32.mrf.mxu0
      %v5354 = vadd.f32 0.0, %v5353
      %5355 = vmatmul.bf16.gmra.mxu0 %v5280
      %v5356 = vpop.f32.mrf.mxu0
      %v5357 = vadd.f32 0.0, %v5356
      %v5358 = vpop.f32.mrf.mxu0
      %v5359 = vadd.f32 0.0, %v5358
      %5360 = vmatmul.bf16.gmra.mxu0 %v5283
      %v5361 = vpop.f32.mrf.mxu0
      %v5362 = vadd.f32 0.0, %v5361
      %v5363 = vpop.f32.mrf.mxu0
      %v5364 = vadd.f32 0.0, %v5363
      %5365 = vmatmul.bf16.gmra.mxu0 %v5286
      %v5366 = vpop.f32.mrf.mxu0
      %v5367 = vadd.f32 0.0, %v5366
      %v5368 = vpop.f32.mrf.mxu0
      %v5369 = vadd.f32 0.0, %v5368
      %5370 = vmatmul.bf16.gmra.mxu0 %v5289
      %v5371 = vpop.f32.mrf.mxu0
      %v5372 = vadd.f32 0.0, %v5371
      %v5373 = vpop.f32.mrf.mxu0
      %v5374 = vadd.f32 0.0, %v5373
      %5375 = vmatmul.bf16.gmra.mxu0 %v5292
      %v5376 = vpop.f32.mrf.mxu0
      %v5377 = vadd.f32 0.0, %v5376
      %v5378 = vpop.f32.mrf.mxu0
      %v5379 = vadd.f32 0.0, %v5378
      %5380 = vmatmul.bf16.gmra.mxu0 %v5295
      %v5381 = vpop.f32.mrf.mxu0
      %v5382 = vadd.f32 0.0, %v5381
      %v5383 = vpop.f32.mrf.mxu0
      %v5384 = vadd.f32 0.0, %v5383
      %5385 = vmatmul.bf16.gmra.mxu0 %v5298
      %v5386 = vpop.f32.mrf.mxu0
      %v5387 = vadd.f32 0.0, %v5386
      %v5388 = vpop.f32.mrf.mxu0
      %v5389 = vadd.f32 0.0, %v5388
      %5390 = vmatmul.bf16.gmra.mxu0 %v5301
      %v5391 = vpop.f32.mrf.mxu0
      %v5392 = vadd.f32 0.0, %v5391
      %v5393 = vpop.f32.mrf.mxu0
      %v5394 = vadd.f32 0.0, %v5393
      %5395 = vmatmul.bf16.gmra.mxu0 %v5304
      %v5396 = vpop.f32.mrf.mxu0
      %v5397 = vadd.f32 0.0, %v5396
      %v5398 = vpop.f32.mrf.mxu0
      %v5399 = vadd.f32 0.0, %v5398
      %5400 = vmatmul.bf16.gmra.mxu0 %v5307
      %v5401 = vpop.f32.mrf.mxu0
      %v5402 = vadd.f32 0.0, %v5401
      %v5403 = vpop.f32.mrf.mxu0
      %v5404 = vadd.f32 0.0, %v5403
      %5405 = vmatmul.bf16.gmra.mxu0 %v5310
      %v5406 = vpop.f32.mrf.mxu0
      %v5407 = vadd.f32 0.0, %v5406
      %v5408 = vpop.f32.mrf.mxu0
      %v5409 = vadd.f32 0.0, %v5408
      %5410 = vdwg.mxu0
      %v5411 = vadd.f32 %v5022, %v5322
      %v5412 = vadd.f32 %v5023, %v5324
      %v5413 = vadd.f32 %v5024, %v5327
      %v5414 = vadd.f32 %v5025, %v5329
      %v5415 = vadd.f32 %v5026, %v5332
      %v5416 = vadd.f32 %v5027, %v5334
      %v5417 = vadd.f32 %v5028, %v5337
      %v5418 = vadd.f32 %v5029, %v5339
      %v5419 = vadd.f32 %v5030, %v5342
      %v5420 = vadd.f32 %v5031, %v5344
      %v5421 = vadd.f32 %v5032, %v5347
      %v5422 = vadd.f32 %v5033, %v5349
      %v5423 = vadd.f32 %v5034, %v5352
      %v5424 = vadd.f32 %v5035, %v5354
      %v5425 = vadd.f32 %v5036, %v5357
      %v5426 = vadd.f32 %v5037, %v5359
      %v5427 = vadd.f32 %v5038, %v5362
      %v5428 = vadd.f32 %v5039, %v5364
      %v5429 = vadd.f32 %v5040, %v5367
      %v5430 = vadd.f32 %v5041, %v5369
      %v5431 = vadd.f32 %v5042, %v5372
      %v5432 = vadd.f32 %v5043, %v5374
      %v5433 = vadd.f32 %v5044, %v5377
      %v5434 = vadd.f32 %v5045, %v5379
      %v5435 = vadd.f32 %v5046, %v5382
      %v5436 = vadd.f32 %v5047, %v5384
      %v5437 = vadd.f32 %v5048, %v5387
      %v5438 = vadd.f32 %v5049, %v5389
      %v5439 = vadd.f32 %v5050, %v5392
      %v5440 = vadd.f32 %v5051, %v5394
      %v5441 = vadd.f32 %v5052, %v5397
      %v5442 = vadd.f32 %v5053, %v5399
      %v5443 = vadd.f32 %v5054, %v5402
      %v5444 = vadd.f32 %v5055, %v5404
      %v5445 = vadd.f32 %v5056, %v5407
      %v5446 = vadd.f32 %v5057, %v5409
      %v5447 = vld [vmem:[#allocation2 + $0x98] sm:$0x3]
      %s5448 = scalar_lea.vmem %s5, 128
      %v5449 = vld [vmem:[%s5448] sm:$0xf]
      %v5450 = vld [vmem:[%s5448 + $0x4] sm:$0xf]
      %v5451 = vld [vmem:[%s5448 + $0x8] sm:$0xf]
      %v5452 = vld [vmem:[%s5448 + $0xc] sm:$0xf]
      %v5453 = vld [vmem:[%s5448 + $0x10] sm:$0xf]
      %v5454 = vld [vmem:[%s5448 + $0x14] sm:$0xf]
      %v5455 = vld [vmem:[%s5448 + $0x18] sm:$0xf]
      %v5456 = vld [vmem:[%s5448 + $0x1c] sm:$0xf]
      %v5458 = vunpack.c.l.b16 %v5447
      %v5459 = vpack.c.b16 %v5458, %v5458
      %v5461 = vshrl.u32 %v5178, 16
      %v5463 = vrot.slane %v5461, 1
      %v5464 = vshll.u32 %v5178, 16
      %v5466 = vrot.slane %v5464, 2
      %v5467 = vor.u32 %v5463, %v5466
      %v5469 = vshrl.u32 %v5179, 16
      %v5471 = vrot.slane %v5469, 1
      %v5472 = vshll.u32 %v5179, 16
      %v5474 = vrot.slane %v5472, 2
      %v5475 = vor.u32 %v5471, %v5474
      %v5476 = vsel %vm1606, %v5467, %v5475
      %v5478 = vshrl.u32 %v5180, 16
      %v5480 = vrot.slane %v5478, 1
      %v5481 = vshll.u32 %v5180, 16
      %v5483 = vrot.slane %v5481, 2
      %v5484 = vor.u32 %v5480, %v5483
      %v5485 = vsel %vm1606, %v5475, %v5484
      %v5487 = vshrl.u32 %v5181, 16
      %v5489 = vrot.slane %v5487, 1
      %v5490 = vshll.u32 %v5181, 16
      %v5492 = vrot.slane %v5490, 2
      %v5493 = vor.u32 %v5489, %v5492
      %v5494 = vsel %vm1606, %v5484, %v5493
      %v5496 = vshrl.u32 %v5182, 16
      %v5498 = vrot.slane %v5496, 1
      %v5499 = vshll.u32 %v5182, 16
      %v5501 = vrot.slane %v5499, 2
      %v5502 = vor.u32 %v5498, %v5501
      %v5503 = vsel %vm1606, %v5493, %v5502
      %v5505 = vshrl.u32 %v5183, 16
      %v5507 = vrot.slane %v5505, 1
      %v5508 = vshll.u32 %v5183, 16
      %v5510 = vrot.slane %v5508, 2
      %v5511 = vor.u32 %v5507, %v5510
      %v5512 = vsel %vm1606, %v5502, %v5511
      %v5514 = vshrl.u32 %v5184, 16
      %v5516 = vrot.slane %v5514, 1
      %v5517 = vshll.u32 %v5184, 16
      %v5519 = vrot.slane %v5517, 2
      %v5520 = vor.u32 %v5516, %v5519
      %v5521 = vsel %vm1606, %v5511, %v5520
      %v5523 = vshrl.u32 %v5185, 16
      %v5525 = vrot.slane %v5523, 1
      %v5526 = vshll.u32 %v5185, 16
      %v5528 = vrot.slane %v5526, 2
      %v5529 = vor.u32 %v5525, %v5528
      %v5530 = vsel %vm1606, %v5520, %v5529
      %v5532 = vshrl.u32 %v5186, 16
      %v5534 = vrot.slane %v5532, 1
      %v5535 = vshll.u32 %v5186, 16
      %v5537 = vrot.slane %v5535, 2
      %v5538 = vor.u32 %v5534, %v5537
      %v5539 = vsel %vm1606, %v5529, %v5538
      %v5541 = vshrl.u32 %v5187, 16
      %v5543 = vrot.slane %v5541, 1
      %v5544 = vshll.u32 %v5187, 16
      %v5546 = vrot.slane %v5544, 2
      %v5547 = vor.u32 %v5543, %v5546
      %v5548 = vsel %vm1606, %v5538, %v5547
      %v5550 = vshrl.u32 %v5188, 16
      %v5552 = vrot.slane %v5550, 1
      %v5553 = vshll.u32 %v5188, 16
      %v5555 = vrot.slane %v5553, 2
      %v5556 = vor.u32 %v5552, %v5555
      %v5557 = vsel %vm1606, %v5547, %v5556
      %v5559 = vshrl.u32 %v5189, 16
      %v5561 = vrot.slane %v5559, 1
      %v5562 = vshll.u32 %v5189, 16
      %v5564 = vrot.slane %v5562, 2
      %v5565 = vor.u32 %v5561, %v5564
      %v5566 = vsel %vm1606, %v5556, %v5565
      %v5568 = vshrl.u32 %v5190, 16
      %v5570 = vrot.slane %v5568, 1
      %v5571 = vshll.u32 %v5190, 16
      %v5573 = vrot.slane %v5571, 2
      %v5574 = vor.u32 %v5570, %v5573
      %v5575 = vsel %vm1606, %v5565, %v5574
      %v5577 = vshrl.u32 %v5191, 16
      %v5579 = vrot.slane %v5577, 1
      %v5580 = vshll.u32 %v5191, 16
      %v5582 = vrot.slane %v5580, 2
      %v5583 = vor.u32 %v5579, %v5582
      %v5584 = vsel %vm1606, %v5574, %v5583
      %v5586 = vshrl.u32 %v5192, 16
      %v5588 = vrot.slane %v5586, 1
      %v5589 = vshll.u32 %v5192, 16
      %v5591 = vrot.slane %v5589, 2
      %v5592 = vor.u32 %v5588, %v5591
      %v5593 = vsel %vm1606, %v5583, %v5592
      %v5595 = vshrl.u32 %v5193, 16
      %v5597 = vrot.slane %v5595, 1
      %v5598 = vshll.u32 %v5193, 16
      %v5600 = vrot.slane %v5598, 2
      %v5601 = vor.u32 %v5597, %v5600
      %v5602 = vsel %vm1606, %v5592, %v5601
      %v5604 = vshrl.u32 %v5194, 16
      %v5606 = vrot.slane %v5604, 1
      %v5607 = vshll.u32 %v5194, 16
      %v5609 = vrot.slane %v5607, 2
      %v5610 = vor.u32 %v5606, %v5609
      %v5611 = vsel %vm1606, %v5601, %v5610
      %v5613 = vshrl.u32 %v5195, 16
      %v5615 = vrot.slane %v5613, 1
      %v5616 = vshll.u32 %v5195, 16
      %v5618 = vrot.slane %v5616, 2
      %v5619 = vor.u32 %v5615, %v5618
      %v5620 = vsel %vm1606, %v5610, %v5619
      %v5622 = vshrl.u32 %v5459, 16
      %v5624 = vrot.slane %v5622, 1
      %v5625 = vshll.u32 %v5459, 16
      %v5627 = vrot.slane %v5625, 2
      %v5628 = vor.u32 %v5624, %v5627
      %v5629 = vsel %vm1606, %v5619, %v5628
      %v5638 = vunpack.c.l.b16 %v5449
      %v5639 = vunpack.c.l.b16 %v5450
      %v5640 = vunpack.c.l.b16 %v5451
      %v5641 = vunpack.c.l.b16 %v5452
      %v5642 = vunpack.c.l.b16 %v5453
      %v5643 = vunpack.c.l.b16 %v5454
      %v5644 = vunpack.c.l.b16 %v5455
      %v5645 = vunpack.c.l.b16 %v5456
      %v5646 = vpack.c.b16 %v5639, %v5638
      %v5647 = vpack.c.b16 %v5641, %v5640
      %v5648 = vpack.c.b16 %v5643, %v5642
      %v5649 = vpack.c.b16 %v5645, %v5644
      %v5655 = vsel %vm627, %v5476, 0
      %v5658 = vsel %vm627, %v5485, 0
      %v5661 = vsel %vm627, %v5494, 0
      %v5664 = vsel %vm627, %v5503, 0
      %v5667 = vsel %vm627, %v5512, 0
      %v5670 = vsel %vm627, %v5521, 0
      %v5673 = vsel %vm627, %v5530, 0
      %v5676 = vsel %vm627, %v5539, 0
      %v5679 = vsel %vm627, %v5548, 0
      %v5682 = vsel %vm627, %v5557, 0
      %v5685 = vsel %vm627, %v5566, 0
      %v5688 = vsel %vm627, %v5575, 0
      %v5691 = vsel %vm627, %v5584, 0
      %v5694 = vsel %vm627, %v5593, 0
      %v5697 = vsel %vm627, %v5602, 0
      %v5700 = vsel %vm627, %v5611, 0
      %v5703 = vsel %vm627, %v5620, 0
      %v5706 = vsel %vm627, %v5629, 0
      %5708 = vmatpush.bf16.msra.mxu0 0
      %5709 = vmatpush.bf16.msra.mxu0 0
      %5710 = vmatpush.bf16.msra.mxu0 0
      %5711 = vmatpush.bf16.msra.mxu0 0
      %5712 = vmatpush.bf16.msra.mxu0 %v5649
      %5713 = vmatpush.bf16.msra.mxu0 %v5648
      %5714 = vmatpush.bf16.msra.mxu0 %v5647
      %5715 = vmatpush.bf16.msra.mxu0 %v5646
      %5716 = vmatmul.bf16.gmra.mxu0 %v5655
      %v5717 = vpop.f32.mrf.mxu0
      %v5718 = vadd.f32 0.0, %v5717
      %v5719 = vpop.f32.mrf.mxu0
      %v5720 = vadd.f32 0.0, %v5719
      %5721 = vmatmul.bf16.gmra.mxu0 %v5658
      %v5722 = vpop.f32.mrf.mxu0
      %v5723 = vadd.f32 0.0, %v5722
      %v5724 = vpop.f32.mrf.mxu0
      %v5725 = vadd.f32 0.0, %v5724
      %5726 = vmatmul.bf16.gmra.mxu0 %v5661
      %v5727 = vpop.f32.mrf.mxu0
      %v5728 = vadd.f32 0.0, %v5727
      %v5729 = vpop.f32.mrf.mxu0
      %v5730 = vadd.f32 0.0, %v5729
      %5731 = vmatmul.bf16.gmra.mxu0 %v5664
      %v5732 = vpop.f32.mrf.mxu0
      %v5733 = vadd.f32 0.0, %v5732
      %v5734 = vpop.f32.mrf.mxu0
      %v5735 = vadd.f32 0.0, %v5734
      %5736 = vmatmul.bf16.gmra.mxu0 %v5667
      %v5737 = vpop.f32.mrf.mxu0
      %v5738 = vadd.f32 0.0, %v5737
      %v5739 = vpop.f32.mrf.mxu0
      %v5740 = vadd.f32 0.0, %v5739
      %5741 = vmatmul.bf16.gmra.mxu0 %v5670
      %v5742 = vpop.f32.mrf.mxu0
      %v5743 = vadd.f32 0.0, %v5742
      %v5744 = vpop.f32.mrf.mxu0
      %v5745 = vadd.f32 0.0, %v5744
      %5746 = vmatmul.bf16.gmra.mxu0 %v5673
      %v5747 = vpop.f32.mrf.mxu0
      %v5748 = vadd.f32 0.0, %v5747
      %v5749 = vpop.f32.mrf.mxu0
      %v5750 = vadd.f32 0.0, %v5749
      %5751 = vmatmul.bf16.gmra.mxu0 %v5676
      %v5752 = vpop.f32.mrf.mxu0
      %v5753 = vadd.f32 0.0, %v5752
      %v5754 = vpop.f32.mrf.mxu0
      %v5755 = vadd.f32 0.0, %v5754
      %5756 = vmatmul.bf16.gmra.mxu0 %v5679
      %v5757 = vpop.f32.mrf.mxu0
      %v5758 = vadd.f32 0.0, %v5757
      %v5759 = vpop.f32.mrf.mxu0
      %v5760 = vadd.f32 0.0, %v5759
      %5761 = vmatmul.bf16.gmra.mxu0 %v5682
      %v5762 = vpop.f32.mrf.mxu0
      %v5763 = vadd.f32 0.0, %v5762
      %v5764 = vpop.f32.mrf.mxu0
      %v5765 = vadd.f32 0.0, %v5764
      %5766 = vmatmul.bf16.gmra.mxu0 %v5685
      %v5767 = vpop.f32.mrf.mxu0
      %v5768 = vadd.f32 0.0, %v5767
      %v5769 = vpop.f32.mrf.mxu0
      %v5770 = vadd.f32 0.0, %v5769
      %5771 = vmatmul.bf16.gmra.mxu0 %v5688
      %v5772 = vpop.f32.mrf.mxu0
      %v5773 = vadd.f32 0.0, %v5772
      %v5774 = vpop.f32.mrf.mxu0
      %v5775 = vadd.f32 0.0, %v5774
      %5776 = vmatmul.bf16.gmra.mxu0 %v5691
      %v5777 = vpop.f32.mrf.mxu0
      %v5778 = vadd.f32 0.0, %v5777
      %v5779 = vpop.f32.mrf.mxu0
      %v5780 = vadd.f32 0.0, %v5779
      %5781 = vmatmul.bf16.gmra.mxu0 %v5694
      %v5782 = vpop.f32.mrf.mxu0
      %v5783 = vadd.f32 0.0, %v5782
      %v5784 = vpop.f32.mrf.mxu0
      %v5785 = vadd.f32 0.0, %v5784
      %5786 = vmatmul.bf16.gmra.mxu0 %v5697
      %v5787 = vpop.f32.mrf.mxu0
      %v5788 = vadd.f32 0.0, %v5787
      %v5789 = vpop.f32.mrf.mxu0
      %v5790 = vadd.f32 0.0, %v5789
      %5791 = vmatmul.bf16.gmra.mxu0 %v5700
      %v5792 = vpop.f32.mrf.mxu0
      %v5793 = vadd.f32 0.0, %v5792
      %v5794 = vpop.f32.mrf.mxu0
      %v5795 = vadd.f32 0.0, %v5794
      %5796 = vmatmul.bf16.gmra.mxu0 %v5703
      %v5797 = vpop.f32.mrf.mxu0
      %v5798 = vadd.f32 0.0, %v5797
      %v5799 = vpop.f32.mrf.mxu0
      %v5800 = vadd.f32 0.0, %v5799
      %5801 = vmatmul.bf16.gmra.mxu0 %v5706
      %v5802 = vpop.f32.mrf.mxu0
      %v5803 = vadd.f32 0.0, %v5802
      %v5804 = vpop.f32.mrf.mxu0
      %v5805 = vadd.f32 0.0, %v5804
      %5806 = vdwg.mxu0
      %v5807 = vadd.f32 %v5411, %v5718
      %v5808 = vadd.f32 %v5412, %v5720
      %v5809 = vadd.f32 %v5413, %v5723
      %v5810 = vadd.f32 %v5414, %v5725
      %v5811 = vadd.f32 %v5415, %v5728
      %v5812 = vadd.f32 %v5416, %v5730
      %v5813 = vadd.f32 %v5417, %v5733
      %v5814 = vadd.f32 %v5418, %v5735
      %v5815 = vadd.f32 %v5419, %v5738
      %v5816 = vadd.f32 %v5420, %v5740
      %v5817 = vadd.f32 %v5421, %v5743
      %v5818 = vadd.f32 %v5422, %v5745
      %v5819 = vadd.f32 %v5423, %v5748
      %v5820 = vadd.f32 %v5424, %v5750
      %v5821 = vadd.f32 %v5425, %v5753
      %v5822 = vadd.f32 %v5426, %v5755
      %v5823 = vadd.f32 %v5427, %v5758
      %v5824 = vadd.f32 %v5428, %v5760
      %v5825 = vadd.f32 %v5429, %v5763
      %v5826 = vadd.f32 %v5430, %v5765
      %v5827 = vadd.f32 %v5431, %v5768
      %v5828 = vadd.f32 %v5432, %v5770
      %v5829 = vadd.f32 %v5433, %v5773
      %v5830 = vadd.f32 %v5434, %v5775
      %v5831 = vadd.f32 %v5435, %v5778
      %v5832 = vadd.f32 %v5436, %v5780
      %v5833 = vadd.f32 %v5437, %v5783
      %v5834 = vadd.f32 %v5438, %v5785
      %v5835 = vadd.f32 %v5439, %v5788
      %v5836 = vadd.f32 %v5440, %v5790
      %v5837 = vadd.f32 %v5441, %v5793
      %v5838 = vadd.f32 %v5442, %v5795
      %v5839 = vadd.f32 %v5443, %v5798
      %v5840 = vadd.f32 %v5444, %v5800
      %v5841 = vadd.f32 %v5445, %v5803
      %v5842 = vadd.f32 %v5446, %v5805
      %v5843 = vld [vmem:[#allocation2 + $0x8] sm:$0xc]
      %s5844 = scalar_lea.vmem %s5, 160
      %v5845 = vld [vmem:[%s5844] sm:$0xf]
      %v5846 = vld [vmem:[%s5844 + $0x4] sm:$0xf]
      %v5847 = vld [vmem:[%s5844 + $0x8] sm:$0xf]
      %v5848 = vld [vmem:[%s5844 + $0xc] sm:$0xf]
      %v5849 = vld [vmem:[%s5844 + $0x10] sm:$0xf]
      %v5850 = vld [vmem:[%s5844 + $0x14] sm:$0xf]
      %v5851 = vld [vmem:[%s5844 + $0x18] sm:$0xf]
      %v5852 = vld [vmem:[%s5844 + $0x1c] sm:$0xf]
      %v5854 = vunpack.c.l.b16 %v5843
      %v5855 = vpack.c.b16 %v5142, %v5854
      %v5856 = vrot.slane %v5855, 2
      %v5857 = vrot.slane %v5179, 2
      %v5858 = vsel %vm2003, %v5856, %v5857
      %v5859 = vrot.slane %v5180, 2
      %v5860 = vsel %vm2003, %v5857, %v5859
      %v5861 = vrot.slane %v5181, 2
      %v5862 = vsel %vm2003, %v5859, %v5861
      %v5863 = vrot.slane %v5182, 2
      %v5864 = vsel %vm2003, %v5861, %v5863
      %v5865 = vrot.slane %v5183, 2
      %v5866 = vsel %vm2003, %v5863, %v5865
      %v5867 = vrot.slane %v5184, 2
      %v5868 = vsel %vm2003, %v5865, %v5867
      %v5869 = vrot.slane %v5185, 2
      %v5870 = vsel %vm2003, %v5867, %v5869
      %v5871 = vrot.slane %v5186, 2
      %v5872 = vsel %vm2003, %v5869, %v5871
      %v5873 = vrot.slane %v5187, 2
      %v5874 = vsel %vm2003, %v5871, %v5873
      %v5875 = vrot.slane %v5188, 2
      %v5876 = vsel %vm2003, %v5873, %v5875
      %v5877 = vrot.slane %v5189, 2
      %v5878 = vsel %vm2003, %v5875, %v5877
      %v5879 = vrot.slane %v5190, 2
      %v5880 = vsel %vm2003, %v5877, %v5879
      %v5881 = vrot.slane %v5191, 2
      %v5882 = vsel %vm2003, %v5879, %v5881
      %v5883 = vrot.slane %v5192, 2
      %v5884 = vsel %vm2003, %v5881, %v5883
      %v5885 = vrot.slane %v5193, 2
      %v5886 = vsel %vm2003, %v5883, %v5885
      %v5887 = vrot.slane %v5194, 2
      %v5888 = vsel %vm2003, %v5885, %v5887
      %v5889 = vrot.slane %v5195, 2
      %v5890 = vsel %vm2003, %v5887, %v5889
      %v5891 = vrot.slane %v5459, 2
      %v5892 = vsel %vm2003, %v5889, %v5891
      %v5901 = vunpack.c.l.b16 %v5845
      %v5902 = vunpack.c.l.b16 %v5846
      %v5903 = vunpack.c.l.b16 %v5847
      %v5904 = vunpack.c.l.b16 %v5848
      %v5905 = vunpack.c.l.b16 %v5849
      %v5906 = vunpack.c.l.b16 %v5850
      %v5907 = vunpack.c.l.b16 %v5851
      %v5908 = vunpack.c.l.b16 %v5852
      %v5909 = vpack.c.b16 %v5902, %v5901
      %v5910 = vpack.c.b16 %v5904, %v5903
      %v5911 = vpack.c.b16 %v5906, %v5905
      %v5912 = vpack.c.b16 %v5908, %v5907
      %v5918 = vsel %vm627, %v5858, 0
      %v5921 = vsel %vm627, %v5860, 0
      %v5924 = vsel %vm627, %v5862, 0
      %v5927 = vsel %vm627, %v5864, 0
      %v5930 = vsel %vm627, %v5866, 0
      %v5933 = vsel %vm627, %v5868, 0
      %v5936 = vsel %vm627, %v5870, 0
      %v5939 = vsel %vm627, %v5872, 0
      %v5942 = vsel %vm627, %v5874, 0
      %v5945 = vsel %vm627, %v5876, 0
      %v5948 = vsel %vm627, %v5878, 0
      %v5951 = vsel %vm627, %v5880, 0
      %v5954 = vsel %vm627, %v5882, 0
      %v5957 = vsel %vm627, %v5884, 0
      %v5960 = vsel %vm627, %v5886, 0
      %v5963 = vsel %vm627, %v5888, 0
      %v5966 = vsel %vm627, %v5890, 0
      %v5969 = vsel %vm627, %v5892, 0
      %5971 = vmatpush.bf16.msra.mxu0 0
      %5972 = vmatpush.bf16.msra.mxu0 0
      %5973 = vmatpush.bf16.msra.mxu0 0
      %5974 = vmatpush.bf16.msra.mxu0 0
      %5975 = vmatpush.bf16.msra.mxu0 %v5912
      %5976 = vmatpush.bf16.msra.mxu0 %v5911
      %5977 = vmatpush.bf16.msra.mxu0 %v5910
      %5978 = vmatpush.bf16.msra.mxu0 %v5909
      %5979 = vmatmul.bf16.gmra.mxu0 %v5918
      %v5980 = vpop.f32.mrf.mxu0
      %v5981 = vadd.f32 0.0, %v5980
      %v5982 = vpop.f32.mrf.mxu0
      %v5983 = vadd.f32 0.0, %v5982
      %5984 = vmatmul.bf16.gmra.mxu0 %v5921
      %v5985 = vpop.f32.mrf.mxu0
      %v5986 = vadd.f32 0.0, %v5985
      %v5987 = vpop.f32.mrf.mxu0
      %v5988 = vadd.f32 0.0, %v5987
      %5989 = vmatmul.bf16.gmra.mxu0 %v5924
      %v5990 = vpop.f32.mrf.mxu0
      %v5991 = vadd.f32 0.0, %v5990
      %v5992 = vpop.f32.mrf.mxu0
      %v5993 = vadd.f32 0.0, %v5992
      %5994 = vmatmul.bf16.gmra.mxu0 %v5927
      %v5995 = vpop.f32.mrf.mxu0
      %v5996 = vadd.f32 0.0, %v5995
      %v5997 = vpop.f32.mrf.mxu0
      %v5998 = vadd.f32 0.0, %v5997
      %5999 = vmatmul.bf16.gmra.mxu0 %v5930
      %v6000 = vpop.f32.mrf.mxu0
      %v6001 = vadd.f32 0.0, %v6000
      %v6002 = vpop.f32.mrf.mxu0
      %v6003 = vadd.f32 0.0, %v6002
      %6004 = vmatmul.bf16.gmra.mxu0 %v5933
      %v6005 = vpop.f32.mrf.mxu0
      %v6006 = vadd.f32 0.0, %v6005
      %v6007 = vpop.f32.mrf.mxu0
      %v6008 = vadd.f32 0.0, %v6007
      %6009 = vmatmul.bf16.gmra.mxu0 %v5936
      %v6010 = vpop.f32.mrf.mxu0
      %v6011 = vadd.f32 0.0, %v6010
      %v6012 = vpop.f32.mrf.mxu0
      %v6013 = vadd.f32 0.0, %v6012
      %6014 = vmatmul.bf16.gmra.mxu0 %v5939
      %v6015 = vpop.f32.mrf.mxu0
      %v6016 = vadd.f32 0.0, %v6015
      %v6017 = vpop.f32.mrf.mxu0
      %v6018 = vadd.f32 0.0, %v6017
      %6019 = vmatmul.bf16.gmra.mxu0 %v5942
      %v6020 = vpop.f32.mrf.mxu0
      %v6021 = vadd.f32 0.0, %v6020
      %v6022 = vpop.f32.mrf.mxu0
      %v6023 = vadd.f32 0.0, %v6022
      %6024 = vmatmul.bf16.gmra.mxu0 %v5945
      %v6025 = vpop.f32.mrf.mxu0
      %v6026 = vadd.f32 0.0, %v6025
      %v6027 = vpop.f32.mrf.mxu0
      %v6028 = vadd.f32 0.0, %v6027
      %6029 = vmatmul.bf16.gmra.mxu0 %v5948
      %v6030 = vpop.f32.mrf.mxu0
      %v6031 = vadd.f32 0.0, %v6030
      %v6032 = vpop.f32.mrf.mxu0
      %v6033 = vadd.f32 0.0, %v6032
      %6034 = vmatmul.bf16.gmra.mxu0 %v5951
      %v6035 = vpop.f32.mrf.mxu0
      %v6036 = vadd.f32 0.0, %v6035
      %v6037 = vpop.f32.mrf.mxu0
      %v6038 = vadd.f32 0.0, %v6037
      %6039 = vmatmul.bf16.gmra.mxu0 %v5954
      %v6040 = vpop.f32.mrf.mxu0
      %v6041 = vadd.f32 0.0, %v6040
      %v6042 = vpop.f32.mrf.mxu0
      %v6043 = vadd.f32 0.0, %v6042
      %6044 = vmatmul.bf16.gmra.mxu0 %v5957
      %v6045 = vpop.f32.mrf.mxu0
      %v6046 = vadd.f32 0.0, %v6045
      %v6047 = vpop.f32.mrf.mxu0
      %v6048 = vadd.f32 0.0, %v6047
      %6049 = vmatmul.bf16.gmra.mxu0 %v5960
      %v6050 = vpop.f32.mrf.mxu0
      %v6051 = vadd.f32 0.0, %v6050
      %v6052 = vpop.f32.mrf.mxu0
      %v6053 = vadd.f32 0.0, %v6052
      %6054 = vmatmul.bf16.gmra.mxu0 %v5963
      %v6055 = vpop.f32.mrf.mxu0
      %v6056 = vadd.f32 0.0, %v6055
      %v6057 = vpop.f32.mrf.mxu0
      %v6058 = vadd.f32 0.0, %v6057
      %6059 = vmatmul.bf16.gmra.mxu0 %v5966
      %v6060 = vpop.f32.mrf.mxu0
      %v6061 = vadd.f32 0.0, %v6060
      %v6062 = vpop.f32.mrf.mxu0
      %v6063 = vadd.f32 0.0, %v6062
      %6064 = vmatmul.bf16.gmra.mxu0 %v5969
      %v6065 = vpop.f32.mrf.mxu0
      %v6066 = vadd.f32 0.0, %v6065
      %v6067 = vpop.f32.mrf.mxu0
      %v6068 = vadd.f32 0.0, %v6067
      %6069 = vdwg.mxu0
      %v6070 = vadd.f32 %v5807, %v5981
      %v6071 = vadd.f32 %v5808, %v5983
      %v6072 = vadd.f32 %v5809, %v5986
      %v6073 = vadd.f32 %v5810, %v5988
      %v6074 = vadd.f32 %v5811, %v5991
      %v6075 = vadd.f32 %v5812, %v5993
      %v6076 = vadd.f32 %v5813, %v5996
      %v6077 = vadd.f32 %v5814, %v5998
      %v6078 = vadd.f32 %v5815, %v6001
      %v6079 = vadd.f32 %v5816, %v6003
      %v6080 = vadd.f32 %v5817, %v6006
      %v6081 = vadd.f32 %v5818, %v6008
      %v6082 = vadd.f32 %v5819, %v6011
      %v6083 = vadd.f32 %v5820, %v6013
      %v6084 = vadd.f32 %v5821, %v6016
      %v6085 = vadd.f32 %v5822, %v6018
      %v6086 = vadd.f32 %v5823, %v6021
      %v6087 = vadd.f32 %v5824, %v6023
      %v6088 = vadd.f32 %v5825, %v6026
      %v6089 = vadd.f32 %v5826, %v6028
      %v6090 = vadd.f32 %v5827, %v6031
      %v6091 = vadd.f32 %v5828, %v6033
      %v6092 = vadd.f32 %v5829, %v6036
      %v6093 = vadd.f32 %v5830, %v6038
      %v6094 = vadd.f32 %v5831, %v6041
      %v6095 = vadd.f32 %v5832, %v6043
      %v6096 = vadd.f32 %v5833, %v6046
      %v6097 = vadd.f32 %v5834, %v6048
      %v6098 = vadd.f32 %v5835, %v6051
      %v6099 = vadd.f32 %v5836, %v6053
      %v6100 = vadd.f32 %v5837, %v6056
      %v6101 = vadd.f32 %v5838, %v6058
      %v6102 = vadd.f32 %v5839, %v6061
      %v6103 = vadd.f32 %v5840, %v6063
      %v6104 = vadd.f32 %v5841, %v6066
      %v6105 = vadd.f32 %v5842, %v6068
      %v6106 = vld [vmem:[#allocation2 + $0x10] sm:$0xc]
      %v6107 = vld [vmem:[#allocation2 + $0x14] sm:$0xf]
      %v6108 = vld [vmem:[#allocation2 + $0x18] sm:$0xf]
      %v6109 = vld [vmem:[#allocation2 + $0x1c] sm:$0xf]
      %v6110 = vld [vmem:[#allocation2 + $0x20] sm:$0xf]
      %v6111 = vld [vmem:[#allocation2 + $0x24] sm:$0xf]
      %v6112 = vld [vmem:[#allocation2 + $0x28] sm:$0xf]
      %v6113 = vld [vmem:[#allocation2 + $0x2c] sm:$0xf]
      %v6114 = vld [vmem:[#allocation2 + $0x30] sm:$0xf]
      %v6115 = vld [vmem:[#allocation2 + $0x34] sm:$0xf]
      %v6116 = vld [vmem:[#allocation2 + $0x38] sm:$0xf]
      %v6117 = vld [vmem:[#allocation2 + $0x3c] sm:$0xf]
      %v6118 = vld [vmem:[#allocation2 + $0x40] sm:$0xf]
      %v6119 = vld [vmem:[#allocation2 + $0x44] sm:$0xf]
      %v6120 = vld [vmem:[#allocation2 + $0x48] sm:$0xf]
      %v6121 = vld [vmem:[#allocation2 + $0x4c] sm:$0xf]
      %v6122 = vld [vmem:[#allocation2 + $0x50] sm:$0xf]
      %v6123 = vld [vmem:[#allocation2 + $0x54] sm:$0xf]
      %v6124 = vld [vmem:[#allocation2 + $0x58] sm:$0xf]
      %v6125 = vld [vmem:[#allocation2 + $0x5c] sm:$0xf]
      %v6126 = vld [vmem:[#allocation2 + $0x60] sm:$0xf]
      %v6127 = vld [vmem:[#allocation2 + $0x64] sm:$0xf]
      %v6128 = vld [vmem:[#allocation2 + $0x68] sm:$0xf]
      %v6129 = vld [vmem:[#allocation2 + $0x6c] sm:$0xf]
      %v6130 = vld [vmem:[#allocation2 + $0x70] sm:$0xf]
      %v6131 = vld [vmem:[#allocation2 + $0x74] sm:$0xf]
      %v6132 = vld [vmem:[#allocation2 + $0x78] sm:$0xf]
      %v6133 = vld [vmem:[#allocation2 + $0x7c] sm:$0xf]
      %v6134 = vld [vmem:[#allocation2 + $0x80] sm:$0xf]
      %v6135 = vld [vmem:[#allocation2 + $0x84] sm:$0xf]
      %v6136 = vld [vmem:[#allocation2 + $0x88] sm:$0xf]
      %v6137 = vld [vmem:[#allocation2 + $0x8c] sm:$0xf]
      %v6138 = vld [vmem:[#allocation2 + $0x90] sm:$0xf]
      %v6139 = vld [vmem:[#allocation2 + $0x94] sm:$0xf]
      %v6140 = vld [vmem:[#allocation2 + $0x98] sm:$0xf]
      %v6141 = vld [vmem:[#allocation2 + $0x9c] sm:$0xf]
      %v6142 = vld [vmem:[#allocation2 + $0xa0] sm:$0x3]
      %s6143 = scalar_lea.vmem %s5, 192
      %v6144 = vld [vmem:[%s6143] sm:$0xf]
      %v6145 = vld [vmem:[%s6143 + $0x4] sm:$0xf]
      %v6146 = vld [vmem:[%s6143 + $0x8] sm:$0xf]
      %v6147 = vld [vmem:[%s6143 + $0xc] sm:$0xf]
      %v6148 = vld [vmem:[%s6143 + $0x10] sm:$0xf]
      %v6149 = vld [vmem:[%s6143 + $0x14] sm:$0xf]
      %v6150 = vld [vmem:[%s6143 + $0x18] sm:$0xf]
      %v6151 = vld [vmem:[%s6143 + $0x1c] sm:$0xf]
      %v6189 = vunpack.c.l.b16 %v6106
      %v6190 = vunpack.c.l.b16 %v6107
      %v6191 = vunpack.c.l.b16 %v6108
      %v6192 = vunpack.c.l.b16 %v6109
      %v6193 = vunpack.c.l.b16 %v6110
      %v6194 = vunpack.c.l.b16 %v6111
      %v6195 = vunpack.c.l.b16 %v6112
      %v6196 = vunpack.c.l.b16 %v6113
      %v6197 = vunpack.c.l.b16 %v6114
      %v6198 = vunpack.c.l.b16 %v6115
      %v6199 = vunpack.c.l.b16 %v6116
      %v6200 = vunpack.c.l.b16 %v6117
      %v6201 = vunpack.c.l.b16 %v6118
      %v6202 = vunpack.c.l.b16 %v6119
      %v6203 = vunpack.c.l.b16 %v6120
      %v6204 = vunpack.c.l.b16 %v6121
      %v6205 = vunpack.c.l.b16 %v6122
      %v6206 = vunpack.c.l.b16 %v6123
      %v6207 = vunpack.c.l.b16 %v6124
      %v6208 = vunpack.c.l.b16 %v6125
      %v6209 = vunpack.c.l.b16 %v6126
      %v6210 = vunpack.c.l.b16 %v6127
      %v6211 = vunpack.c.l.b16 %v6128
      %v6212 = vunpack.c.l.b16 %v6129
      %v6213 = vunpack.c.l.b16 %v6130
      %v6214 = vunpack.c.l.b16 %v6131
      %v6215 = vunpack.c.l.b16 %v6132
      %v6216 = vunpack.c.l.b16 %v6133
      %v6217 = vunpack.c.l.b16 %v6134
      %v6218 = vunpack.c.l.b16 %v6135
      %v6219 = vunpack.c.l.b16 %v6136
      %v6220 = vunpack.c.l.b16 %v6137
      %v6221 = vunpack.c.l.b16 %v6138
      %v6222 = vunpack.c.l.b16 %v6139
      %v6223 = vunpack.c.l.b16 %v6140
      %v6224 = vunpack.c.l.b16 %v6141
      %v6225 = vunpack.c.l.b16 %v6142
      %v6226 = vpack.c.b16 %v6190, %v6189
      %v6227 = vpack.c.b16 %v6192, %v6191
      %v6228 = vpack.c.b16 %v6194, %v6193
      %v6229 = vpack.c.b16 %v6196, %v6195
      %v6230 = vpack.c.b16 %v6198, %v6197
      %v6231 = vpack.c.b16 %v6200, %v6199
      %v6232 = vpack.c.b16 %v6202, %v6201
      %v6233 = vpack.c.b16 %v6204, %v6203
      %v6234 = vpack.c.b16 %v6206, %v6205
      %v6235 = vpack.c.b16 %v6208, %v6207
      %v6236 = vpack.c.b16 %v6210, %v6209
      %v6237 = vpack.c.b16 %v6212, %v6211
      %v6238 = vpack.c.b16 %v6214, %v6213
      %v6239 = vpack.c.b16 %v6216, %v6215
      %v6240 = vpack.c.b16 %v6218, %v6217
      %v6241 = vpack.c.b16 %v6220, %v6219
      %v6242 = vpack.c.b16 %v6222, %v6221
      %v6243 = vpack.c.b16 %v6224, %v6223
      %v6244 = vpack.c.b16 %v6225, %v6225
      %v6245 = vrot.slane %v6226, 2
      %v6246 = vrot.slane %v6227, 2
      %v6247 = vsel %vm2003, %v6245, %v6246
      %v6248 = vrot.slane %v6228, 2
      %v6249 = vsel %vm2003, %v6246, %v6248
      %v6250 = vrot.slane %v6229, 2
      %v6251 = vsel %vm2003, %v6248, %v6250
      %v6252 = vrot.slane %v6230, 2
      %v6253 = vsel %vm2003, %v6250, %v6252
      %v6254 = vrot.slane %v6231, 2
      %v6255 = vsel %vm2003, %v6252, %v6254
      %v6256 = vrot.slane %v6232, 2
      %v6257 = vsel %vm2003, %v6254, %v6256
      %v6258 = vrot.slane %v6233, 2
      %v6259 = vsel %vm2003, %v6256, %v6258
      %v6260 = vrot.slane %v6234, 2
      %v6261 = vsel %vm2003, %v6258, %v6260
      %v6262 = vrot.slane %v6235, 2
      %v6263 = vsel %vm2003, %v6260, %v6262
      %v6264 = vrot.slane %v6236, 2
      %v6265 = vsel %vm2003, %v6262, %v6264
      %v6266 = vrot.slane %v6237, 2
      %v6267 = vsel %vm2003, %v6264, %v6266
      %v6268 = vrot.slane %v6238, 2
      %v6269 = vsel %vm2003, %v6266, %v6268
      %v6270 = vrot.slane %v6239, 2
      %v6271 = vsel %vm2003, %v6268, %v6270
      %v6272 = vrot.slane %v6240, 2
      %v6273 = vsel %vm2003, %v6270, %v6272
      %v6274 = vrot.slane %v6241, 2
      %v6275 = vsel %vm2003, %v6272, %v6274
      %v6276 = vrot.slane %v6242, 2
      %v6277 = vsel %vm2003, %v6274, %v6276
      %v6278 = vrot.slane %v6243, 2
      %v6279 = vsel %vm2003, %v6276, %v6278
      %v6280 = vrot.slane %v6244, 2
      %v6281 = vsel %vm2003, %v6278, %v6280
      %v6290 = vunpack.c.l.b16 %v6144
      %v6291 = vunpack.c.l.b16 %v6145
      %v6292 = vunpack.c.l.b16 %v6146
      %v6293 = vunpack.c.l.b16 %v6147
      %v6294 = vunpack.c.l.b16 %v6148
      %v6295 = vunpack.c.l.b16 %v6149
      %v6296 = vunpack.c.l.b16 %v6150
      %v6297 = vunpack.c.l.b16 %v6151
      %v6298 = vpack.c.b16 %v6291, %v6290
      %v6299 = vpack.c.b16 %v6293, %v6292
      %v6300 = vpack.c.b16 %v6295, %v6294
      %v6301 = vpack.c.b16 %v6297, %v6296
      %v6307 = vsel %vm627, %v6247, 0
      %v6310 = vsel %vm627, %v6249, 0
      %v6313 = vsel %vm627, %v6251, 0
      %v6316 = vsel %vm627, %v6253, 0
      %v6319 = vsel %vm627, %v6255, 0
      %v6322 = vsel %vm627, %v6257, 0
      %v6325 = vsel %vm627, %v6259, 0
      %v6328 = vsel %vm627, %v6261, 0
      %v6331 = vsel %vm627, %v6263, 0
      %v6334 = vsel %vm627, %v6265, 0
      %v6337 = vsel %vm627, %v6267, 0
      %v6340 = vsel %vm627, %v6269, 0
      %v6343 = vsel %vm627, %v6271, 0
      %v6346 = vsel %vm627, %v6273, 0
      %v6349 = vsel %vm627, %v6275, 0
      %v6352 = vsel %vm627, %v6277, 0
      %v6355 = vsel %vm627, %v6279, 0
      %v6358 = vsel %vm627, %v6281, 0
      %6360 = vmatpush.bf16.msra.mxu0 0
      %6361 = vmatpush.bf16.msra.mxu0 0
      %6362 = vmatpush.bf16.msra.mxu0 0
      %6363 = vmatpush.bf16.msra.mxu0 0
      %6364 = vmatpush.bf16.msra.mxu0 %v6301
      %6365 = vmatpush.bf16.msra.mxu0 %v6300
      %6366 = vmatpush.bf16.msra.mxu0 %v6299
      %6367 = vmatpush.bf16.msra.mxu0 %v6298
      %6368 = vmatmul.bf16.gmra.mxu0 %v6307
      %v6369 = vpop.f32.mrf.mxu0
      %v6370 = vadd.f32 0.0, %v6369
      %v6371 = vpop.f32.mrf.mxu0
      %v6372 = vadd.f32 0.0, %v6371
      %6373 = vmatmul.bf16.gmra.mxu0 %v6310
      %v6374 = vpop.f32.mrf.mxu0
      %v6375 = vadd.f32 0.0, %v6374
      %v6376 = vpop.f32.mrf.mxu0
      %v6377 = vadd.f32 0.0, %v6376
      %6378 = vmatmul.bf16.gmra.mxu0 %v6313
      %v6379 = vpop.f32.mrf.mxu0
      %v6380 = vadd.f32 0.0, %v6379
      %v6381 = vpop.f32.mrf.mxu0
      %v6382 = vadd.f32 0.0, %v6381
      %6383 = vmatmul.bf16.gmra.mxu0 %v6316
      %v6384 = vpop.f32.mrf.mxu0
      %v6385 = vadd.f32 0.0, %v6384
      %v6386 = vpop.f32.mrf.mxu0
      %v6387 = vadd.f32 0.0, %v6386
      %6388 = vmatmul.bf16.gmra.mxu0 %v6319
      %v6389 = vpop.f32.mrf.mxu0
      %v6390 = vadd.f32 0.0, %v6389
      %v6391 = vpop.f32.mrf.mxu0
      %v6392 = vadd.f32 0.0, %v6391
      %6393 = vmatmul.bf16.gmra.mxu0 %v6322
      %v6394 = vpop.f32.mrf.mxu0
      %v6395 = vadd.f32 0.0, %v6394
      %v6396 = vpop.f32.mrf.mxu0
      %v6397 = vadd.f32 0.0, %v6396
      %6398 = vmatmul.bf16.gmra.mxu0 %v6325
      %v6399 = vpop.f32.mrf.mxu0
      %v6400 = vadd.f32 0.0, %v6399
      %v6401 = vpop.f32.mrf.mxu0
      %v6402 = vadd.f32 0.0, %v6401
      %6403 = vmatmul.bf16.gmra.mxu0 %v6328
      %v6404 = vpop.f32.mrf.mxu0
      %v6405 = vadd.f32 0.0, %v6404
      %v6406 = vpop.f32.mrf.mxu0
      %v6407 = vadd.f32 0.0, %v6406
      %6408 = vmatmul.bf16.gmra.mxu0 %v6331
      %v6409 = vpop.f32.mrf.mxu0
      %v6410 = vadd.f32 0.0, %v6409
      %v6411 = vpop.f32.mrf.mxu0
      %v6412 = vadd.f32 0.0, %v6411
      %6413 = vmatmul.bf16.gmra.mxu0 %v6334
      %v6414 = vpop.f32.mrf.mxu0
      %v6415 = vadd.f32 0.0, %v6414
      %v6416 = vpop.f32.mrf.mxu0
      %v6417 = vadd.f32 0.0, %v6416
      %6418 = vmatmul.bf16.gmra.mxu0 %v6337
      %v6419 = vpop.f32.mrf.mxu0
      %v6420 = vadd.f32 0.0, %v6419
      %v6421 = vpop.f32.mrf.mxu0
      %v6422 = vadd.f32 0.0, %v6421
      %6423 = vmatmul.bf16.gmra.mxu0 %v6340
      %v6424 = vpop.f32.mrf.mxu0
      %v6425 = vadd.f32 0.0, %v6424
      %v6426 = vpop.f32.mrf.mxu0
      %v6427 = vadd.f32 0.0, %v6426
      %6428 = vmatmul.bf16.gmra.mxu0 %v6343
      %v6429 = vpop.f32.mrf.mxu0
      %v6430 = vadd.f32 0.0, %v6429
      %v6431 = vpop.f32.mrf.mxu0
      %v6432 = vadd.f32 0.0, %v6431
      %6433 = vmatmul.bf16.gmra.mxu0 %v6346
      %v6434 = vpop.f32.mrf.mxu0
      %v6435 = vadd.f32 0.0, %v6434
      %v6436 = vpop.f32.mrf.mxu0
      %v6437 = vadd.f32 0.0, %v6436
      %6438 = vmatmul.bf16.gmra.mxu0 %v6349
      %v6439 = vpop.f32.mrf.mxu0
      %v6440 = vadd.f32 0.0, %v6439
      %v6441 = vpop.f32.mrf.mxu0
      %v6442 = vadd.f32 0.0, %v6441
      %6443 = vmatmul.bf16.gmra.mxu0 %v6352
      %v6444 = vpop.f32.mrf.mxu0
      %v6445 = vadd.f32 0.0, %v6444
      %v6446 = vpop.f32.mrf.mxu0
      %v6447 = vadd.f32 0.0, %v6446
      %6448 = vmatmul.bf16.gmra.mxu0 %v6355
      %v6449 = vpop.f32.mrf.mxu0
      %v6450 = vadd.f32 0.0, %v6449
      %v6451 = vpop.f32.mrf.mxu0
      %v6452 = vadd.f32 0.0, %v6451
      %6453 = vmatmul.bf16.gmra.mxu0 %v6358
      %v6454 = vpop.f32.mrf.mxu0
      %v6455 = vadd.f32 0.0, %v6454
      %v6456 = vpop.f32.mrf.mxu0
      %v6457 = vadd.f32 0.0, %v6456
      %6458 = vdwg.mxu0
      %v6459 = vadd.f32 %v6070, %v6370
      %v6460 = vadd.f32 %v6071, %v6372
      %v6461 = vadd.f32 %v6072, %v6375
      %v6462 = vadd.f32 %v6073, %v6377
      %v6463 = vadd.f32 %v6074, %v6380
      %v6464 = vadd.f32 %v6075, %v6382
      %v6465 = vadd.f32 %v6076, %v6385
      %v6466 = vadd.f32 %v6077, %v6387
      %v6467 = vadd.f32 %v6078, %v6390
      %v6468 = vadd.f32 %v6079, %v6392
      %v6469 = vadd.f32 %v6080, %v6395
      %v6470 = vadd.f32 %v6081, %v6397
      %v6471 = vadd.f32 %v6082, %v6400
      %v6472 = vadd.f32 %v6083, %v6402
      %v6473 = vadd.f32 %v6084, %v6405
      %v6474 = vadd.f32 %v6085, %v6407
      %v6475 = vadd.f32 %v6086, %v6410
      %v6476 = vadd.f32 %v6087, %v6412
      %v6477 = vadd.f32 %v6088, %v6415
      %v6478 = vadd.f32 %v6089, %v6417
      %v6479 = vadd.f32 %v6090, %v6420
      %v6480 = vadd.f32 %v6091, %v6422
      %v6481 = vadd.f32 %v6092, %v6425
      %v6482 = vadd.f32 %v6093, %v6427
      %v6483 = vadd.f32 %v6094, %v6430
      %v6484 = vadd.f32 %v6095, %v6432
      %v6485 = vadd.f32 %v6096, %v6435
      %v6486 = vadd.f32 %v6097, %v6437
      %v6487 = vadd.f32 %v6098, %v6440
      %v6488 = vadd.f32 %v6099, %v6442
      %v6489 = vadd.f32 %v6100, %v6445
      %v6490 = vadd.f32 %v6101, %v6447
      %v6491 = vadd.f32 %v6102, %v6450
      %v6492 = vadd.f32 %v6103, %v6452
      %v6493 = vadd.f32 %v6104, %v6455
      %v6494 = vadd.f32 %v6105, %v6457
      %v6495 = vld [vmem:[#allocation2 + $0xa0] sm:$0x7]
      %s6496 = scalar_lea.vmem %s5, 224
      %v6497 = vld [vmem:[%s6496] sm:$0xf]
      %v6498 = vld [vmem:[%s6496 + $0x4] sm:$0xf]
      %v6499 = vld [vmem:[%s6496 + $0x8] sm:$0xf]
      %v6500 = vld [vmem:[%s6496 + $0xc] sm:$0xf]
      %v6501 = vld [vmem:[%s6496 + $0x10] sm:$0xf]
      %v6502 = vld [vmem:[%s6496 + $0x14] sm:$0xf]
      %v6503 = vld [vmem:[%s6496 + $0x18] sm:$0xf]
      %v6504 = vld [vmem:[%s6496 + $0x1c] sm:$0xf]
      %v6506 = vunpack.c.l.b16 %v6495
      %v6507 = vpack.c.b16 %v6506, %v6506
      %v6509 = vshrl.u32 %v6226, 16
      %v6511 = vrot.slane %v6509, 2
      %v6512 = vshll.u32 %v6226, 16
      %v6514 = vrot.slane %v6512, 3
      %v6515 = vor.u32 %v6511, %v6514
      %v6517 = vshrl.u32 %v6227, 16
      %v6519 = vrot.slane %v6517, 2
      %v6520 = vshll.u32 %v6227, 16
      %v6522 = vrot.slane %v6520, 3
      %v6523 = vor.u32 %v6519, %v6522
      %v6524 = vsel %vm2656, %v6515, %v6523
      %v6526 = vshrl.u32 %v6228, 16
      %v6528 = vrot.slane %v6526, 2
      %v6529 = vshll.u32 %v6228, 16
      %v6531 = vrot.slane %v6529, 3
      %v6532 = vor.u32 %v6528, %v6531
      %v6533 = vsel %vm2656, %v6523, %v6532
      %v6535 = vshrl.u32 %v6229, 16
      %v6537 = vrot.slane %v6535, 2
      %v6538 = vshll.u32 %v6229, 16
      %v6540 = vrot.slane %v6538, 3
      %v6541 = vor.u32 %v6537, %v6540
      %v6542 = vsel %vm2656, %v6532, %v6541
      %v6544 = vshrl.u32 %v6230, 16
      %v6546 = vrot.slane %v6544, 2
      %v6547 = vshll.u32 %v6230, 16
      %v6549 = vrot.slane %v6547, 3
      %v6550 = vor.u32 %v6546, %v6549
      %v6551 = vsel %vm2656, %v6541, %v6550
      %v6553 = vshrl.u32 %v6231, 16
      %v6555 = vrot.slane %v6553, 2
      %v6556 = vshll.u32 %v6231, 16
      %v6558 = vrot.slane %v6556, 3
      %v6559 = vor.u32 %v6555, %v6558
      %v6560 = vsel %vm2656, %v6550, %v6559
      %v6562 = vshrl.u32 %v6232, 16
      %v6564 = vrot.slane %v6562, 2
      %v6565 = vshll.u32 %v6232, 16
      %v6567 = vrot.slane %v6565, 3
      %v6568 = vor.u32 %v6564, %v6567
      %v6569 = vsel %vm2656, %v6559, %v6568
      %v6571 = vshrl.u32 %v6233, 16
      %v6573 = vrot.slane %v6571, 2
      %v6574 = vshll.u32 %v6233, 16
      %v6576 = vrot.slane %v6574, 3
      %v6577 = vor.u32 %v6573, %v6576
      %v6578 = vsel %vm2656, %v6568, %v6577
      %v6580 = vshrl.u32 %v6234, 16
      %v6582 = vrot.slane %v6580, 2
      %v6583 = vshll.u32 %v6234, 16
      %v6585 = vrot.slane %v6583, 3
      %v6586 = vor.u32 %v6582, %v6585
      %v6587 = vsel %vm2656, %v6577, %v6586
      %v6589 = vshrl.u32 %v6235, 16
      %v6591 = vrot.slane %v6589, 2
      %v6592 = vshll.u32 %v6235, 16
      %v6594 = vrot.slane %v6592, 3
      %v6595 = vor.u32 %v6591, %v6594
      %v6596 = vsel %vm2656, %v6586, %v6595
      %v6598 = vshrl.u32 %v6236, 16
      %v6600 = vrot.slane %v6598, 2
      %v6601 = vshll.u32 %v6236, 16
      %v6603 = vrot.slane %v6601, 3
      %v6604 = vor.u32 %v6600, %v6603
      %v6605 = vsel %vm2656, %v6595, %v6604
      %v6607 = vshrl.u32 %v6237, 16
      %v6609 = vrot.slane %v6607, 2
      %v6610 = vshll.u32 %v6237, 16
      %v6612 = vrot.slane %v6610, 3
      %v6613 = vor.u32 %v6609, %v6612
      %v6614 = vsel %vm2656, %v6604, %v6613
      %v6616 = vshrl.u32 %v6238, 16
      %v6618 = vrot.slane %v6616, 2
      %v6619 = vshll.u32 %v6238, 16
      %v6621 = vrot.slane %v6619, 3
      %v6622 = vor.u32 %v6618, %v6621
      %v6623 = vsel %vm2656, %v6613, %v6622
      %v6625 = vshrl.u32 %v6239, 16
      %v6627 = vrot.slane %v6625, 2
      %v6628 = vshll.u32 %v6239, 16
      %v6630 = vrot.slane %v6628, 3
      %v6631 = vor.u32 %v6627, %v6630
      %v6632 = vsel %vm2656, %v6622, %v6631
      %v6634 = vshrl.u32 %v6240, 16
      %v6636 = vrot.slane %v6634, 2
      %v6637 = vshll.u32 %v6240, 16
      %v6639 = vrot.slane %v6637, 3
      %v6640 = vor.u32 %v6636, %v6639
      %v6641 = vsel %vm2656, %v6631, %v6640
      %v6643 = vshrl.u32 %v6241, 16
      %v6645 = vrot.slane %v6643, 2
      %v6646 = vshll.u32 %v6241, 16
      %v6648 = vrot.slane %v6646, 3
      %v6649 = vor.u32 %v6645, %v6648
      %v6650 = vsel %vm2656, %v6640, %v6649
      %v6652 = vshrl.u32 %v6242, 16
      %v6654 = vrot.slane %v6652, 2
      %v6655 = vshll.u32 %v6242, 16
      %v6657 = vrot.slane %v6655, 3
      %v6658 = vor.u32 %v6654, %v6657
      %v6659 = vsel %vm2656, %v6649, %v6658
      %v6661 = vshrl.u32 %v6243, 16
      %v6663 = vrot.slane %v6661, 2
      %v6664 = vshll.u32 %v6243, 16
      %v6666 = vrot.slane %v6664, 3
      %v6667 = vor.u32 %v6663, %v6666
      %v6668 = vsel %vm2656, %v6658, %v6667
      %v6670 = vshrl.u32 %v6507, 16
      %v6672 = vrot.slane %v6670, 2
      %v6673 = vshll.u32 %v6507, 16
      %v6675 = vrot.slane %v6673, 3
      %v6676 = vor.u32 %v6672, %v6675
      %v6677 = vsel %vm2656, %v6667, %v6676
      %v6686 = vunpack.c.l.b16 %v6497
      %v6687 = vunpack.c.l.b16 %v6498
      %v6688 = vunpack.c.l.b16 %v6499
      %v6689 = vunpack.c.l.b16 %v6500
      %v6690 = vunpack.c.l.b16 %v6501
      %v6691 = vunpack.c.l.b16 %v6502
      %v6692 = vunpack.c.l.b16 %v6503
      %v6693 = vunpack.c.l.b16 %v6504
      %v6694 = vpack.c.b16 %v6687, %v6686
      %v6695 = vpack.c.b16 %v6689, %v6688
      %v6696 = vpack.c.b16 %v6691, %v6690
      %v6697 = vpack.c.b16 %v6693, %v6692
      %v6703 = vsel %vm627, %v6524, 0
      %v6706 = vsel %vm627, %v6533, 0
      %v6709 = vsel %vm627, %v6542, 0
      %v6712 = vsel %vm627, %v6551, 0
      %v6715 = vsel %vm627, %v6560, 0
      %v6718 = vsel %vm627, %v6569, 0
      %v6721 = vsel %vm627, %v6578, 0
      %v6724 = vsel %vm627, %v6587, 0
      %v6727 = vsel %vm627, %v6596, 0
      %v6730 = vsel %vm627, %v6605, 0
      %v6733 = vsel %vm627, %v6614, 0
      %v6736 = vsel %vm627, %v6623, 0
      %v6739 = vsel %vm627, %v6632, 0
      %v6742 = vsel %vm627, %v6641, 0
      %v6745 = vsel %vm627, %v6650, 0
      %v6748 = vsel %vm627, %v6659, 0
      %v6751 = vsel %vm627, %v6668, 0
      %v6754 = vsel %vm627, %v6677, 0
      %6756 = vmatpush.bf16.msra.mxu0 0
      %6757 = vmatpush.bf16.msra.mxu0 0
      %6758 = vmatpush.bf16.msra.mxu0 0
      %6759 = vmatpush.bf16.msra.mxu0 0
      %6760 = vmatpush.bf16.msra.mxu0 %v6697
      %6761 = vmatpush.bf16.msra.mxu0 %v6696
      %6762 = vmatpush.bf16.msra.mxu0 %v6695
      %6763 = vmatpush.bf16.msra.mxu0 %v6694
      %6764 = vmatmul.bf16.gmra.mxu0 %v6703
      %v6765 = vpop.f32.mrf.mxu0
      %v6766 = vadd.f32 0.0, %v6765
      %v6767 = vpop.f32.mrf.mxu0
      %v6768 = vadd.f32 0.0, %v6767
      %6769 = vmatmul.bf16.gmra.mxu0 %v6706
      %v6770 = vpop.f32.mrf.mxu0
      %v6771 = vadd.f32 0.0, %v6770
      %v6772 = vpop.f32.mrf.mxu0
      %v6773 = vadd.f32 0.0, %v6772
      %6774 = vmatmul.bf16.gmra.mxu0 %v6709
      %v6775 = vpop.f32.mrf.mxu0
      %v6776 = vadd.f32 0.0, %v6775
      %v6777 = vpop.f32.mrf.mxu0
      %v6778 = vadd.f32 0.0, %v6777
      %6779 = vmatmul.bf16.gmra.mxu0 %v6712
      %v6780 = vpop.f32.mrf.mxu0
      %v6781 = vadd.f32 0.0, %v6780
      %v6782 = vpop.f32.mrf.mxu0
      %v6783 = vadd.f32 0.0, %v6782
      %6784 = vmatmul.bf16.gmra.mxu0 %v6715
      %v6785 = vpop.f32.mrf.mxu0
      %v6786 = vadd.f32 0.0, %v6785
      %v6787 = vpop.f32.mrf.mxu0
      %v6788 = vadd.f32 0.0, %v6787
      %6789 = vmatmul.bf16.gmra.mxu0 %v6718
      %v6790 = vpop.f32.mrf.mxu0
      %v6791 = vadd.f32 0.0, %v6790
      %v6792 = vpop.f32.mrf.mxu0
      %v6793 = vadd.f32 0.0, %v6792
      %6794 = vmatmul.bf16.gmra.mxu0 %v6721
      %v6795 = vpop.f32.mrf.mxu0
      %v6796 = vadd.f32 0.0, %v6795
      %v6797 = vpop.f32.mrf.mxu0
      %v6798 = vadd.f32 0.0, %v6797
      %6799 = vmatmul.bf16.gmra.mxu0 %v6724
      %v6800 = vpop.f32.mrf.mxu0
      %v6801 = vadd.f32 0.0, %v6800
      %v6802 = vpop.f32.mrf.mxu0
      %v6803 = vadd.f32 0.0, %v6802
      %6804 = vmatmul.bf16.gmra.mxu0 %v6727
      %v6805 = vpop.f32.mrf.mxu0
      %v6806 = vadd.f32 0.0, %v6805
      %v6807 = vpop.f32.mrf.mxu0
      %v6808 = vadd.f32 0.0, %v6807
      %6809 = vmatmul.bf16.gmra.mxu0 %v6730
      %v6810 = vpop.f32.mrf.mxu0
      %v6811 = vadd.f32 0.0, %v6810
      %v6812 = vpop.f32.mrf.mxu0
      %v6813 = vadd.f32 0.0, %v6812
      %6814 = vmatmul.bf16.gmra.mxu0 %v6733
      %v6815 = vpop.f32.mrf.mxu0
      %v6816 = vadd.f32 0.0, %v6815
      %v6817 = vpop.f32.mrf.mxu0
      %v6818 = vadd.f32 0.0, %v6817
      %6819 = vmatmul.bf16.gmra.mxu0 %v6736
      %v6820 = vpop.f32.mrf.mxu0
      %v6821 = vadd.f32 0.0, %v6820
      %v6822 = vpop.f32.mrf.mxu0
      %v6823 = vadd.f32 0.0, %v6822
      %6824 = vmatmul.bf16.gmra.mxu0 %v6739
      %v6825 = vpop.f32.mrf.mxu0
      %v6826 = vadd.f32 0.0, %v6825
      %v6827 = vpop.f32.mrf.mxu0
      %v6828 = vadd.f32 0.0, %v6827
      %6829 = vmatmul.bf16.gmra.mxu0 %v6742
      %v6830 = vpop.f32.mrf.mxu0
      %v6831 = vadd.f32 0.0, %v6830
      %v6832 = vpop.f32.mrf.mxu0
      %v6833 = vadd.f32 0.0, %v6832
      %6834 = vmatmul.bf16.gmra.mxu0 %v6745
      %v6835 = vpop.f32.mrf.mxu0
      %v6836 = vadd.f32 0.0, %v6835
      %v6837 = vpop.f32.mrf.mxu0
      %v6838 = vadd.f32 0.0, %v6837
      %6839 = vmatmul.bf16.gmra.mxu0 %v6748
      %v6840 = vpop.f32.mrf.mxu0
      %v6841 = vadd.f32 0.0, %v6840
      %v6842 = vpop.f32.mrf.mxu0
      %v6843 = vadd.f32 0.0, %v6842
      %6844 = vmatmul.bf16.gmra.mxu0 %v6751
      %v6845 = vpop.f32.mrf.mxu0
      %v6846 = vadd.f32 0.0, %v6845
      %v6847 = vpop.f32.mrf.mxu0
      %v6848 = vadd.f32 0.0, %v6847
      %6849 = vmatmul.bf16.gmra.mxu0 %v6754
      %v6850 = vpop.f32.mrf.mxu0
      %v6851 = vadd.f32 0.0, %v6850
      %v6852 = vpop.f32.mrf.mxu0
      %v6853 = vadd.f32 0.0, %v6852
      %6854 = vdwg.mxu0
      %v6855 = vadd.f32 %v6459, %v6766
      %v6856 = vadd.f32 %v6460, %v6768
      %v6857 = vadd.f32 %v6461, %v6771
      %v6858 = vadd.f32 %v6462, %v6773
      %v6859 = vadd.f32 %v6463, %v6776
      %v6860 = vadd.f32 %v6464, %v6778
      %v6861 = vadd.f32 %v6465, %v6781
      %v6862 = vadd.f32 %v6466, %v6783
      %v6863 = vadd.f32 %v6467, %v6786
      %v6864 = vadd.f32 %v6468, %v6788
      %v6865 = vadd.f32 %v6469, %v6791
      %v6866 = vadd.f32 %v6470, %v6793
      %v6867 = vadd.f32 %v6471, %v6796
      %v6868 = vadd.f32 %v6472, %v6798
      %v6869 = vadd.f32 %v6473, %v6801
      %v6870 = vadd.f32 %v6474, %v6803
      %v6871 = vadd.f32 %v6475, %v6806
      %v6872 = vadd.f32 %v6476, %v6808
      %v6873 = vadd.f32 %v6477, %v6811
      %v6874 = vadd.f32 %v6478, %v6813
      %v6875 = vadd.f32 %v6479, %v6816
      %v6876 = vadd.f32 %v6480, %v6818
      %v6877 = vadd.f32 %v6481, %v6821
      %v6878 = vadd.f32 %v6482, %v6823
      %v6879 = vadd.f32 %v6483, %v6826
      %v6880 = vadd.f32 %v6484, %v6828
      %v6881 = vadd.f32 %v6485, %v6831
      %v6882 = vadd.f32 %v6486, %v6833
      %v6883 = vadd.f32 %v6487, %v6836
      %v6884 = vadd.f32 %v6488, %v6838
      %v6885 = vadd.f32 %v6489, %v6841
      %v6886 = vadd.f32 %v6490, %v6843
      %v6887 = vadd.f32 %v6491, %v6846
      %v6888 = vadd.f32 %v6492, %v6848
      %v6889 = vadd.f32 %v6493, %v6851
      %v6890 = vadd.f32 %v6494, %v6853
      %v6891 = vld [vmem:[#allocation2 + $0x10] sm:$0x8]
      %s6892 = scalar_lea.vmem %s5, 256
      %v6893 = vld [vmem:[%s6892] sm:$0xf]
      %v6894 = vld [vmem:[%s6892 + $0x4] sm:$0xf]
      %v6895 = vld [vmem:[%s6892 + $0x8] sm:$0xf]
      %v6896 = vld [vmem:[%s6892 + $0xc] sm:$0xf]
      %v6897 = vld [vmem:[%s6892 + $0x10] sm:$0xf]
      %v6898 = vld [vmem:[%s6892 + $0x14] sm:$0xf]
      %v6899 = vld [vmem:[%s6892 + $0x18] sm:$0xf]
      %v6900 = vld [vmem:[%s6892 + $0x1c] sm:$0xf]
      %v6902 = vunpack.c.l.b16 %v6891
      %v6903 = vpack.c.b16 %v6190, %v6902
      %v6904 = vrot.slane %v6903, 3
      %v6905 = vrot.slane %v6227, 3
      %v6906 = vsel %vm3053, %v6904, %v6905
      %v6907 = vrot.slane %v6228, 3
      %v6908 = vsel %vm3053, %v6905, %v6907
      %v6909 = vrot.slane %v6229, 3
      %v6910 = vsel %vm3053, %v6907, %v6909
      %v6911 = vrot.slane %v6230, 3
      %v6912 = vsel %vm3053, %v6909, %v6911
      %v6913 = vrot.slane %v6231, 3
      %v6914 = vsel %vm3053, %v6911, %v6913
      %v6915 = vrot.slane %v6232, 3
      %v6916 = vsel %vm3053, %v6913, %v6915
      %v6917 = vrot.slane %v6233, 3
      %v6918 = vsel %vm3053, %v6915, %v6917
      %v6919 = vrot.slane %v6234, 3
      %v6920 = vsel %vm3053, %v6917, %v6919
      %v6921 = vrot.slane %v6235, 3
      %v6922 = vsel %vm3053, %v6919, %v6921
      %v6923 = vrot.slane %v6236, 3
      %v6924 = vsel %vm3053, %v6921, %v6923
      %v6925 = vrot.slane %v6237, 3
      %v6926 = vsel %vm3053, %v6923, %v6925
      %v6927 = vrot.slane %v6238, 3
      %v6928 = vsel %vm3053, %v6925, %v6927
      %v6929 = vrot.slane %v6239, 3
      %v6930 = vsel %vm3053, %v6927, %v6929
      %v6931 = vrot.slane %v6240, 3
      %v6932 = vsel %vm3053, %v6929, %v6931
      %v6933 = vrot.slane %v6241, 3
      %v6934 = vsel %vm3053, %v6931, %v6933
      %v6935 = vrot.slane %v6242, 3
      %v6936 = vsel %vm3053, %v6933, %v6935
      %v6937 = vrot.slane %v6243, 3
      %v6938 = vsel %vm3053, %v6935, %v6937
      %v6939 = vrot.slane %v6507, 3
      %v6940 = vsel %vm3053, %v6937, %v6939
      %v6949 = vunpack.c.l.b16 %v6893
      %v6950 = vunpack.c.l.b16 %v6894
      %v6951 = vunpack.c.l.b16 %v6895
      %v6952 = vunpack.c.l.b16 %v6896
      %v6953 = vunpack.c.l.b16 %v6897
      %v6954 = vunpack.c.l.b16 %v6898
      %v6955 = vunpack.c.l.b16 %v6899
      %v6956 = vunpack.c.l.b16 %v6900
      %v6957 = vpack.c.b16 %v6950, %v6949
      %v6958 = vpack.c.b16 %v6952, %v6951
      %v6959 = vpack.c.b16 %v6954, %v6953
      %v6960 = vpack.c.b16 %v6956, %v6955
      %v6966 = vsel %vm627, %v6906, 0
      %v6969 = vsel %vm627, %v6908, 0
      %v6972 = vsel %vm627, %v6910, 0
      %v6975 = vsel %vm627, %v6912, 0
      %v6978 = vsel %vm627, %v6914, 0
      %v6981 = vsel %vm627, %v6916, 0
      %v6984 = vsel %vm627, %v6918, 0
      %v6987 = vsel %vm627, %v6920, 0
      %v6990 = vsel %vm627, %v6922, 0
      %v6993 = vsel %vm627, %v6924, 0
      %v6996 = vsel %vm627, %v6926, 0
      %v6999 = vsel %vm627, %v6928, 0
      %v7002 = vsel %vm627, %v6930, 0
      %v7005 = vsel %vm627, %v6932, 0
      %v7008 = vsel %vm627, %v6934, 0
      %v7011 = vsel %vm627, %v6936, 0
      %v7014 = vsel %vm627, %v6938, 0
      %v7017 = vsel %vm627, %v6940, 0
      %7019 = vmatpush.bf16.msra.mxu0 0
      %7020 = vmatpush.bf16.msra.mxu0 0
      %7021 = vmatpush.bf16.msra.mxu0 0
      %7022 = vmatpush.bf16.msra.mxu0 0
      %7023 = vmatpush.bf16.msra.mxu0 %v6960
      %7024 = vmatpush.bf16.msra.mxu0 %v6959
      %7025 = vmatpush.bf16.msra.mxu0 %v6958
      %7026 = vmatpush.bf16.msra.mxu0 %v6957
      %7027 = vmatmul.bf16.gmra.mxu0 %v6966
      %v7028 = vpop.f32.mrf.mxu0
      %v7029 = vadd.f32 0.0, %v7028
      %v7030 = vpop.f32.mrf.mxu0
      %v7031 = vadd.f32 0.0, %v7030
      %7032 = vmatmul.bf16.gmra.mxu0 %v6969
      %v7033 = vpop.f32.mrf.mxu0
      %v7034 = vadd.f32 0.0, %v7033
      %v7035 = vpop.f32.mrf.mxu0
      %v7036 = vadd.f32 0.0, %v7035
      %7037 = vmatmul.bf16.gmra.mxu0 %v6972
      %v7038 = vpop.f32.mrf.mxu0
      %v7039 = vadd.f32 0.0, %v7038
      %v7040 = vpop.f32.mrf.mxu0
      %v7041 = vadd.f32 0.0, %v7040
      %7042 = vmatmul.bf16.gmra.mxu0 %v6975
      %v7043 = vpop.f32.mrf.mxu0
      %v7044 = vadd.f32 0.0, %v7043
      %v7045 = vpop.f32.mrf.mxu0
      %v7046 = vadd.f32 0.0, %v7045
      %7047 = vmatmul.bf16.gmra.mxu0 %v6978
      %v7048 = vpop.f32.mrf.mxu0
      %v7049 = vadd.f32 0.0, %v7048
      %v7050 = vpop.f32.mrf.mxu0
      %v7051 = vadd.f32 0.0, %v7050
      %7052 = vmatmul.bf16.gmra.mxu0 %v6981
      %v7053 = vpop.f32.mrf.mxu0
      %v7054 = vadd.f32 0.0, %v7053
      %v7055 = vpop.f32.mrf.mxu0
      %v7056 = vadd.f32 0.0, %v7055
      %7057 = vmatmul.bf16.gmra.mxu0 %v6984
      %v7058 = vpop.f32.mrf.mxu0
      %v7059 = vadd.f32 0.0, %v7058
      %v7060 = vpop.f32.mrf.mxu0
      %v7061 = vadd.f32 0.0, %v7060
      %7062 = vmatmul.bf16.gmra.mxu0 %v6987
      %v7063 = vpop.f32.mrf.mxu0
      %v7064 = vadd.f32 0.0, %v7063
      %v7065 = vpop.f32.mrf.mxu0
      %v7066 = vadd.f32 0.0, %v7065
      %7067 = vmatmul.bf16.gmra.mxu0 %v6990
      %v7068 = vpop.f32.mrf.mxu0
      %v7069 = vadd.f32 0.0, %v7068
      %v7070 = vpop.f32.mrf.mxu0
      %v7071 = vadd.f32 0.0, %v7070
      %7072 = vmatmul.bf16.gmra.mxu0 %v6993
      %v7073 = vpop.f32.mrf.mxu0
      %v7074 = vadd.f32 0.0, %v7073
      %v7075 = vpop.f32.mrf.mxu0
      %v7076 = vadd.f32 0.0, %v7075
      %7077 = vmatmul.bf16.gmra.mxu0 %v6996
      %v7078 = vpop.f32.mrf.mxu0
      %v7079 = vadd.f32 0.0, %v7078
      %v7080 = vpop.f32.mrf.mxu0
      %v7081 = vadd.f32 0.0, %v7080
      %7082 = vmatmul.bf16.gmra.mxu0 %v6999
      %v7083 = vpop.f32.mrf.mxu0
      %v7084 = vadd.f32 0.0, %v7083
      %v7085 = vpop.f32.mrf.mxu0
      %v7086 = vadd.f32 0.0, %v7085
      %7087 = vmatmul.bf16.gmra.mxu0 %v7002
      %v7088 = vpop.f32.mrf.mxu0
      %v7089 = vadd.f32 0.0, %v7088
      %v7090 = vpop.f32.mrf.mxu0
      %v7091 = vadd.f32 0.0, %v7090
      %7092 = vmatmul.bf16.gmra.mxu0 %v7005
      %v7093 = vpop.f32.mrf.mxu0
      %v7094 = vadd.f32 0.0, %v7093
      %v7095 = vpop.f32.mrf.mxu0
      %v7096 = vadd.f32 0.0, %v7095
      %7097 = vmatmul.bf16.gmra.mxu0 %v7008
      %v7098 = vpop.f32.mrf.mxu0
      %v7099 = vadd.f32 0.0, %v7098
      %v7100 = vpop.f32.mrf.mxu0
      %v7101 = vadd.f32 0.0, %v7100
      %7102 = vmatmul.bf16.gmra.mxu0 %v7011
      %v7103 = vpop.f32.mrf.mxu0
      %v7104 = vadd.f32 0.0, %v7103
      %v7105 = vpop.f32.mrf.mxu0
      %v7106 = vadd.f32 0.0, %v7105
      %7107 = vmatmul.bf16.gmra.mxu0 %v7014
      %v7108 = vpop.f32.mrf.mxu0
      %v7109 = vadd.f32 0.0, %v7108
      %v7110 = vpop.f32.mrf.mxu0
      %v7111 = vadd.f32 0.0, %v7110
      %7112 = vmatmul.bf16.gmra.mxu0 %v7017
      %v7113 = vpop.f32.mrf.mxu0
      %v7114 = vadd.f32 0.0, %v7113
      %v7115 = vpop.f32.mrf.mxu0
      %v7116 = vadd.f32 0.0, %v7115
      %7117 = vdwg.mxu0
      %v7118 = vadd.f32 %v6855, %v7029
      %v7119 = vadd.f32 %v6856, %v7031
      %v7120 = vadd.f32 %v6857, %v7034
      %v7121 = vadd.f32 %v6858, %v7036
      %v7122 = vadd.f32 %v6859, %v7039
      %v7123 = vadd.f32 %v6860, %v7041
      %v7124 = vadd.f32 %v6861, %v7044
      %v7125 = vadd.f32 %v6862, %v7046
      %v7126 = vadd.f32 %v6863, %v7049
      %v7127 = vadd.f32 %v6864, %v7051
      %v7128 = vadd.f32 %v6865, %v7054
      %v7129 = vadd.f32 %v6866, %v7056
      %v7130 = vadd.f32 %v6867, %v7059
      %v7131 = vadd.f32 %v6868, %v7061
      %v7132 = vadd.f32 %v6869, %v7064
      %v7133 = vadd.f32 %v6870, %v7066
      %v7134 = vadd.f32 %v6871, %v7069
      %v7135 = vadd.f32 %v6872, %v7071
      %v7136 = vadd.f32 %v6873, %v7074
      %v7137 = vadd.f32 %v6874, %v7076
      %v7138 = vadd.f32 %v6875, %v7079
      %v7139 = vadd.f32 %v6876, %v7081
      %v7140 = vadd.f32 %v6877, %v7084
      %v7141 = vadd.f32 %v6878, %v7086
      %v7142 = vadd.f32 %v6879, %v7089
      %v7143 = vadd.f32 %v6880, %v7091
      %v7144 = vadd.f32 %v6881, %v7094
      %v7145 = vadd.f32 %v6882, %v7096
      %v7146 = vadd.f32 %v6883, %v7099
      %v7147 = vadd.f32 %v6884, %v7101
      %v7148 = vadd.f32 %v6885, %v7104
      %v7149 = vadd.f32 %v6886, %v7106
      %v7150 = vadd.f32 %v6887, %v7109
      %v7151 = vadd.f32 %v6888, %v7111
      %v7152 = vadd.f32 %v6889, %v7114
      %v7153 = vadd.f32 %v6890, %v7116
      %v7154 = vld [vmem:[%s300 + $0x8] sm:$0xe]
      %v7155 = vld [vmem:[%s300 + $0xc] sm:$0xf]
      %v7156 = vld [vmem:[%s300 + $0x10] sm:$0xf]
      %v7157 = vld [vmem:[%s300 + $0x14] sm:$0xf]
      %v7158 = vld [vmem:[%s300 + $0x18] sm:$0xf]
      %v7159 = vld [vmem:[%s300 + $0x1c] sm:$0xf]
      %v7160 = vld [vmem:[%s300 + $0x20] sm:$0xf]
      %v7161 = vld [vmem:[%s300 + $0x24] sm:$0xf]
      %v7162 = vld [vmem:[%s300 + $0x28] sm:$0xf]
      %v7163 = vld [vmem:[%s300 + $0x2c] sm:$0xf]
      %v7164 = vld [vmem:[%s300 + $0x30] sm:$0xf]
      %v7165 = vld [vmem:[%s300 + $0x34] sm:$0xf]
      %v7166 = vld [vmem:[%s300 + $0x38] sm:$0xf]
      %v7167 = vld [vmem:[%s300 + $0x3c] sm:$0xf]
      %v7168 = vld [vmem:[%s300 + $0x40] sm:$0xf]
      %v7169 = vld [vmem:[%s300 + $0x44] sm:$0xf]
      %v7170 = vld [vmem:[%s300 + $0x48] sm:$0xf]
      %v7171 = vld [vmem:[%s300 + $0x4c] sm:$0xf]
      %v7172 = vld [vmem:[%s300 + $0x50] sm:$0xf]
      %v7173 = vld [vmem:[%s300 + $0x54] sm:$0xf]
      %v7174 = vld [vmem:[%s300 + $0x58] sm:$0xf]
      %v7175 = vld [vmem:[%s300 + $0x5c] sm:$0xf]
      %v7176 = vld [vmem:[%s300 + $0x60] sm:$0xf]
      %v7177 = vld [vmem:[%s300 + $0x64] sm:$0xf]
      %v7178 = vld [vmem:[%s300 + $0x68] sm:$0xf]
      %v7179 = vld [vmem:[%s300 + $0x6c] sm:$0xf]
      %v7180 = vld [vmem:[%s300 + $0x70] sm:$0xf]
      %v7181 = vld [vmem:[%s300 + $0x74] sm:$0xf]
      %v7182 = vld [vmem:[%s300 + $0x78] sm:$0xf]
      %v7183 = vld [vmem:[%s300 + $0x7c] sm:$0xf]
      %v7184 = vld [vmem:[%s300 + $0x80] sm:$0xf]
      %v7185 = vld [vmem:[%s300 + $0x84] sm:$0xf]
      %v7186 = vld [vmem:[%s300 + $0x88] sm:$0xf]
      %v7187 = vld [vmem:[%s300 + $0x8c] sm:$0xf]
      %v7188 = vld [vmem:[%s300 + $0x90] sm:$0xf]
      %v7189 = vld [vmem:[%s300 + $0x94] sm:$0xf]
      %v7190 = vld [vmem:[%s300 + $0x98] sm:$0x3]
      %v7191 = vunpack.c.l.bf16 %v7154
      %v7192 = vunpack.c.l.bf16 %v7155
      %v7193 = vunpack.c.l.bf16 %v7156
      %v7194 = vunpack.c.l.bf16 %v7157
      %v7195 = vunpack.c.l.bf16 %v7158
      %v7196 = vunpack.c.l.bf16 %v7159
      %v7197 = vunpack.c.l.bf16 %v7160
      %v7198 = vunpack.c.l.bf16 %v7161
      %v7199 = vunpack.c.l.bf16 %v7162
      %v7200 = vunpack.c.l.bf16 %v7163
      %v7201 = vunpack.c.l.bf16 %v7164
      %v7202 = vunpack.c.l.bf16 %v7165
      %v7203 = vunpack.c.l.bf16 %v7166
      %v7204 = vunpack.c.l.bf16 %v7167
      %v7205 = vunpack.c.l.bf16 %v7168
      %v7206 = vunpack.c.l.bf16 %v7169
      %v7207 = vunpack.c.l.bf16 %v7170
      %v7208 = vunpack.c.l.bf16 %v7171
      %v7209 = vunpack.c.l.bf16 %v7172
      %v7210 = vunpack.c.l.bf16 %v7173
      %v7211 = vunpack.c.l.bf16 %v7174
      %v7212 = vunpack.c.l.bf16 %v7175
      %v7213 = vunpack.c.l.bf16 %v7176
      %v7214 = vunpack.c.l.bf16 %v7177
      %v7215 = vunpack.c.l.bf16 %v7178
      %v7216 = vunpack.c.l.bf16 %v7179
      %v7217 = vunpack.c.l.bf16 %v7180
      %v7218 = vunpack.c.l.bf16 %v7181
      %v7219 = vunpack.c.l.bf16 %v7182
      %v7220 = vunpack.c.l.bf16 %v7183
      %v7221 = vunpack.c.l.bf16 %v7184
      %v7222 = vunpack.c.l.bf16 %v7185
      %v7223 = vunpack.c.l.bf16 %v7186
      %v7224 = vunpack.c.l.bf16 %v7187
      %v7225 = vunpack.c.l.bf16 %v7188
      %v7226 = vunpack.c.l.bf16 %v7189
      %v7227 = vunpack.c.l.bf16 %v7190
      %v7228 = vld [vmem:[%s6] sm:$0x1]
      %v7230 = vperm.slane %v7228, 0
      %v7232 = vmul.f32 %v7118, %v7230
      %v7233 = vmul.f32 %v7119, %v7230
      %v7234 = vmul.f32 %v7120, %v7230
      %v7235 = vmul.f32 %v7121, %v7230
      %v7236 = vmul.f32 %v7122, %v7230
      %v7237 = vmul.f32 %v7123, %v7230
      %v7238 = vmul.f32 %v7124, %v7230
      %v7239 = vmul.f32 %v7125, %v7230
      %v7240 = vmul.f32 %v7126, %v7230
      %v7241 = vmul.f32 %v7127, %v7230
      %v7242 = vmul.f32 %v7128, %v7230
      %v7243 = vmul.f32 %v7129, %v7230
      %v7244 = vmul.f32 %v7130, %v7230
      %v7245 = vmul.f32 %v7131, %v7230
      %v7246 = vmul.f32 %v7132, %v7230
      %v7247 = vmul.f32 %v7133, %v7230
      %v7248 = vmul.f32 %v7134, %v7230
      %v7249 = vmul.f32 %v7135, %v7230
      %v7250 = vmul.f32 %v7136, %v7230
      %v7251 = vmul.f32 %v7137, %v7230
      %v7252 = vmul.f32 %v7138, %v7230
      %v7253 = vmul.f32 %v7139, %v7230
      %v7254 = vmul.f32 %v7140, %v7230
      %v7255 = vmul.f32 %v7141, %v7230
      %v7256 = vmul.f32 %v7142, %v7230
      %v7257 = vmul.f32 %v7143, %v7230
      %v7258 = vmul.f32 %v7144, %v7230
      %v7259 = vmul.f32 %v7145, %v7230
      %v7260 = vmul.f32 %v7146, %v7230
      %v7261 = vmul.f32 %v7147, %v7230
      %v7262 = vmul.f32 %v7148, %v7230
      %v7263 = vmul.f32 %v7149, %v7230
      %v7264 = vmul.f32 %v7150, %v7230
      %v7265 = vmul.f32 %v7151, %v7230
      %v7266 = vmul.f32 %v7152, %v7230
      %v7267 = vmul.f32 %v7153, %v7230
      %v7268 = vld [vmem:[%s7] sm:$0x1]
      %v7270 = vperm.slane %v7268, 0
      %v7272 = vadd.f32 %v7232, %v7270
      %v7273 = vadd.f32 %v7233, %v7270
      %v7274 = vadd.f32 %v7234, %v7270
      %v7275 = vadd.f32 %v7235, %v7270
      %v7276 = vadd.f32 %v7236, %v7270
      %v7277 = vadd.f32 %v7237, %v7270
      %v7278 = vadd.f32 %v7238, %v7270
      %v7279 = vadd.f32 %v7239, %v7270
      %v7280 = vadd.f32 %v7240, %v7270
      %v7281 = vadd.f32 %v7241, %v7270
      %v7282 = vadd.f32 %v7242, %v7270
      %v7283 = vadd.f32 %v7243, %v7270
      %v7284 = vadd.f32 %v7244, %v7270
      %v7285 = vadd.f32 %v7245, %v7270
      %v7286 = vadd.f32 %v7246, %v7270
      %v7287 = vadd.f32 %v7247, %v7270
      %v7288 = vadd.f32 %v7248, %v7270
      %v7289 = vadd.f32 %v7249, %v7270
      %v7290 = vadd.f32 %v7250, %v7270
      %v7291 = vadd.f32 %v7251, %v7270
      %v7292 = vadd.f32 %v7252, %v7270
      %v7293 = vadd.f32 %v7253, %v7270
      %v7294 = vadd.f32 %v7254, %v7270
      %v7295 = vadd.f32 %v7255, %v7270
      %v7296 = vadd.f32 %v7256, %v7270
      %v7297 = vadd.f32 %v7257, %v7270
      %v7298 = vadd.f32 %v7258, %v7270
      %v7299 = vadd.f32 %v7259, %v7270
      %v7300 = vadd.f32 %v7260, %v7270
      %v7301 = vadd.f32 %v7261, %v7270
      %v7302 = vadd.f32 %v7262, %v7270
      %v7303 = vadd.f32 %v7263, %v7270
      %v7304 = vadd.f32 %v7264, %v7270
      %v7305 = vadd.f32 %v7265, %v7270
      %v7306 = vadd.f32 %v7266, %v7270
      %v7307 = vadd.f32 %v7267, %v7270
      %vm7345 = vcmask 1044480
      %v7346 = vrot.slane %v7191, 3
      %v7347 = vrot.slane %v7192, 3
      %v7348 = vsel %vm7345, %v7346, %v7347
      %v7349 = vrot.slane %v7193, 3
      %v7350 = vsel %vm7345, %v7347, %v7349
      %v7351 = vrot.slane %v7194, 3
      %v7352 = vsel %vm7345, %v7349, %v7351
      %v7353 = vrot.slane %v7195, 3
      %v7354 = vsel %vm7345, %v7351, %v7353
      %v7355 = vrot.slane %v7196, 3
      %v7356 = vsel %vm7345, %v7353, %v7355
      %v7357 = vrot.slane %v7197, 3
      %v7358 = vsel %vm7345, %v7355, %v7357
      %v7359 = vrot.slane %v7198, 3
      %v7360 = vsel %vm7345, %v7357, %v7359
      %v7361 = vrot.slane %v7199, 3
      %v7362 = vsel %vm7345, %v7359, %v7361
      %v7363 = vrot.slane %v7200, 3
      %v7364 = vsel %vm7345, %v7361, %v7363
      %v7365 = vrot.slane %v7201, 3
      %v7366 = vsel %vm7345, %v7363, %v7365
      %v7367 = vrot.slane %v7202, 3
      %v7368 = vsel %vm7345, %v7365, %v7367
      %v7369 = vrot.slane %v7203, 3
      %v7370 = vsel %vm7345, %v7367, %v7369
      %v7371 = vrot.slane %v7204, 3
      %v7372 = vsel %vm7345, %v7369, %v7371
      %v7373 = vrot.slane %v7205, 3
      %v7374 = vsel %vm7345, %v7371, %v7373
      %v7375 = vrot.slane %v7206, 3
      %v7376 = vsel %vm7345, %v7373, %v7375
      %v7377 = vrot.slane %v7207, 3
      %v7378 = vsel %vm7345, %v7375, %v7377
      %v7379 = vrot.slane %v7208, 3
      %v7380 = vsel %vm7345, %v7377, %v7379
      %v7381 = vrot.slane %v7209, 3
      %v7382 = vsel %vm7345, %v7379, %v7381
      %v7383 = vrot.slane %v7210, 3
      %v7384 = vsel %vm7345, %v7381, %v7383
      %v7385 = vrot.slane %v7211, 3
      %v7386 = vsel %vm7345, %v7383, %v7385
      %v7387 = vrot.slane %v7212, 3
      %v7388 = vsel %vm7345, %v7385, %v7387
      %v7389 = vrot.slane %v7213, 3
      %v7390 = vsel %vm7345, %v7387, %v7389
      %v7391 = vrot.slane %v7214, 3
      %v7392 = vsel %vm7345, %v7389, %v7391
      %v7393 = vrot.slane %v7215, 3
      %v7394 = vsel %vm7345, %v7391, %v7393
      %v7395 = vrot.slane %v7216, 3
      %v7396 = vsel %vm7345, %v7393, %v7395
      %v7397 = vrot.slane %v7217, 3
      %v7398 = vsel %vm7345, %v7395, %v7397
      %v7399 = vrot.slane %v7218, 3
      %v7400 = vsel %vm7345, %v7397, %v7399
      %v7401 = vrot.slane %v7219, 3
      %v7402 = vsel %vm7345, %v7399, %v7401
      %v7403 = vrot.slane %v7220, 3
      %v7404 = vsel %vm7345, %v7401, %v7403
      %v7405 = vrot.slane %v7221, 3
      %v7406 = vsel %vm7345, %v7403, %v7405
      %v7407 = vrot.slane %v7222, 3
      %v7408 = vsel %vm7345, %v7405, %v7407
      %v7409 = vrot.slane %v7223, 3
      %v7410 = vsel %vm7345, %v7407, %v7409
      %v7411 = vrot.slane %v7224, 3
      %v7412 = vsel %vm7345, %v7409, %v7411
      %v7413 = vrot.slane %v7225, 3
      %v7414 = vsel %vm7345, %v7411, %v7413
      %v7415 = vrot.slane %v7226, 3
      %v7416 = vsel %vm7345, %v7413, %v7415
      %v7417 = vrot.slane %v7227, 3
      %v7418 = vsel %vm7345, %v7415, %v7417
      %v7455 = vadd.f32 %v7272, %v7348
      %v7456 = vadd.f32 %v7273, %v7350
      %v7457 = vadd.f32 %v7274, %v7352
      %v7458 = vadd.f32 %v7275, %v7354
      %v7459 = vadd.f32 %v7276, %v7356
      %v7460 = vadd.f32 %v7277, %v7358
      %v7461 = vadd.f32 %v7278, %v7360
      %v7462 = vadd.f32 %v7279, %v7362
      %v7463 = vadd.f32 %v7280, %v7364
      %v7464 = vadd.f32 %v7281, %v7366
      %v7465 = vadd.f32 %v7282, %v7368
      %v7466 = vadd.f32 %v7283, %v7370
      %v7467 = vadd.f32 %v7284, %v7372
      %v7468 = vadd.f32 %v7285, %v7374
      %v7469 = vadd.f32 %v7286, %v7376
      %v7470 = vadd.f32 %v7287, %v7378
      %v7471 = vadd.f32 %v7288, %v7380
      %v7472 = vadd.f32 %v7289, %v7382
      %v7473 = vadd.f32 %v7290, %v7384
      %v7474 = vadd.f32 %v7291, %v7386
      %v7475 = vadd.f32 %v7292, %v7388
      %v7476 = vadd.f32 %v7293, %v7390
      %v7477 = vadd.f32 %v7294, %v7392
      %v7478 = vadd.f32 %v7295, %v7394
      %v7479 = vadd.f32 %v7296, %v7396
      %v7480 = vadd.f32 %v7297, %v7398
      %v7481 = vadd.f32 %v7298, %v7400
      %v7482 = vadd.f32 %v7299, %v7402
      %v7483 = vadd.f32 %v7300, %v7404
      %v7484 = vadd.f32 %v7301, %v7406
      %v7485 = vadd.f32 %v7302, %v7408
      %v7486 = vadd.f32 %v7303, %v7410
      %v7487 = vadd.f32 %v7304, %v7412
      %v7488 = vadd.f32 %v7305, %v7414
      %v7489 = vadd.f32 %v7306, %v7416
      %v7490 = vadd.f32 %v7307, %v7418
      %v7491 = vmax.f32 %v7455, 0.0
      %v7492 = vmax.f32 %v7456, 0.0
      %v7493 = vmax.f32 %v7457, 0.0
      %v7494 = vmax.f32 %v7458, 0.0
      %v7495 = vmax.f32 %v7459, 0.0
      %v7496 = vmax.f32 %v7460, 0.0
      %v7497 = vmax.f32 %v7461, 0.0
      %v7498 = vmax.f32 %v7462, 0.0
      %v7499 = vmax.f32 %v7463, 0.0
      %v7500 = vmax.f32 %v7464, 0.0
      %v7501 = vmax.f32 %v7465, 0.0
      %v7502 = vmax.f32 %v7466, 0.0
      %v7503 = vmax.f32 %v7467, 0.0
      %v7504 = vmax.f32 %v7468, 0.0
      %v7505 = vmax.f32 %v7469, 0.0
      %v7506 = vmax.f32 %v7470, 0.0
      %v7507 = vmax.f32 %v7471, 0.0
      %v7508 = vmax.f32 %v7472, 0.0
      %v7509 = vmax.f32 %v7473, 0.0
      %v7510 = vmax.f32 %v7474, 0.0
      %v7511 = vmax.f32 %v7475, 0.0
      %v7512 = vmax.f32 %v7476, 0.0
      %v7513 = vmax.f32 %v7477, 0.0
      %v7514 = vmax.f32 %v7478, 0.0
      %v7515 = vmax.f32 %v7479, 0.0
      %v7516 = vmax.f32 %v7480, 0.0
      %v7517 = vmax.f32 %v7481, 0.0
      %v7518 = vmax.f32 %v7482, 0.0
      %v7519 = vmax.f32 %v7483, 0.0
      %v7520 = vmax.f32 %v7484, 0.0
      %v7521 = vmax.f32 %v7485, 0.0
      %v7522 = vmax.f32 %v7486, 0.0
      %v7523 = vmax.f32 %v7487, 0.0
      %v7524 = vmax.f32 %v7488, 0.0
      %v7525 = vmax.f32 %v7489, 0.0
      %v7526 = vmax.f32 %v7490, 0.0
      %7527 = vst.msk [vmem:[%s305] sm:$0xff] %vm627, %v7491
      %7528 = vst.msk [vmem:[%s305 + $0x8] sm:$0xff] %vm627, %v7492
      %7529 = vst.msk [vmem:[%s305 + $0x10] sm:$0xff] %vm627, %v7493
      %7530 = vst.msk [vmem:[%s305 + $0x18] sm:$0xff] %vm627, %v7494
      %7531 = vst.msk [vmem:[%s305 + $0x20] sm:$0xff] %vm627, %v7495
      %7532 = vst.msk [vmem:[%s305 + $0x28] sm:$0xff] %vm627, %v7496
      %7533 = vst.msk [vmem:[%s305 + $0x30] sm:$0xff] %vm627, %v7497
      %7534 = vst.msk [vmem:[%s305 + $0x38] sm:$0xff] %vm627, %v7498
      %7535 = vst.msk [vmem:[%s305 + $0x40] sm:$0xff] %vm627, %v7499
      %7536 = vst.msk [vmem:[%s305 + $0x48] sm:$0xff] %vm627, %v7500
      %7537 = vst.msk [vmem:[%s305 + $0x50] sm:$0xff] %vm627, %v7501
      %7538 = vst.msk [vmem:[%s305 + $0x58] sm:$0xff] %vm627, %v7502
      %7539 = vst.msk [vmem:[%s305 + $0x60] sm:$0xff] %vm627, %v7503
      %7540 = vst.msk [vmem:[%s305 + $0x68] sm:$0xff] %vm627, %v7504
      %7541 = vst.msk [vmem:[%s305 + $0x70] sm:$0xff] %vm627, %v7505
      %7542 = vst.msk [vmem:[%s305 + $0x78] sm:$0xff] %vm627, %v7506
      %7543 = vst.msk [vmem:[%s305 + $0x80] sm:$0xff] %vm627, %v7507
      %7544 = vst.msk [vmem:[%s305 + $0x88] sm:$0xff] %vm627, %v7508
      %7545 = vst.msk [vmem:[%s305 + $0x90] sm:$0xff] %vm627, %v7509
      %7546 = vst.msk [vmem:[%s305 + $0x98] sm:$0xff] %vm627, %v7510
      %7547 = vst.msk [vmem:[%s305 + $0xa0] sm:$0xff] %vm627, %v7511
      %7548 = vst.msk [vmem:[%s305 + $0xa8] sm:$0xff] %vm627, %v7512
      %7549 = vst.msk [vmem:[%s305 + $0xb0] sm:$0xff] %vm627, %v7513
      %7550 = vst.msk [vmem:[%s305 + $0xb8] sm:$0xff] %vm627, %v7514
      %7551 = vst.msk [vmem:[%s305 + $0xc0] sm:$0xff] %vm627, %v7515
      %7552 = vst.msk [vmem:[%s305 + $0xc8] sm:$0xff] %vm627, %v7516
      %7553 = vst.msk [vmem:[%s305 + $0xd0] sm:$0xff] %vm627, %v7517
      %7554 = vst.msk [vmem:[%s305 + $0xd8] sm:$0xff] %vm627, %v7518
      %7555 = vst.msk [vmem:[%s305 + $0xe0] sm:$0xff] %vm627, %v7519
      %7556 = vst.msk [vmem:[%s305 + $0xe8] sm:$0xff] %vm627, %v7520
      %7557 = vst.msk [vmem:[%s305 + $0xf0] sm:$0xff] %vm627, %v7521
      %7558 = vst.msk [vmem:[%s305 + $0xf8] sm:$0xff] %vm627, %v7522
      %7559 = vst.msk [vmem:[%s305 + $0x100] sm:$0xff] %vm627, %v7523
      %7560 = vst.msk [vmem:[%s305 + $0x108] sm:$0xff] %vm627, %v7524
      %7561 = vst.msk [vmem:[%s305 + $0x110] sm:$0xff] %vm627, %v7525
      %7562 = vst.msk [vmem:[%s305 + $0x118] sm:$0xff] %vm627, %v7526
      %p7563 = scmp.lt.s32.totalorder %s19, 1
      %s7564 = scalar_select %p7563, %s19, 1
      %s7565 = smul.addr %s7564, 36
      %s7566 = smul.addr %s7565, 8
      %s7567 = scalar_lea.vmem %s8, %s7566
      // Predicated region
      $region53: #{tpu_custom_call.1} parent=51 // pred_check
        %p7568 = pneg %p210
      $region54: #{tpu_custom_call.1} parent=51 // pred_check_branch
        %7570 = sbr.rel (%p7568) target = $region56
      $region55: #{tpu_custom_call.1} parent=51 // pred_region
        _
      $region56: #{tpu_custom_call.1} parent=51 // pred_fallthru
        _
    $region52: #{tpu_custom_call.1} parent=5 // pred_fallthru
      _
    %p7571 = scmp.le.s32.totalorder 2, %s14
    // Predicated region
    $region57: #{tpu_custom_call.1} parent=5 // pred_check
      %p7572 = pneg %p7571
    $region58: #{tpu_custom_call.1} parent=5 // pred_check_branch
      %7574 = sbr.rel (%p7572) target = $region60
    $region59: #{tpu_custom_call.1} parent=5 // pred_region
      %s7575 = ssub.s32 %s14, 2
      // Predicated region
      $region61: #{tpu_custom_call.1} parent=59 // pred_check
        %p7576 = pneg %p216
      $region62: #{tpu_custom_call.1} parent=59 // pred_check_branch
        %7578 = sbr.rel (%p7576) target = $region64
      $region63: #{tpu_custom_call.1} parent=59 // pred_region
        %p7579 = scmp.lt.s32.totalorder %s20, 1
        %s7580 = scalar_select %p7579, %s20, 1
        %s7581 = smul.addr %s7580, 36
        %s7582 = smul.addr %s7581, 8
        %s7583 = scalar_lea.vmem %s8, %s7582
      $region64: #{tpu_custom_call.1} parent=59 // pred_fallthru
        _
    $region60: #{tpu_custom_call.1} parent=5 // pred_fallthru
      _
  $region6: #{tpu_custom_call.1} parent=0 // loop_footer
    %s18 = sadd.s32 1, %s14
  $region7: #{tpu_custom_call.1} parent=0 // loop_footer_branch
    %13 = sbr.rel target = $region3
  $region8: #{tpu_custom_call.1} parent=0 // loop_exit
    _

</llo_original>
